<compile_context>
chip_gen: v5e
topology: v5e:2x2
jax: 0.10.0
libtpu: 0.0.40
codegen_flags: <defaults>
</compile_context>

<pallas_src>
import functools

import jax
import jax.numpy as jnp
from jax.experimental import pallas as pl
from jax.experimental.pallas import tpu as pltpu


def mlp_kernel(x_ref, w1_ref, b1_ref, w2_ref, b2_ref, o_ref):
    # Hidden layer: Linear + sigmoid.  Entire hot path lives in VMEM.
    x = x_ref[...]
    h = jnp.dot(x, w1_ref[...], preferred_element_type=jnp.float32)
    h = jax.nn.sigmoid(h + b1_ref[...])      # EUP logistic; bias vreg-broadcast
    # Output layer: Linear straight into the (TB, O) output tile.
    out = jnp.dot(h, w2_ref[...], preferred_element_type=jnp.float32)
    o_ref[...] = out + b2_ref[...]


def _round_up(n, m):
    return ((n + m - 1) // m) * m


def _pick_block_b(B):
    """Per-generation batch tile: 1 grid step on single-TC chips, even 2-way
    split on v7x (2 TensorCores/chip).  Capped so huge B can't blow VMEM."""
    try:
        kind = (jax.devices()[0].device_kind or "").lower()
    except Exception:
        kind = ""
    two_tc = "v7" in kind
    target = -(-B // 2) if two_tc else B          # ceil(B/2) vs full batch
    tb = _round_up(max(target, 8), 8)
    return min(tb, 4096)


@functools.partial(jax.jit, static_argnames=("block_b", "single_buffer_params"))
def net_forward(x, w1, b1, w2, b2, *, block_b=None, single_buffer_params=True):
    """Forward pass of Net: sigmoid(x @ w1 + b1) @ w2 + b2."""
    B, F = x.shape
    H = w1.shape[1]
    O = w2.shape[1]

    TB = block_b if block_b is not None else _pick_block_b(B)
    B_pad = _round_up(B, TB)
    if B_pad != B:
        x = jnp.pad(x, ((0, B_pad - B), (0, 0)))
    grid = (B_pad // TB,)

    def param_spec(shape):
        # Grid-invariant blocks: resident in VMEM; single-buffer if supported.
        if single_buffer_params:
            return pl.BlockSpec(shape, lambda i: (0, 0),
                                pipeline_mode=pl.Buffered(1))
        return pl.BlockSpec(shape, lambda i: (0, 0))

    out = pl.pallas_call(
        mlp_kernel,
        out_shape=jax.ShapeDtypeStruct((B_pad, O), jnp.float32),
        grid=grid,
        in_specs=[
            # streamed batch tile of activations
            pl.BlockSpec((TB, F), lambda i: (i, 0)),
            # weights / biases: constant index_map -> stay resident in VMEM
            param_spec((F, H)),
            param_spec((1, H)),
            param_spec((H, O)),
            param_spec((1, O)),
        ],
        out_specs=pl.BlockSpec((TB, O), lambda i: (i, 0)),
        compiler_params=pltpu.CompilerParams(
            dimension_semantics=("parallel",),   # megacore sharding on v7x
        ),
    )(x, w1, b1, w2, b2)

    if B_pad != B:
        out = out[:B]
    return out


if __name__ == "__main__":
    # Net(n_feature, n_hidden11, n_output): Linear -> sigmoid -> Linear
    B, F, H, O = 512, 32, 64, 8

    key = jax.random.PRNGKey(0)
    kx, kw1, kb1, kw2, kb2 = jax.random.split(key, 5)

    x = jax.random.normal(kx, (B, F), dtype=jnp.float32)

    # Deterministic parameter init (PyTorch-style uniform bounds), stored
    # transposed relative to torch's (out, in) layout for direct matmul.
    bound1 = 1.0 / (F ** 0.5)
    w1 = jax.random.uniform(kw1, (F, H), minval=-bound1, maxval=bound1,
                            dtype=jnp.float32)
    b1 = jax.random.uniform(kb1, (1, H), minval=-bound1, maxval=bound1,
                            dtype=jnp.float32)
    bound2 = 1.0 / (H ** 0.5)
    w2 = jax.random.uniform(kw2, (H, O), minval=-bound2, maxval=bound2,
                            dtype=jnp.float32)
    b2 = jax.random.uniform(kb2, (1, O), minval=-bound2, maxval=bound2,
                            dtype=jnp.float32)

    block_b = _pick_block_b(B)   # 512 (grid=(1,)) on v5e/v6e, 256 (grid=(2,)) on v7x

    try:
        out = net_forward(x, w1, b1, w2, b2, block_b=block_b,
                          single_buffer_params=True)
        jax.block_until_ready(out)
    except Exception:
        # Fallback if pipeline_mode=pl.Buffered(1) is rejected on this jax build.
        out = net_forward(x, w1, b1, w2, b2, block_b=block_b,
                          single_buffer_params=False)
        jax.block_until_ready(out)

    # Pure-JAX reference for correctness.
    h_ref = jax.nn.sigmoid(x @ w1 + b1)
    ref = h_ref @ w2 + b2
    assert out.shape == (B, O)
    assert jnp.allclose(out, ref, atol=1e-4, rtol=1e-4)

    print("KERNEL_OK")
</pallas_src>

<mosaic_0001>
module attributes {stable_mosaic.version = 11 : i64} {
  func.func @mlp_kernel(%arg0: i32, %arg1: memref<512x32xf32, #tpu.memory_space<vmem>>, %arg2: memref<32x64xf32, #tpu.memory_space<vmem>>, %arg3: memref<1x64xf32, #tpu.memory_space<vmem>>, %arg4: memref<64x8xf32, #tpu.memory_space<vmem>>, %arg5: memref<1x8xf32, #tpu.memory_space<vmem>>, %arg6: memref<512x8xf32, #tpu.memory_space<vmem>>) attributes {dimension_semantics = [#tpu.dimension_semantics<parallel>], iteration_bounds = array<i64: 1>, scalar_prefetch = 0 : i64, scratch_operands = 0 : i64, tpu.core_type = #tpu.core_type<tc>, window_params = [{transform_indices = @transform_0, window_bounds = array<i64: 512, 32>}, {pipeline_mode = #tpu.pipeline_mode<synchronous>, transform_indices = @transform_1, window_bounds = array<i64: 32, 64>}, {pipeline_mode = #tpu.pipeline_mode<synchronous>, transform_indices = @transform_2, window_bounds = array<i64: 1, 64>}, {pipeline_mode = #tpu.pipeline_mode<synchronous>, transform_indices = @transform_3, window_bounds = array<i64: 64, 8>}, {pipeline_mode = #tpu.pipeline_mode<synchronous>, transform_indices = @transform_4, window_bounds = array<i64: 1, 8>}, {transform_indices = @transform_5, window_bounds = array<i64: 512, 8>}]} {
    %c0 = arith.constant 0 : index
    %c0_0 = arith.constant 0 : index
    %0 = vector.load %arg1[%c0, %c0_0] : memref<512x32xf32, #tpu.memory_space<vmem>>, vector<512x32xf32>
    %c0_1 = arith.constant 0 : index
    %c0_2 = arith.constant 0 : index
    %1 = vector.load %arg2[%c0_1, %c0_2] : memref<32x64xf32, #tpu.memory_space<vmem>>, vector<32x64xf32>
    %cst = arith.constant dense<0.000000e+00> : vector<512x64xf32>
    %2 = tpu.matmul %0, %1, %cst {dimension_numbers = #tpu.dot_dimension_numbers<[1], [0], [0], [1], [0, 0, 1, 1], [], []>} : vector<512x32xf32>, vector<32x64xf32>, vector<512x64xf32> -> vector<512x64xf32>
    %c0_3 = arith.constant 0 : index
    %c0_4 = arith.constant 0 : index
    %3 = vector.load %arg3[%c0_3, %c0_4] : memref<1x64xf32, #tpu.memory_space<vmem>>, vector<1x64xf32>
    %4 = vector.broadcast %3 : vector<1x64xf32> to vector<512x64xf32>
    %5 = arith.addf %2, %4 : vector<512x64xf32>
    %6 = arith.negf %5 : vector<512x64xf32>
    %7 = math.exp %6 : vector<512x64xf32>
    %cst_5 = arith.constant 1.000000e+00 : f32
    %8 = vector.broadcast %cst_5 : f32 to vector<512x64xf32>
    %9 = arith.addf %8, %7 : vector<512x64xf32>
    %10 = arith.divf %8, %9 : vector<512x64xf32>
    %c0_6 = arith.constant 0 : index
    %c0_7 = arith.constant 0 : index
    %11 = vector.load %arg4[%c0_6, %c0_7] : memref<64x8xf32, #tpu.memory_space<vmem>>, vector<64x8xf32>
    %cst_8 = arith.constant dense<0.000000e+00> : vector<512x8xf32>
    %12 = tpu.matmul %10, %11, %cst_8 {dimension_numbers = #tpu.dot_dimension_numbers<[1], [0], [0], [1], [0, 0, 1, 1], [], []>} : vector<512x64xf32>, vector<64x8xf32>, vector<512x8xf32> -> vector<512x8xf32>
    %c0_9 = arith.constant 0 : index
    %c0_10 = arith.constant 0 : index
    %13 = vector.load %arg5[%c0_9, %c0_10] : memref<1x8xf32, #tpu.memory_space<vmem>>, vector<1x8xf32>
    %14 = vector.broadcast %13 : vector<1x8xf32> to vector<512x8xf32>
    %15 = arith.addf %12, %14 : vector<512x8xf32>
    %c0_11 = arith.constant 0 : index
    %c0_12 = arith.constant 0 : index
    %16 = vector.load %arg6[%c0_11, %c0_12] : memref<512x8xf32, #tpu.memory_space<vmem>>, vector<512x8xf32>
    tpu.vector_store %arg6[%c0_11, %c0_12], %15 {strides = array<i32>} : memref<512x8xf32, #tpu.memory_space<vmem>>, vector<512x8xf32>,
    return
  }
  func.func @transform_0(%arg0: i32) -> (i32, i32) {
    %c0_i32 = arith.constant 0 : i32
    %c0_i32_0 = arith.constant 0 : i32
    return %arg0, %c0_i32 : i32, i32
  }
  func.func @transform_1(%arg0: i32) -> (i32, i32) {
    %c0_i32 = arith.constant 0 : i32
    %c0_i32_0 = arith.constant 0 : i32
    %c0_i32_1 = arith.constant 0 : i32
    return %c0_i32, %c0_i32_0 : i32, i32
  }
  func.func @transform_2(%arg0: i32) -> (i32, i32) {
    %c0_i32 = arith.constant 0 : i32
    %c0_i32_0 = arith.constant 0 : i32
    %c0_i32_1 = arith.constant 0 : i32
    return %c0_i32, %c0_i32_0 : i32, i32
  }
  func.func @transform_3(%arg0: i32) -> (i32, i32) {
    %c0_i32 = arith.constant 0 : i32
    %c0_i32_0 = arith.constant 0 : i32
    %c0_i32_1 = arith.constant 0 : i32
    return %c0_i32, %c0_i32_0 : i32, i32
  }
  func.func @transform_4(%arg0: i32) -> (i32, i32) {
    %c0_i32 = arith.constant 0 : i32
    %c0_i32_0 = arith.constant 0 : i32
    %c0_i32_1 = arith.constant 0 : i32
    return %c0_i32, %c0_i32_0 : i32, i32
  }
  func.func @transform_5(%arg0: i32) -> (i32, i32) {
    %c0_i32 = arith.constant 0 : i32
    %c0_i32_0 = arith.constant 0 : i32
    return %arg0, %c0_i32 : i32, i32
  }
}

module attributes {stable_mosaic.version = 11 : i64} {
  func.func @mlp_kernel(%arg0: i32, %arg1: memref<512x32xf32, #tpu.memory_space<vmem>>, %arg2: memref<32x64xf32, #tpu.memory_space<vmem>>, %arg3: memref<1x64xf32, #tpu.memory_space<vmem>>, %arg4: memref<64x8xf32, #tpu.memory_space<vmem>>, %arg5: memref<1x8xf32, #tpu.memory_space<vmem>>, %arg6: memref<512x8xf32, #tpu.memory_space<vmem>>) attributes {dimension_semantics = [#tpu.dimension_semantics<parallel>], iteration_bounds = array<i64: 1>, scalar_prefetch = 0 : i64, scratch_operands = 0 : i64, tpu.core_type = #tpu.core_type<tc>, window_params = [{transform_indices = @transform_0, window_bounds = array<i64: 512, 32>}, {pipeline_mode = #tpu.pipeline_mode<synchronous>, transform_indices = @transform_1, window_bounds = array<i64: 32, 64>}, {pipeline_mode = #tpu.pipeline_mode<synchronous>, transform_indices = @transform_2, window_bounds = array<i64: 1, 64>}, {pipeline_mode = #tpu.pipeline_mode<synchronous>, transform_indices = @transform_3, window_bounds = array<i64: 64, 8>}, {pipeline_mode = #tpu.pipeline_mode<synchronous>, transform_indices = @transform_4, window_bounds = array<i64: 1, 8>}, {transform_indices = @transform_5, window_bounds = array<i64: 512, 8>}]} {
    %c0 = arith.constant 0 : index
    %c0_0 = arith.constant 0 : index
    %0 = vector.load %arg1[%c0, %c0_0] : memref<512x32xf32, #tpu.memory_space<vmem>>, vector<512x32xf32>
    %c0_1 = arith.constant 0 : index
    %c0_2 = arith.constant 0 : index
    %1 = vector.load %arg2[%c0_1, %c0_2] : memref<32x64xf32, #tpu.memory_space<vmem>>, vector<32x64xf32>
    %cst = arith.constant dense<0.000000e+00> : vector<512x64xf32>
    %2 = tpu.matmul %0, %1, %cst {dimension_numbers = #tpu.dot_dimension_numbers<[1], [0], [0], [1], [0, 0, 1, 1], [], []>} : vector<512x32xf32>, vector<32x64xf32>, vector<512x64xf32> -> vector<512x64xf32>
    %c0_3 = arith.constant 0 : index
    %c0_4 = arith.constant 0 : index
    %3 = vector.load %arg3[%c0_3, %c0_4] : memref<1x64xf32, #tpu.memory_space<vmem>>, vector<1x64xf32>
    %4 = vector.broadcast %3 : vector<1x64xf32> to vector<512x64xf32>
    %5 = arith.addf %2, %4 : vector<512x64xf32>
    %6 = arith.negf %5 : vector<512x64xf32>
    %7 = math.exp %6 : vector<512x64xf32>
    %cst_5 = arith.constant 1.000000e+00 : f32
    %8 = vector.broadcast %cst_5 : f32 to vector<512x64xf32>
    %9 = arith.addf %8, %7 : vector<512x64xf32>
    %10 = arith.divf %8, %9 : vector<512x64xf32>
    %c0_6 = arith.constant 0 : index
    %c0_7 = arith.constant 0 : index
    %11 = vector.load %arg4[%c0_6, %c0_7] : memref<64x8xf32, #tpu.memory_space<vmem>>, vector<64x8xf32>
    %cst_8 = arith.constant dense<0.000000e+00> : vector<512x8xf32>
    %12 = tpu.matmul %10, %11, %cst_8 {dimension_numbers = #tpu.dot_dimension_numbers<[1], [0], [0], [1], [0, 0, 1, 1], [], []>} : vector<512x64xf32>, vector<64x8xf32>, vector<512x8xf32> -> vector<512x8xf32>
    %c0_9 = arith.constant 0 : index
    %c0_10 = arith.constant 0 : index
    %13 = vector.load %arg5[%c0_9, %c0_10] : memref<1x8xf32, #tpu.memory_space<vmem>>, vector<1x8xf32>
    %14 = vector.broadcast %13 : vector<1x8xf32> to vector<512x8xf32>
    %15 = arith.addf %12, %14 : vector<512x8xf32>
    %c0_11 = arith.constant 0 : index
    %c0_12 = arith.constant 0 : index
    %16 = vector.load %arg6[%c0_11, %c0_12] : memref<512x8xf32, #tpu.memory_space<vmem>>, vector<512x8xf32>
    tpu.vector_store %arg6[%c0_11, %c0_12], %15 {strides = array<i32>} : memref<512x8xf32, #tpu.memory_space<vmem>>, vector<512x8xf32>,
    return
  }
  func.func @transform_0(%arg0: i32) -> (i32, i32) {
    %c0_i32 = arith.constant 0 : i32
    %c0_i32_0 = arith.constant 0 : i32
    return %arg0, %c0_i32 : i32, i32
  }
  func.func @transform_1(%arg0: i32) -> (i32, i32) {
    %c0_i32 = arith.constant 0 : i32
    %c0_i32_0 = arith.constant 0 : i32
    %c0_i32_1 = arith.constant 0 : i32
    return %c0_i32, %c0_i32_0 : i32, i32
  }
  func.func @transform_2(%arg0: i32) -> (i32, i32) {
    %c0_i32 = arith.constant 0 : i32
    %c0_i32_0 = arith.constant 0 : i32
    %c0_i32_1 = arith.constant 0 : i32
    return %c0_i32, %c0_i32_0 : i32, i32
  }
  func.func @transform_3(%arg0: i32) -> (i32, i32) {
    %c0_i32 = arith.constant 0 : i32
    %c0_i32_0 = arith.constant 0 : i32
    %c0_i32_1 = arith.constant 0 : i32
    return %c0_i32, %c0_i32_0 : i32, i32
  }
  func.func @transform_4(%arg0: i32) -> (i32, i32) {
    %c0_i32 = arith.constant 0 : i32
    %c0_i32_0 = arith.constant 0 : i32
    %c0_i32_1 = arith.constant 0 : i32
    return %c0_i32, %c0_i32_0 : i32, i32
  }
  func.func @transform_5(%arg0: i32) -> (i32, i32) {
    %c0_i32 = arith.constant 0 : i32
    %c0_i32_0 = arith.constant 0 : i32
    return %arg0, %c0_i32 : i32, i32
  }
}

</mosaic_0001>

<llo_original>
// kernel: net_forward.1
$region0: #{net_forward.1}
  #allocation0 [shape = 'u32[]', space=smem, size = 0x4, offset = 0x4, fixed_abs, tag = 'smem constant byte address 0x4 - core index']
  #allocation1 [shape = 'u32[72,128]{1,0:T(1,128)}', space=vmem, size = 0x9000, scoped, tag = 'internal scratch']
  %s0 = inlined_call_operand.vmem [shape: f32[512,32], index: 0, kind: input, shape index: {}]
  %s1 = inlined_call_operand.vmem [shape: f32[32,64], index: 1, kind: input, shape index: {}]
  %s2 = inlined_call_operand.vmem [shape: f32[1,64], index: 2, kind: input, shape index: {}]
  %s3 = inlined_call_operand.vmem [shape: f32[64,8], index: 3, kind: input, shape index: {}]
  %s4 = inlined_call_operand.vmem [shape: f32[1,8], index: 4, kind: input, shape index: {}]
  %s5 = inlined_call_operand.vmem [shape: f32[512,8], index: 5, kind: output, shape index: {}]
  %s6 = sld [smem:[#allocation0]]
  $region30: #{net_forward.1} parent=0
    _
  %s8 = ssub.s32 1, %s6
  %s9 = scalar_select 0, %s8, %s6
  // Predicated region
  $region2: #{net_forward.1} parent=0 // pred_check
    _
  $region3: #{net_forward.1} parent=0 // pred_check_branch
    %11 = sbr.rel (0) target = $region5
  $region4: #{net_forward.1} parent=0 // pred_region
    _
  $region5: #{net_forward.1} parent=0 // pred_fallthru
    _
  // Predicated region
  $region6: #{net_forward.1} parent=0 // pred_check
    _
  $region7: #{net_forward.1} parent=0 // pred_check_branch
    %13 = sbr.rel (0) target = $region9
  $region8: #{net_forward.1} parent=0 // pred_region
    _
  $region9: #{net_forward.1} parent=0 // pred_fallthru
    _
  // Predicated region
  $region10: #{net_forward.1} parent=0 // pred_check
    _
  $region11: #{net_forward.1} parent=0 // pred_check_branch
    %15 = sbr.rel (0) target = $region13
  $region12: #{net_forward.1} parent=0 // pred_region
    _
  $region13: #{net_forward.1} parent=0 // pred_fallthru
    _
  // Predicated region
  $region14: #{net_forward.1} parent=0 // pred_check
    _
  $region15: #{net_forward.1} parent=0 // pred_check_branch
    %17 = sbr.rel (0) target = $region17
  $region16: #{net_forward.1} parent=0 // pred_region
    _
  $region17: #{net_forward.1} parent=0 // pred_fallthru
    _
  // Predicated region
  $region18: #{net_forward.1} parent=0 // pred_check
    _
  $region19: #{net_forward.1} parent=0 // pred_check_branch
    %19 = sbr.rel (0) target = $region21
  $region20: #{net_forward.1} parent=0 // pred_region
    _
  $region21: #{net_forward.1} parent=0 // pred_fallthru
    _
  %v20 = vld [vmem:[%s0] sm:$0xff]
  %v21 = vld [vmem:[%s0 + $0x8] sm:$0xff]
  %v22 = vld [vmem:[%s0 + $0x10] sm:$0xff]
  %v23 = vld [vmem:[%s0 + $0x18] sm:$0xff]
  %v24 = vld [vmem:[%s0 + $0x20] sm:$0xff]
  %v25 = vld [vmem:[%s0 + $0x28] sm:$0xff]
  %v26 = vld [vmem:[%s0 + $0x30] sm:$0xff]
  %v27 = vld [vmem:[%s0 + $0x38] sm:$0xff]
  %v28 = vld [vmem:[%s0 + $0x40] sm:$0xff]
  %v29 = vld [vmem:[%s0 + $0x48] sm:$0xff]
  %v30 = vld [vmem:[%s0 + $0x50] sm:$0xff]
  %v31 = vld [vmem:[%s0 + $0x58] sm:$0xff]
  %v32 = vld [vmem:[%s0 + $0x60] sm:$0xff]
  %v33 = vld [vmem:[%s0 + $0x68] sm:$0xff]
  %v34 = vld [vmem:[%s0 + $0x70] sm:$0xff]
  %v35 = vld [vmem:[%s0 + $0x78] sm:$0xff]
  %v36 = vld [vmem:[%s0 + $0x80] sm:$0xff]
  %v37 = vld [vmem:[%s0 + $0x88] sm:$0xff]
  %v38 = vld [vmem:[%s0 + $0x90] sm:$0xff]
  %v39 = vld [vmem:[%s0 + $0x98] sm:$0xff]
  %v40 = vld [vmem:[%s0 + $0xa0] sm:$0xff]
  %v41 = vld [vmem:[%s0 + $0xa8] sm:$0xff]
  %v42 = vld [vmem:[%s0 + $0xb0] sm:$0xff]
  %v43 = vld [vmem:[%s0 + $0xb8] sm:$0xff]
  %v44 = vld [vmem:[%s0 + $0xc0] sm:$0xff]
  %v45 = vld [vmem:[%s0 + $0xc8] sm:$0xff]
  %v46 = vld [vmem:[%s0 + $0xd0] sm:$0xff]
  %v47 = vld [vmem:[%s0 + $0xd8] sm:$0xff]
  %v48 = vld [vmem:[%s0 + $0xe0] sm:$0xff]
  %v49 = vld [vmem:[%s0 + $0xe8] sm:$0xff]
  %v50 = vld [vmem:[%s0 + $0xf0] sm:$0xff]
  %v51 = vld [vmem:[%s0 + $0xf8] sm:$0xff]
  %v52 = vld [vmem:[%s0 + $0x100] sm:$0xff]
  %v53 = vld [vmem:[%s0 + $0x108] sm:$0xff]
  %v54 = vld [vmem:[%s0 + $0x110] sm:$0xff]
  %v55 = vld [vmem:[%s0 + $0x118] sm:$0xff]
  %v56 = vld [vmem:[%s0 + $0x120] sm:$0xff]
  %v57 = vld [vmem:[%s0 + $0x128] sm:$0xff]
  %v58 = vld [vmem:[%s0 + $0x130] sm:$0xff]
  %v59 = vld [vmem:[%s0 + $0x138] sm:$0xff]
  %v60 = vld [vmem:[%s0 + $0x140] sm:$0xff]
  %v61 = vld [vmem:[%s0 + $0x148] sm:$0xff]
  %v62 = vld [vmem:[%s0 + $0x150] sm:$0xff]
  %v63 = vld [vmem:[%s0 + $0x158] sm:$0xff]
  %v64 = vld [vmem:[%s0 + $0x160] sm:$0xff]
  %v65 = vld [vmem:[%s0 + $0x168] sm:$0xff]
  %v66 = vld [vmem:[%s0 + $0x170] sm:$0xff]
  %v67 = vld [vmem:[%s0 + $0x178] sm:$0xff]
  %v68 = vld [vmem:[%s0 + $0x180] sm:$0xff]
  %v69 = vld [vmem:[%s0 + $0x188] sm:$0xff]
  %v70 = vld [vmem:[%s0 + $0x190] sm:$0xff]
  %v71 = vld [vmem:[%s0 + $0x198] sm:$0xff]
  %v72 = vld [vmem:[%s0 + $0x1a0] sm:$0xff]
  %v73 = vld [vmem:[%s0 + $0x1a8] sm:$0xff]
  %v74 = vld [vmem:[%s0 + $0x1b0] sm:$0xff]
  %v75 = vld [vmem:[%s0 + $0x1b8] sm:$0xff]
  %v76 = vld [vmem:[%s0 + $0x1c0] sm:$0xff]
  %v77 = vld [vmem:[%s0 + $0x1c8] sm:$0xff]
  %v78 = vld [vmem:[%s0 + $0x1d0] sm:$0xff]
  %v79 = vld [vmem:[%s0 + $0x1d8] sm:$0xff]
  %v80 = vld [vmem:[%s0 + $0x1e0] sm:$0xff]
  %v81 = vld [vmem:[%s0 + $0x1e8] sm:$0xff]
  %v82 = vld [vmem:[%s0 + $0x1f0] sm:$0xff]
  %v83 = vld [vmem:[%s0 + $0x1f8] sm:$0xff]
  %v84 = vld [vmem:[%s1] sm:$0xff]
  %v85 = vld [vmem:[%s1 + $0x8] sm:$0xff]
  %v86 = vld [vmem:[%s1 + $0x10] sm:$0xff]
  %v87 = vld [vmem:[%s1 + $0x18] sm:$0xff]
  %v88 = vld [vmem:[%s2] sm:$0x1]
  %v90 = vperm.slane %v88, 0
  %vm92 = vcmask 261120
  %v94 = vsel %vm92, %v20, 0
  %v97 = vsel %vm92, %v21, 0
  %v100 = vsel %vm92, %v22, 0
  %v103 = vsel %vm92, %v23, 0
  %v106 = vsel %vm92, %v24, 0
  %v109 = vsel %vm92, %v25, 0
  %v112 = vsel %vm92, %v26, 0
  %v115 = vsel %vm92, %v27, 0
  %v118 = vsel %vm92, %v28, 0
  %v121 = vsel %vm92, %v29, 0
  %v124 = vsel %vm92, %v30, 0
  %v127 = vsel %vm92, %v31, 0
  %v130 = vsel %vm92, %v32, 0
  %v133 = vsel %vm92, %v33, 0
  %v136 = vsel %vm92, %v34, 0
  %v139 = vsel %vm92, %v35, 0
  %v142 = vsel %vm92, %v36, 0
  %v145 = vsel %vm92, %v37, 0
  %v148 = vsel %vm92, %v38, 0
  %v151 = vsel %vm92, %v39, 0
  %v154 = vsel %vm92, %v40, 0
  %v157 = vsel %vm92, %v41, 0
  %v160 = vsel %vm92, %v42, 0
  %v163 = vsel %vm92, %v43, 0
  %v166 = vsel %vm92, %v44, 0
  %v169 = vsel %vm92, %v45, 0
  %v172 = vsel %vm92, %v46, 0
  %v175 = vsel %vm92, %v47, 0
  %v178 = vsel %vm92, %v48, 0
  %v181 = vsel %vm92, %v49, 0
  %v184 = vsel %vm92, %v50, 0
  %v187 = vsel %vm92, %v51, 0
  %v190 = vsel %vm92, %v52, 0
  %v193 = vsel %vm92, %v53, 0
  %v196 = vsel %vm92, %v54, 0
  %v199 = vsel %vm92, %v55, 0
  %v202 = vsel %vm92, %v56, 0
  %v205 = vsel %vm92, %v57, 0
  %v208 = vsel %vm92, %v58, 0
  %v211 = vsel %vm92, %v59, 0
  %v214 = vsel %vm92, %v60, 0
  %v217 = vsel %vm92, %v61, 0
  %v220 = vsel %vm92, %v62, 0
  %v223 = vsel %vm92, %v63, 0
  %v226 = vsel %vm92, %v64, 0
  %v229 = vsel %vm92, %v65, 0
  %v232 = vsel %vm92, %v66, 0
  %v235 = vsel %vm92, %v67, 0
  %v238 = vsel %vm92, %v68, 0
  %v241 = vsel %vm92, %v69, 0
  %v244 = vsel %vm92, %v70, 0
  %v247 = vsel %vm92, %v71, 0
  %v250 = vsel %vm92, %v72, 0
  %v253 = vsel %vm92, %v73, 0
  %v256 = vsel %vm92, %v74, 0
  %v259 = vsel %vm92, %v75, 0
  %v262 = vsel %vm92, %v76, 0
  %v265 = vsel %vm92, %v77, 0
  %v268 = vsel %vm92, %v78, 0
  %v271 = vsel %vm92, %v79, 0
  %v274 = vsel %vm92, %v80, 0
  %v277 = vsel %vm92, %v81, 0
  %v280 = vsel %vm92, %v82, 0
  %v283 = vsel %vm92, %v83, 0
  %285 = vmatpush.msra.mxu0 0.0
  %286 = vmatpush.msra.mxu0 0.0
  %287 = vmatpush.msra.mxu0 0.0
  %288 = vmatpush.msra.mxu0 0.0
  %289 = vmatpush.msra.mxu0 0.0
  %290 = vmatpush.msra.mxu0 0.0
  %291 = vmatpush.msra.mxu0 0.0
  %292 = vmatpush.msra.mxu0 0.0
  %293 = vmatpush.msra.mxu0 0.0
  %294 = vmatpush.msra.mxu0 0.0
  %295 = vmatpush.msra.mxu0 0.0
  %296 = vmatpush.msra.mxu0 0.0
  %297 = vmatpush.msra.mxu0 %v87
  %298 = vmatpush.msra.mxu0 %v86
  %299 = vmatpush.msra.mxu0 %v85
  %300 = vmatpush.msra.mxu0 %v84
  %301 = vmatmul.f32.gmra.mxu0 %v94
  %v302 = vpop.f32.mrf.mxu0
  %v303 = vadd.f32 %v90, %v302
  %304 = vmatmul.f32.gmra.mxu0 %v97
  %v305 = vpop.f32.mrf.mxu0
  %v306 = vadd.f32 %v90, %v305
  %307 = vmatmul.f32.gmra.mxu0 %v100
  %v308 = vpop.f32.mrf.mxu0
  %v309 = vadd.f32 %v90, %v308
  %310 = vmatmul.f32.gmra.mxu0 %v103
  %v311 = vpop.f32.mrf.mxu0
  %v312 = vadd.f32 %v90, %v311
  %313 = vmatmul.f32.gmra.mxu0 %v106
  %v314 = vpop.f32.mrf.mxu0
  %v315 = vadd.f32 %v90, %v314
  %316 = vmatmul.f32.gmra.mxu0 %v109
  %v317 = vpop.f32.mrf.mxu0
  %v318 = vadd.f32 %v90, %v317
  %319 = vmatmul.f32.gmra.mxu0 %v112
  %v320 = vpop.f32.mrf.mxu0
  %v321 = vadd.f32 %v90, %v320
  %322 = vmatmul.f32.gmra.mxu0 %v115
  %v323 = vpop.f32.mrf.mxu0
  %v324 = vadd.f32 %v90, %v323
  %325 = vmatmul.f32.gmra.mxu0 %v118
  %v326 = vpop.f32.mrf.mxu0
  %v327 = vadd.f32 %v90, %v326
  %328 = vmatmul.f32.gmra.mxu0 %v121
  %v329 = vpop.f32.mrf.mxu0
  %v330 = vadd.f32 %v90, %v329
  %331 = vmatmul.f32.gmra.mxu0 %v124
  %v332 = vpop.f32.mrf.mxu0
  %v333 = vadd.f32 %v90, %v332
  %334 = vmatmul.f32.gmra.mxu0 %v127
  %v335 = vpop.f32.mrf.mxu0
  %v336 = vadd.f32 %v90, %v335
  %337 = vmatmul.f32.gmra.mxu0 %v130
  %v338 = vpop.f32.mrf.mxu0
  %v339 = vadd.f32 %v90, %v338
  %340 = vmatmul.f32.gmra.mxu0 %v133
  %v341 = vpop.f32.mrf.mxu0
  %v342 = vadd.f32 %v90, %v341
  %343 = vmatmul.f32.gmra.mxu0 %v136
  %v344 = vpop.f32.mrf.mxu0
  %v345 = vadd.f32 %v90, %v344
  %346 = vmatmul.f32.gmra.mxu0 %v139
  %v347 = vpop.f32.mrf.mxu0
  %v348 = vadd.f32 %v90, %v347
  %349 = vmatmul.f32.gmra.mxu0 %v142
  %v350 = vpop.f32.mrf.mxu0
  %v351 = vadd.f32 %v90, %v350
  %352 = vmatmul.f32.gmra.mxu0 %v145
  %v353 = vpop.f32.mrf.mxu0
  %v354 = vadd.f32 %v90, %v353
  %355 = vmatmul.f32.gmra.mxu0 %v148
  %v356 = vpop.f32.mrf.mxu0
  %v357 = vadd.f32 %v90, %v356
  %358 = vmatmul.f32.gmra.mxu0 %v151
  %v359 = vpop.f32.mrf.mxu0
  %v360 = vadd.f32 %v90, %v359
  %361 = vmatmul.f32.gmra.mxu0 %v154
  %v362 = vpop.f32.mrf.mxu0
  %v363 = vadd.f32 %v90, %v362
  %364 = vmatmul.f32.gmra.mxu0 %v157
  %v365 = vpop.f32.mrf.mxu0
  %v366 = vadd.f32 %v90, %v365
  %367 = vmatmul.f32.gmra.mxu0 %v160
  %v368 = vpop.f32.mrf.mxu0
  %v369 = vadd.f32 %v90, %v368
  %370 = vmatmul.f32.gmra.mxu0 %v163
  %v371 = vpop.f32.mrf.mxu0
  %v372 = vadd.f32 %v90, %v371
  %373 = vmatmul.f32.gmra.mxu0 %v166
  %v374 = vpop.f32.mrf.mxu0
  %v375 = vadd.f32 %v90, %v374
  %376 = vmatmul.f32.gmra.mxu0 %v169
  %v377 = vpop.f32.mrf.mxu0
  %v378 = vadd.f32 %v90, %v377
  %379 = vmatmul.f32.gmra.mxu0 %v172
  %v380 = vpop.f32.mrf.mxu0
  %v381 = vadd.f32 %v90, %v380
  %382 = vmatmul.f32.gmra.mxu0 %v175
  %v383 = vpop.f32.mrf.mxu0
  %v384 = vadd.f32 %v90, %v383
  %385 = vmatmul.f32.gmra.mxu0 %v178
  %v386 = vpop.f32.mrf.mxu0
  %v387 = vadd.f32 %v90, %v386
  %388 = vmatmul.f32.gmra.mxu0 %v181
  %v389 = vpop.f32.mrf.mxu0
  %v390 = vadd.f32 %v90, %v389
  %391 = vmatmul.f32.gmra.mxu0 %v184
  %v392 = vpop.f32.mrf.mxu0
  %v393 = vadd.f32 %v90, %v392
  %394 = vmatmul.f32.gmra.mxu0 %v187
  %v395 = vpop.f32.mrf.mxu0
  %v396 = vadd.f32 %v90, %v395
  %397 = vmatmul.f32.gmra.mxu0 %v190
  %v398 = vpop.f32.mrf.mxu0
  %v399 = vadd.f32 %v90, %v398
  %400 = vmatmul.f32.gmra.mxu0 %v193
  %v401 = vpop.f32.mrf.mxu0
  %v402 = vadd.f32 %v90, %v401
  %403 = vmatmul.f32.gmra.mxu0 %v196
  %v404 = vpop.f32.mrf.mxu0
  %v405 = vadd.f32 %v90, %v404
  %406 = vmatmul.f32.gmra.mxu0 %v199
  %v407 = vpop.f32.mrf.mxu0
  %v408 = vadd.f32 %v90, %v407
  %409 = vmatmul.f32.gmra.mxu0 %v202
  %v410 = vpop.f32.mrf.mxu0
  %v411 = vadd.f32 %v90, %v410
  %412 = vmatmul.f32.gmra.mxu0 %v205
  %v413 = vpop.f32.mrf.mxu0
  %v414 = vadd.f32 %v90, %v413
  %415 = vmatmul.f32.gmra.mxu0 %v208
  %v416 = vpop.f32.mrf.mxu0
  %v417 = vadd.f32 %v90, %v416
  %418 = vmatmul.f32.gmra.mxu0 %v211
  %v419 = vpop.f32.mrf.mxu0
  %v420 = vadd.f32 %v90, %v419
  %421 = vmatmul.f32.gmra.mxu0 %v214
  %v422 = vpop.f32.mrf.mxu0
  %v423 = vadd.f32 %v90, %v422
  %424 = vmatmul.f32.gmra.mxu0 %v217
  %v425 = vpop.f32.mrf.mxu0
  %v426 = vadd.f32 %v90, %v425
  %427 = vmatmul.f32.gmra.mxu0 %v220
  %v428 = vpop.f32.mrf.mxu0
  %v429 = vadd.f32 %v90, %v428
  %430 = vmatmul.f32.gmra.mxu0 %v223
  %v431 = vpop.f32.mrf.mxu0
  %v432 = vadd.f32 %v90, %v431
  %433 = vmatmul.f32.gmra.mxu0 %v226
  %v434 = vpop.f32.mrf.mxu0
  %v435 = vadd.f32 %v90, %v434
  %436 = vmatmul.f32.gmra.mxu0 %v229
  %v437 = vpop.f32.mrf.mxu0
  %v438 = vadd.f32 %v90, %v437
  %439 = vmatmul.f32.gmra.mxu0 %v232
  %v440 = vpop.f32.mrf.mxu0
  %v441 = vadd.f32 %v90, %v440
  %442 = vmatmul.f32.gmra.mxu0 %v235
  %v443 = vpop.f32.mrf.mxu0
  %v444 = vadd.f32 %v90, %v443
  %445 = vmatmul.f32.gmra.mxu0 %v238
  %v446 = vpop.f32.mrf.mxu0
  %v447 = vadd.f32 %v90, %v446
  %448 = vmatmul.f32.gmra.mxu0 %v241
  %v449 = vpop.f32.mrf.mxu0
  %v450 = vadd.f32 %v90, %v449
  %451 = vmatmul.f32.gmra.mxu0 %v244
  %v452 = vpop.f32.mrf.mxu0
  %v453 = vadd.f32 %v90, %v452
  %454 = vmatmul.f32.gmra.mxu0 %v247
  %v455 = vpop.f32.mrf.mxu0
  %v456 = vadd.f32 %v90, %v455
  %457 = vmatmul.f32.gmra.mxu0 %v250
  %v458 = vpop.f32.mrf.mxu0
  %v459 = vadd.f32 %v90, %v458
  %460 = vmatmul.f32.gmra.mxu0 %v253
  %v461 = vpop.f32.mrf.mxu0
  %v462 = vadd.f32 %v90, %v461
  %463 = vmatmul.f32.gmra.mxu0 %v256
  %v464 = vpop.f32.mrf.mxu0
  %v465 = vadd.f32 %v90, %v464
  %466 = vmatmul.f32.gmra.mxu0 %v259
  %v467 = vpop.f32.mrf.mxu0
  %v468 = vadd.f32 %v90, %v467
  %469 = vmatmul.f32.gmra.mxu0 %v262
  %v470 = vpop.f32.mrf.mxu0
  %v471 = vadd.f32 %v90, %v470
  %472 = vmatmul.f32.gmra.mxu0 %v265
  %v473 = vpop.f32.mrf.mxu0
  %v474 = vadd.f32 %v90, %v473
  %475 = vmatmul.f32.gmra.mxu0 %v268
  %v476 = vpop.f32.mrf.mxu0
  %v477 = vadd.f32 %v90, %v476
  %478 = vmatmul.f32.gmra.mxu0 %v271
  %v479 = vpop.f32.mrf.mxu0
  %v480 = vadd.f32 %v90, %v479
  %481 = vmatmul.f32.gmra.mxu0 %v274
  %v482 = vpop.f32.mrf.mxu0
  %v483 = vadd.f32 %v90, %v482
  %484 = vmatmul.f32.gmra.mxu0 %v277
  %v485 = vpop.f32.mrf.mxu0
  %v486 = vadd.f32 %v90, %v485
  %487 = vmatmul.f32.gmra.mxu0 %v280
  %v488 = vpop.f32.mrf.mxu0
  %v489 = vadd.f32 %v90, %v488
  %490 = vmatmul.f32.gmra.mxu0 %v283
  %v491 = vpop.f32.mrf.mxu0
  %v492 = vadd.f32 %v90, %v491
  %493 = vdwg.mxu0
  %v494 = vxor.u32 %v303, 2147483648
  %v495 = vxor.u32 %v306, 2147483648
  %v496 = vxor.u32 %v309, 2147483648
  %v497 = vxor.u32 %v312, 2147483648
  %v498 = vxor.u32 %v315, 2147483648
  %v499 = vxor.u32 %v318, 2147483648
  %v500 = vxor.u32 %v321, 2147483648
  %v501 = vxor.u32 %v324, 2147483648
  %v502 = vxor.u32 %v327, 2147483648
  %v503 = vxor.u32 %v330, 2147483648
  %v504 = vxor.u32 %v333, 2147483648
  %v505 = vxor.u32 %v336, 2147483648
  %v506 = vxor.u32 %v339, 2147483648
  %v507 = vxor.u32 %v342, 2147483648
  %v508 = vxor.u32 %v345, 2147483648
  %v509 = vxor.u32 %v348, 2147483648
  %v510 = vxor.u32 %v351, 2147483648
  %v511 = vxor.u32 %v354, 2147483648
  %v512 = vxor.u32 %v357, 2147483648
  %v513 = vxor.u32 %v360, 2147483648
  %v514 = vxor.u32 %v363, 2147483648
  %v515 = vxor.u32 %v366, 2147483648
  %v516 = vxor.u32 %v369, 2147483648
  %v517 = vxor.u32 %v372, 2147483648
  %v518 = vxor.u32 %v375, 2147483648
  %v519 = vxor.u32 %v378, 2147483648
  %v520 = vxor.u32 %v381, 2147483648
  %v521 = vxor.u32 %v384, 2147483648
  %v522 = vxor.u32 %v387, 2147483648
  %v523 = vxor.u32 %v390, 2147483648
  %v524 = vxor.u32 %v393, 2147483648
  %v525 = vxor.u32 %v396, 2147483648
  %v526 = vxor.u32 %v399, 2147483648
  %v527 = vxor.u32 %v402, 2147483648
  %v528 = vxor.u32 %v405, 2147483648
  %v529 = vxor.u32 %v408, 2147483648
  %v530 = vxor.u32 %v411, 2147483648
  %v531 = vxor.u32 %v414, 2147483648
  %v532 = vxor.u32 %v417, 2147483648
  %v533 = vxor.u32 %v420, 2147483648
  %v534 = vxor.u32 %v423, 2147483648
  %v535 = vxor.u32 %v426, 2147483648
  %v536 = vxor.u32 %v429, 2147483648
  %v537 = vxor.u32 %v432, 2147483648
  %v538 = vxor.u32 %v435, 2147483648
  %v539 = vxor.u32 %v438, 2147483648
  %v540 = vxor.u32 %v441, 2147483648
  %v541 = vxor.u32 %v444, 2147483648
  %v542 = vxor.u32 %v447, 2147483648
  %v543 = vxor.u32 %v450, 2147483648
  %v544 = vxor.u32 %v453, 2147483648
  %v545 = vxor.u32 %v456, 2147483648
  %v546 = vxor.u32 %v459, 2147483648
  %v547 = vxor.u32 %v462, 2147483648
  %v548 = vxor.u32 %v465, 2147483648
  %v549 = vxor.u32 %v468, 2147483648
  %v550 = vxor.u32 %v471, 2147483648
  %v551 = vxor.u32 %v474, 2147483648
  %v552 = vxor.u32 %v477, 2147483648
  %v553 = vxor.u32 %v480, 2147483648
  %v554 = vxor.u32 %v483, 2147483648
  %v555 = vxor.u32 %v486, 2147483648
  %v556 = vxor.u32 %v489, 2147483648
  %v557 = vxor.u32 %v492, 2147483648
  %v558 = vmul.f32 %v494, 1.442695
  %v559 = vpow.pop %v558
  %v560 = vmul.f32 %v495, 1.442695
  %v561 = vpow.pop %v560
  %v562 = vmul.f32 %v496, 1.442695
  %v563 = vpow.pop %v562
  %v564 = vmul.f32 %v497, 1.442695
  %v565 = vpow.pop %v564
  %v566 = vmul.f32 %v498, 1.442695
  %v567 = vpow.pop %v566
  %v568 = vmul.f32 %v499, 1.442695
  %v569 = vpow.pop %v568
  %v570 = vmul.f32 %v500, 1.442695
  %v571 = vpow.pop %v570
  %v572 = vmul.f32 %v501, 1.442695
  %v573 = vpow.pop %v572
  %v574 = vmul.f32 %v502, 1.442695
  %v575 = vpow.pop %v574
  %v576 = vmul.f32 %v503, 1.442695
  %v577 = vpow.pop %v576
  %v578 = vmul.f32 %v504, 1.442695
  %v579 = vpow.pop %v578
  %v580 = vmul.f32 %v505, 1.442695
  %v581 = vpow.pop %v580
  %v582 = vmul.f32 %v506, 1.442695
  %v583 = vpow.pop %v582
  %v584 = vmul.f32 %v507, 1.442695
  %v585 = vpow.pop %v584
  %v586 = vmul.f32 %v508, 1.442695
  %v587 = vpow.pop %v586
  %v588 = vmul.f32 %v509, 1.442695
  %v589 = vpow.pop %v588
  %v590 = vmul.f32 %v510, 1.442695
  %v591 = vpow.pop %v590
  %v592 = vmul.f32 %v511, 1.442695
  %v593 = vpow.pop %v592
  %v594 = vmul.f32 %v512, 1.442695
  %v595 = vpow.pop %v594
  %v596 = vmul.f32 %v513, 1.442695
  %v597 = vpow.pop %v596
  %v598 = vmul.f32 %v514, 1.442695
  %v599 = vpow.pop %v598
  %v600 = vmul.f32 %v515, 1.442695
  %v601 = vpow.pop %v600
  %v602 = vmul.f32 %v516, 1.442695
  %v603 = vpow.pop %v602
  %v604 = vmul.f32 %v517, 1.442695
  %v605 = vpow.pop %v604
  %v606 = vmul.f32 %v518, 1.442695
  %v607 = vpow.pop %v606
  %v608 = vmul.f32 %v519, 1.442695
  %v609 = vpow.pop %v608
  %v610 = vmul.f32 %v520, 1.442695
  %v611 = vpow.pop %v610
  %v612 = vmul.f32 %v521, 1.442695
  %v613 = vpow.pop %v612
  %v614 = vmul.f32 %v522, 1.442695
  %v615 = vpow.pop %v614
  %v616 = vmul.f32 %v523, 1.442695
  %v617 = vpow.pop %v616
  %v618 = vmul.f32 %v524, 1.442695
  %v619 = vpow.pop %v618
  %v620 = vmul.f32 %v525, 1.442695
  %v621 = vpow.pop %v620
  %v622 = vmul.f32 %v526, 1.442695
  %v623 = vpow.pop %v622
  %v624 = vmul.f32 %v527, 1.442695
  %v625 = vpow.pop %v624
  %v626 = vmul.f32 %v528, 1.442695
  %v627 = vpow.pop %v626
  %v628 = vmul.f32 %v529, 1.442695
  %v629 = vpow.pop %v628
  %v630 = vmul.f32 %v530, 1.442695
  %v631 = vpow.pop %v630
  %v632 = vmul.f32 %v531, 1.442695
  %v633 = vpow.pop %v632
  %v634 = vmul.f32 %v532, 1.442695
  %v635 = vpow.pop %v634
  %v636 = vmul.f32 %v533, 1.442695
  %v637 = vpow.pop %v636
  %v638 = vmul.f32 %v534, 1.442695
  %v639 = vpow.pop %v638
  %v640 = vmul.f32 %v535, 1.442695
  %v641 = vpow.pop %v640
  %v642 = vmul.f32 %v536, 1.442695
  %v643 = vpow.pop %v642
  %v644 = vmul.f32 %v537, 1.442695
  %v645 = vpow.pop %v644
  %v646 = vmul.f32 %v538, 1.442695
  %v647 = vpow.pop %v646
  %v648 = vmul.f32 %v539, 1.442695
  %v649 = vpow.pop %v648
  %v650 = vmul.f32 %v540, 1.442695
  %v651 = vpow.pop %v650
  %v652 = vmul.f32 %v541, 1.442695
  %v653 = vpow.pop %v652
  %v654 = vmul.f32 %v542, 1.442695
  %v655 = vpow.pop %v654
  %v656 = vmul.f32 %v543, 1.442695
  %v657 = vpow.pop %v656
  %v658 = vmul.f32 %v544, 1.442695
  %v659 = vpow.pop %v658
  %v660 = vmul.f32 %v545, 1.442695
  %v661 = vpow.pop %v660
  %v662 = vmul.f32 %v546, 1.442695
  %v663 = vpow.pop %v662
  %v664 = vmul.f32 %v547, 1.442695
  %v665 = vpow.pop %v664
  %v666 = vmul.f32 %v548, 1.442695
  %v667 = vpow.pop %v666
  %v668 = vmul.f32 %v549, 1.442695
  %v669 = vpow.pop %v668
  %v670 = vmul.f32 %v550, 1.442695
  %v671 = vpow.pop %v670
  %v672 = vmul.f32 %v551, 1.442695
  %v673 = vpow.pop %v672
  %v674 = vmul.f32 %v552, 1.442695
  %v675 = vpow.pop %v674
  %v676 = vmul.f32 %v553, 1.442695
  %v677 = vpow.pop %v676
  %v678 = vmul.f32 %v554, 1.442695
  %v679 = vpow.pop %v678
  %v680 = vmul.f32 %v555, 1.442695
  %v681 = vpow.pop %v680
  %v682 = vmul.f32 %v556, 1.442695
  %v683 = vpow.pop %v682
  %v684 = vmul.f32 %v557, 1.442695
  %v685 = vpow.pop %v684
  %v686 = vadd.f32 %v559, 1.0
  %v687 = vadd.f32 %v561, 1.0
  %v688 = vadd.f32 %v563, 1.0
  %v689 = vadd.f32 %v565, 1.0
  %v690 = vadd.f32 %v567, 1.0
  %v691 = vadd.f32 %v569, 1.0
  %v692 = vadd.f32 %v571, 1.0
  %v693 = vadd.f32 %v573, 1.0
  %v694 = vadd.f32 %v575, 1.0
  %v695 = vadd.f32 %v577, 1.0
  %v696 = vadd.f32 %v579, 1.0
  %v697 = vadd.f32 %v581, 1.0
  %v698 = vadd.f32 %v583, 1.0
  %v699 = vadd.f32 %v585, 1.0
  %v700 = vadd.f32 %v587, 1.0
  %v701 = vadd.f32 %v589, 1.0
  %v702 = vadd.f32 %v591, 1.0
  %v703 = vadd.f32 %v593, 1.0
  %v704 = vadd.f32 %v595, 1.0
  %v705 = vadd.f32 %v597, 1.0
  %v706 = vadd.f32 %v599, 1.0
  %v707 = vadd.f32 %v601, 1.0
  %v708 = vadd.f32 %v603, 1.0
  %v709 = vadd.f32 %v605, 1.0
  %v710 = vadd.f32 %v607, 1.0
  %v711 = vadd.f32 %v609, 1.0
  %v712 = vadd.f32 %v611, 1.0
  %v713 = vadd.f32 %v613, 1.0
  %v714 = vadd.f32 %v615, 1.0
  %v715 = vadd.f32 %v617, 1.0
  %v716 = vadd.f32 %v619, 1.0
  %v717 = vadd.f32 %v621, 1.0
  %v718 = vadd.f32 %v623, 1.0
  %v719 = vadd.f32 %v625, 1.0
  %v720 = vadd.f32 %v627, 1.0
  %v721 = vadd.f32 %v629, 1.0
  %v722 = vadd.f32 %v631, 1.0
  %v723 = vadd.f32 %v633, 1.0
  %v724 = vadd.f32 %v635, 1.0
  %v725 = vadd.f32 %v637, 1.0
  %v726 = vadd.f32 %v639, 1.0
  %v727 = vadd.f32 %v641, 1.0
  %v728 = vadd.f32 %v643, 1.0
  %v729 = vadd.f32 %v645, 1.0
  %v730 = vadd.f32 %v647, 1.0
  %v731 = vadd.f32 %v649, 1.0
  %v732 = vadd.f32 %v651, 1.0
  %v733 = vadd.f32 %v653, 1.0
  %v734 = vadd.f32 %v655, 1.0
  %v735 = vadd.f32 %v657, 1.0
  %v736 = vadd.f32 %v659, 1.0
  %v737 = vadd.f32 %v661, 1.0
  %v738 = vadd.f32 %v663, 1.0
  %v739 = vadd.f32 %v665, 1.0
  %v740 = vadd.f32 %v667, 1.0
  %v741 = vadd.f32 %v669, 1.0
  %v742 = vadd.f32 %v671, 1.0
  %v743 = vadd.f32 %v673, 1.0
  %v744 = vadd.f32 %v675, 1.0
  %v745 = vadd.f32 %v677, 1.0
  %v746 = vadd.f32 %v679, 1.0
  %v747 = vadd.f32 %v681, 1.0
  %v748 = vadd.f32 %v683, 1.0
  %v749 = vadd.f32 %v685, 1.0
  %v750 = vrcp.pop %v686
  %v751 = vmul.f32 %v686, %v750
  %v752 = vsub.f32 1.0, %v751
  %v753 = vmul.f32 %v750, %v752
  %v754 = vadd.f32 %v750, %v753
  %vm755 = vweird.f32 %v686
  %vm756 = vweird.f32 %v750
  %vm757 = vmor %vm755, %vm756
  %v758 = vsel %vm757, %v750, %v754
  %v759 = vand.u32 2147483647, %v686
  %vm760 = vcmp.eq.f32.partialorder %v759, 8.507059e+37
  %v761 = vand.u32 %v686, 2147483648
  %v762 = vor.u32 1.1754944e-38, %v761
  %v763 = vsel %vm760, %v762, %v758
  %v764 = vmul.f32 1.0, %v763
  %v765 = vrcp.pop %v687
  %v766 = vmul.f32 %v687, %v765
  %v767 = vsub.f32 1.0, %v766
  %v768 = vmul.f32 %v765, %v767
  %v769 = vadd.f32 %v765, %v768
  %vm770 = vweird.f32 %v687
  %vm771 = vweird.f32 %v765
  %vm772 = vmor %vm770, %vm771
  %v773 = vsel %vm772, %v765, %v769
  %v774 = vand.u32 2147483647, %v687
  %vm775 = vcmp.eq.f32.partialorder %v774, 8.507059e+37
  %v776 = vand.u32 %v687, 2147483648
  %v777 = vor.u32 1.1754944e-38, %v776
  %v778 = vsel %vm775, %v777, %v773
  %v779 = vmul.f32 1.0, %v778
  %v780 = vrcp.pop %v688
  %v781 = vmul.f32 %v688, %v780
  %v782 = vsub.f32 1.0, %v781
  %v783 = vmul.f32 %v780, %v782
  %v784 = vadd.f32 %v780, %v783
  %vm785 = vweird.f32 %v688
  %vm786 = vweird.f32 %v780
  %vm787 = vmor %vm785, %vm786
  %v788 = vsel %vm787, %v780, %v784
  %v789 = vand.u32 2147483647, %v688
  %vm790 = vcmp.eq.f32.partialorder %v789, 8.507059e+37
  %v791 = vand.u32 %v688, 2147483648
  %v792 = vor.u32 1.1754944e-38, %v791
  %v793 = vsel %vm790, %v792, %v788
  %v794 = vmul.f32 1.0, %v793
  %v795 = vrcp.pop %v689
  %v796 = vmul.f32 %v689, %v795
  %v797 = vsub.f32 1.0, %v796
  %v798 = vmul.f32 %v795, %v797
  %v799 = vadd.f32 %v795, %v798
  %vm800 = vweird.f32 %v689
  %vm801 = vweird.f32 %v795
  %vm802 = vmor %vm800, %vm801
  %v803 = vsel %vm802, %v795, %v799
  %v804 = vand.u32 2147483647, %v689
  %vm805 = vcmp.eq.f32.partialorder %v804, 8.507059e+37
  %v806 = vand.u32 %v689, 2147483648
  %v807 = vor.u32 1.1754944e-38, %v806
  %v808 = vsel %vm805, %v807, %v803
  %v809 = vmul.f32 1.0, %v808
  %v810 = vrcp.pop %v690
  %v811 = vmul.f32 %v690, %v810
  %v812 = vsub.f32 1.0, %v811
  %v813 = vmul.f32 %v810, %v812
  %v814 = vadd.f32 %v810, %v813
  %vm815 = vweird.f32 %v690
  %vm816 = vweird.f32 %v810
  %vm817 = vmor %vm815, %vm816
  %v818 = vsel %vm817, %v810, %v814
  %v819 = vand.u32 2147483647, %v690
  %vm820 = vcmp.eq.f32.partialorder %v819, 8.507059e+37
  %v821 = vand.u32 %v690, 2147483648
  %v822 = vor.u32 1.1754944e-38, %v821
  %v823 = vsel %vm820, %v822, %v818
  %v824 = vmul.f32 1.0, %v823
  %v825 = vrcp.pop %v691
  %v826 = vmul.f32 %v691, %v825
  %v827 = vsub.f32 1.0, %v826
  %v828 = vmul.f32 %v825, %v827
  %v829 = vadd.f32 %v825, %v828
  %vm830 = vweird.f32 %v691
  %vm831 = vweird.f32 %v825
  %vm832 = vmor %vm830, %vm831
  %v833 = vsel %vm832, %v825, %v829
  %v834 = vand.u32 2147483647, %v691
  %vm835 = vcmp.eq.f32.partialorder %v834, 8.507059e+37
  %v836 = vand.u32 %v691, 2147483648
  %v837 = vor.u32 1.1754944e-38, %v836
  %v838 = vsel %vm835, %v837, %v833
  %v839 = vmul.f32 1.0, %v838
  %v840 = vrcp.pop %v692
  %v841 = vmul.f32 %v692, %v840
  %v842 = vsub.f32 1.0, %v841
  %v843 = vmul.f32 %v840, %v842
  %v844 = vadd.f32 %v840, %v843
  %vm845 = vweird.f32 %v692
  %vm846 = vweird.f32 %v840
  %vm847 = vmor %vm845, %vm846
  %v848 = vsel %vm847, %v840, %v844
  %v849 = vand.u32 2147483647, %v692
  %vm850 = vcmp.eq.f32.partialorder %v849, 8.507059e+37
  %v851 = vand.u32 %v692, 2147483648
  %v852 = vor.u32 1.1754944e-38, %v851
  %v853 = vsel %vm850, %v852, %v848
  %v854 = vmul.f32 1.0, %v853
  %v855 = vrcp.pop %v693
  %v856 = vmul.f32 %v693, %v855
  %v857 = vsub.f32 1.0, %v856
  %v858 = vmul.f32 %v855, %v857
  %v859 = vadd.f32 %v855, %v858
  %vm860 = vweird.f32 %v693
  %vm861 = vweird.f32 %v855
  %vm862 = vmor %vm860, %vm861
  %v863 = vsel %vm862, %v855, %v859
  %v864 = vand.u32 2147483647, %v693
  %vm865 = vcmp.eq.f32.partialorder %v864, 8.507059e+37
  %v866 = vand.u32 %v693, 2147483648
  %v867 = vor.u32 1.1754944e-38, %v866
  %v868 = vsel %vm865, %v867, %v863
  %v869 = vmul.f32 1.0, %v868
  %v870 = vrcp.pop %v694
  %v871 = vmul.f32 %v694, %v870
  %v872 = vsub.f32 1.0, %v871
  %v873 = vmul.f32 %v870, %v872
  %v874 = vadd.f32 %v870, %v873
  %vm875 = vweird.f32 %v694
  %vm876 = vweird.f32 %v870
  %vm877 = vmor %vm875, %vm876
  %v878 = vsel %vm877, %v870, %v874
  %v879 = vand.u32 2147483647, %v694
  %vm880 = vcmp.eq.f32.partialorder %v879, 8.507059e+37
  %v881 = vand.u32 %v694, 2147483648
  %v882 = vor.u32 1.1754944e-38, %v881
  %v883 = vsel %vm880, %v882, %v878
  %v884 = vmul.f32 1.0, %v883
  %v885 = vrcp.pop %v695
  %v886 = vmul.f32 %v695, %v885
  %v887 = vsub.f32 1.0, %v886
  %v888 = vmul.f32 %v885, %v887
  %v889 = vadd.f32 %v885, %v888
  %vm890 = vweird.f32 %v695
  %vm891 = vweird.f32 %v885
  %vm892 = vmor %vm890, %vm891
  %v893 = vsel %vm892, %v885, %v889
  %v894 = vand.u32 2147483647, %v695
  %vm895 = vcmp.eq.f32.partialorder %v894, 8.507059e+37
  %v896 = vand.u32 %v695, 2147483648
  %v897 = vor.u32 1.1754944e-38, %v896
  %v898 = vsel %vm895, %v897, %v893
  %v899 = vmul.f32 1.0, %v898
  %v900 = vrcp.pop %v696
  %v901 = vmul.f32 %v696, %v900
  %v902 = vsub.f32 1.0, %v901
  %v903 = vmul.f32 %v900, %v902
  %v904 = vadd.f32 %v900, %v903
  %vm905 = vweird.f32 %v696
  %vm906 = vweird.f32 %v900
  %vm907 = vmor %vm905, %vm906
  %v908 = vsel %vm907, %v900, %v904
  %v909 = vand.u32 2147483647, %v696
  %vm910 = vcmp.eq.f32.partialorder %v909, 8.507059e+37
  %v911 = vand.u32 %v696, 2147483648
  %v912 = vor.u32 1.1754944e-38, %v911
  %v913 = vsel %vm910, %v912, %v908
  %v914 = vmul.f32 1.0, %v913
  %v915 = vrcp.pop %v697
  %v916 = vmul.f32 %v697, %v915
  %v917 = vsub.f32 1.0, %v916
  %v918 = vmul.f32 %v915, %v917
  %v919 = vadd.f32 %v915, %v918
  %vm920 = vweird.f32 %v697
  %vm921 = vweird.f32 %v915
  %vm922 = vmor %vm920, %vm921
  %v923 = vsel %vm922, %v915, %v919
  %v924 = vand.u32 2147483647, %v697
  %vm925 = vcmp.eq.f32.partialorder %v924, 8.507059e+37
  %v926 = vand.u32 %v697, 2147483648
  %v927 = vor.u32 1.1754944e-38, %v926
  %v928 = vsel %vm925, %v927, %v923
  %v929 = vmul.f32 1.0, %v928
  %v930 = vrcp.pop %v698
  %v931 = vmul.f32 %v698, %v930
  %v932 = vsub.f32 1.0, %v931
  %v933 = vmul.f32 %v930, %v932
  %v934 = vadd.f32 %v930, %v933
  %vm935 = vweird.f32 %v698
  %vm936 = vweird.f32 %v930
  %vm937 = vmor %vm935, %vm936
  %v938 = vsel %vm937, %v930, %v934
  %v939 = vand.u32 2147483647, %v698
  %vm940 = vcmp.eq.f32.partialorder %v939, 8.507059e+37
  %v941 = vand.u32 %v698, 2147483648
  %v942 = vor.u32 1.1754944e-38, %v941
  %v943 = vsel %vm940, %v942, %v938
  %v944 = vmul.f32 1.0, %v943
  %v945 = vrcp.pop %v699
  %v946 = vmul.f32 %v699, %v945
  %v947 = vsub.f32 1.0, %v946
  %v948 = vmul.f32 %v945, %v947
  %v949 = vadd.f32 %v945, %v948
  %vm950 = vweird.f32 %v699
  %vm951 = vweird.f32 %v945
  %vm952 = vmor %vm950, %vm951
  %v953 = vsel %vm952, %v945, %v949
  %v954 = vand.u32 2147483647, %v699
  %vm955 = vcmp.eq.f32.partialorder %v954, 8.507059e+37
  %v956 = vand.u32 %v699, 2147483648
  %v957 = vor.u32 1.1754944e-38, %v956
  %v958 = vsel %vm955, %v957, %v953
  %v959 = vmul.f32 1.0, %v958
  %v960 = vrcp.pop %v700
  %v961 = vmul.f32 %v700, %v960
  %v962 = vsub.f32 1.0, %v961
  %v963 = vmul.f32 %v960, %v962
  %v964 = vadd.f32 %v960, %v963
  %vm965 = vweird.f32 %v700
  %vm966 = vweird.f32 %v960
  %vm967 = vmor %vm965, %vm966
  %v968 = vsel %vm967, %v960, %v964
  %v969 = vand.u32 2147483647, %v700
  %vm970 = vcmp.eq.f32.partialorder %v969, 8.507059e+37
  %v971 = vand.u32 %v700, 2147483648
  %v972 = vor.u32 1.1754944e-38, %v971
  %v973 = vsel %vm970, %v972, %v968
  %v974 = vmul.f32 1.0, %v973
  %v975 = vrcp.pop %v701
  %v976 = vmul.f32 %v701, %v975
  %v977 = vsub.f32 1.0, %v976
  %v978 = vmul.f32 %v975, %v977
  %v979 = vadd.f32 %v975, %v978
  %vm980 = vweird.f32 %v701
  %vm981 = vweird.f32 %v975
  %vm982 = vmor %vm980, %vm981
  %v983 = vsel %vm982, %v975, %v979
  %v984 = vand.u32 2147483647, %v701
  %vm985 = vcmp.eq.f32.partialorder %v984, 8.507059e+37
  %v986 = vand.u32 %v701, 2147483648
  %v987 = vor.u32 1.1754944e-38, %v986
  %v988 = vsel %vm985, %v987, %v983
  %v989 = vmul.f32 1.0, %v988
  %v990 = vrcp.pop %v702
  %v991 = vmul.f32 %v702, %v990
  %v992 = vsub.f32 1.0, %v991
  %v993 = vmul.f32 %v990, %v992
  %v994 = vadd.f32 %v990, %v993
  %vm995 = vweird.f32 %v702
  %vm996 = vweird.f32 %v990
  %vm997 = vmor %vm995, %vm996
  %v998 = vsel %vm997, %v990, %v994
  %v999 = vand.u32 2147483647, %v702
  %vm1000 = vcmp.eq.f32.partialorder %v999, 8.507059e+37
  %v1001 = vand.u32 %v702, 2147483648
  %v1002 = vor.u32 1.1754944e-38, %v1001
  %v1003 = vsel %vm1000, %v1002, %v998
  %v1004 = vmul.f32 1.0, %v1003
  %v1005 = vrcp.pop %v703
  %v1006 = vmul.f32 %v703, %v1005
  %v1007 = vsub.f32 1.0, %v1006
  %v1008 = vmul.f32 %v1005, %v1007
  %v1009 = vadd.f32 %v1005, %v1008
  %vm1010 = vweird.f32 %v703
  %vm1011 = vweird.f32 %v1005
  %vm1012 = vmor %vm1010, %vm1011
  %v1013 = vsel %vm1012, %v1005, %v1009
  %v1014 = vand.u32 2147483647, %v703
  %vm1015 = vcmp.eq.f32.partialorder %v1014, 8.507059e+37
  %v1016 = vand.u32 %v703, 2147483648
  %v1017 = vor.u32 1.1754944e-38, %v1016
  %v1018 = vsel %vm1015, %v1017, %v1013
  %v1019 = vmul.f32 1.0, %v1018
  %v1020 = vrcp.pop %v704
  %v1021 = vmul.f32 %v704, %v1020
  %v1022 = vsub.f32 1.0, %v1021
  %v1023 = vmul.f32 %v1020, %v1022
  %v1024 = vadd.f32 %v1020, %v1023
  %vm1025 = vweird.f32 %v704
  %vm1026 = vweird.f32 %v1020
  %vm1027 = vmor %vm1025, %vm1026
  %v1028 = vsel %vm1027, %v1020, %v1024
  %v1029 = vand.u32 2147483647, %v704
  %vm1030 = vcmp.eq.f32.partialorder %v1029, 8.507059e+37
  %v1031 = vand.u32 %v704, 2147483648
  %v1032 = vor.u32 1.1754944e-38, %v1031
  %v1033 = vsel %vm1030, %v1032, %v1028
  %v1034 = vmul.f32 1.0, %v1033
  %v1035 = vrcp.pop %v705
  %v1036 = vmul.f32 %v705, %v1035
  %v1037 = vsub.f32 1.0, %v1036
  %v1038 = vmul.f32 %v1035, %v1037
  %v1039 = vadd.f32 %v1035, %v1038
  %vm1040 = vweird.f32 %v705
  %vm1041 = vweird.f32 %v1035
  %vm1042 = vmor %vm1040, %vm1041
  %v1043 = vsel %vm1042, %v1035, %v1039
  %v1044 = vand.u32 2147483647, %v705
  %vm1045 = vcmp.eq.f32.partialorder %v1044, 8.507059e+37
  %v1046 = vand.u32 %v705, 2147483648
  %v1047 = vor.u32 1.1754944e-38, %v1046
  %v1048 = vsel %vm1045, %v1047, %v1043
  %v1049 = vmul.f32 1.0, %v1048
  %v1050 = vrcp.pop %v706
  %v1051 = vmul.f32 %v706, %v1050
  %v1052 = vsub.f32 1.0, %v1051
  %v1053 = vmul.f32 %v1050, %v1052
  %v1054 = vadd.f32 %v1050, %v1053
  %vm1055 = vweird.f32 %v706
  %vm1056 = vweird.f32 %v1050
  %vm1057 = vmor %vm1055, %vm1056
  %v1058 = vsel %vm1057, %v1050, %v1054
  %v1059 = vand.u32 2147483647, %v706
  %vm1060 = vcmp.eq.f32.partialorder %v1059, 8.507059e+37
  %v1061 = vand.u32 %v706, 2147483648
  %v1062 = vor.u32 1.1754944e-38, %v1061
  %v1063 = vsel %vm1060, %v1062, %v1058
  %v1064 = vmul.f32 1.0, %v1063
  %v1065 = vrcp.pop %v707
  %v1066 = vmul.f32 %v707, %v1065
  %v1067 = vsub.f32 1.0, %v1066
  %v1068 = vmul.f32 %v1065, %v1067
  %v1069 = vadd.f32 %v1065, %v1068
  %vm1070 = vweird.f32 %v707
  %vm1071 = vweird.f32 %v1065
  %vm1072 = vmor %vm1070, %vm1071
  %v1073 = vsel %vm1072, %v1065, %v1069
  %v1074 = vand.u32 2147483647, %v707
  %vm1075 = vcmp.eq.f32.partialorder %v1074, 8.507059e+37
  %v1076 = vand.u32 %v707, 2147483648
  %v1077 = vor.u32 1.1754944e-38, %v1076
  %v1078 = vsel %vm1075, %v1077, %v1073
  %v1079 = vmul.f32 1.0, %v1078
  %v1080 = vrcp.pop %v708
  %v1081 = vmul.f32 %v708, %v1080
  %v1082 = vsub.f32 1.0, %v1081
  %v1083 = vmul.f32 %v1080, %v1082
  %v1084 = vadd.f32 %v1080, %v1083
  %vm1085 = vweird.f32 %v708
  %vm1086 = vweird.f32 %v1080
  %vm1087 = vmor %vm1085, %vm1086
  %v1088 = vsel %vm1087, %v1080, %v1084
  %v1089 = vand.u32 2147483647, %v708
  %vm1090 = vcmp.eq.f32.partialorder %v1089, 8.507059e+37
  %v1091 = vand.u32 %v708, 2147483648
  %v1092 = vor.u32 1.1754944e-38, %v1091
  %v1093 = vsel %vm1090, %v1092, %v1088
  %v1094 = vmul.f32 1.0, %v1093
  %v1095 = vrcp.pop %v709
  %v1096 = vmul.f32 %v709, %v1095
  %v1097 = vsub.f32 1.0, %v1096
  %v1098 = vmul.f32 %v1095, %v1097
  %v1099 = vadd.f32 %v1095, %v1098
  %vm1100 = vweird.f32 %v709
  %vm1101 = vweird.f32 %v1095
  %vm1102 = vmor %vm1100, %vm1101
  %v1103 = vsel %vm1102, %v1095, %v1099
  %v1104 = vand.u32 2147483647, %v709
  %vm1105 = vcmp.eq.f32.partialorder %v1104, 8.507059e+37
  %v1106 = vand.u32 %v709, 2147483648
  %v1107 = vor.u32 1.1754944e-38, %v1106
  %v1108 = vsel %vm1105, %v1107, %v1103
  %v1109 = vmul.f32 1.0, %v1108
  %v1110 = vrcp.pop %v710
  %v1111 = vmul.f32 %v710, %v1110
  %v1112 = vsub.f32 1.0, %v1111
  %v1113 = vmul.f32 %v1110, %v1112
  %v1114 = vadd.f32 %v1110, %v1113
  %vm1115 = vweird.f32 %v710
  %vm1116 = vweird.f32 %v1110
  %vm1117 = vmor %vm1115, %vm1116
  %v1118 = vsel %vm1117, %v1110, %v1114
  %v1119 = vand.u32 2147483647, %v710
  %vm1120 = vcmp.eq.f32.partialorder %v1119, 8.507059e+37
  %v1121 = vand.u32 %v710, 2147483648
  %v1122 = vor.u32 1.1754944e-38, %v1121
  %v1123 = vsel %vm1120, %v1122, %v1118
  %v1124 = vmul.f32 1.0, %v1123
  %v1125 = vrcp.pop %v711
  %v1126 = vmul.f32 %v711, %v1125
  %v1127 = vsub.f32 1.0, %v1126
  %v1128 = vmul.f32 %v1125, %v1127
  %v1129 = vadd.f32 %v1125, %v1128
  %vm1130 = vweird.f32 %v711
  %vm1131 = vweird.f32 %v1125
  %vm1132 = vmor %vm1130, %vm1131
  %v1133 = vsel %vm1132, %v1125, %v1129
  %v1134 = vand.u32 2147483647, %v711
  %vm1135 = vcmp.eq.f32.partialorder %v1134, 8.507059e+37
  %v1136 = vand.u32 %v711, 2147483648
  %v1137 = vor.u32 1.1754944e-38, %v1136
  %v1138 = vsel %vm1135, %v1137, %v1133
  %v1139 = vmul.f32 1.0, %v1138
  %v1140 = vrcp.pop %v712
  %v1141 = vmul.f32 %v712, %v1140
  %v1142 = vsub.f32 1.0, %v1141
  %v1143 = vmul.f32 %v1140, %v1142
  %v1144 = vadd.f32 %v1140, %v1143
  %vm1145 = vweird.f32 %v712
  %vm1146 = vweird.f32 %v1140
  %vm1147 = vmor %vm1145, %vm1146
  %v1148 = vsel %vm1147, %v1140, %v1144
  %v1149 = vand.u32 2147483647, %v712
  %vm1150 = vcmp.eq.f32.partialorder %v1149, 8.507059e+37
  %v1151 = vand.u32 %v712, 2147483648
  %v1152 = vor.u32 1.1754944e-38, %v1151
  %v1153 = vsel %vm1150, %v1152, %v1148
  %v1154 = vmul.f32 1.0, %v1153
  %v1155 = vrcp.pop %v713
  %v1156 = vmul.f32 %v713, %v1155
  %v1157 = vsub.f32 1.0, %v1156
  %v1158 = vmul.f32 %v1155, %v1157
  %v1159 = vadd.f32 %v1155, %v1158
  %vm1160 = vweird.f32 %v713
  %vm1161 = vweird.f32 %v1155
  %vm1162 = vmor %vm1160, %vm1161
  %v1163 = vsel %vm1162, %v1155, %v1159
  %v1164 = vand.u32 2147483647, %v713
  %vm1165 = vcmp.eq.f32.partialorder %v1164, 8.507059e+37
  %v1166 = vand.u32 %v713, 2147483648
  %v1167 = vor.u32 1.1754944e-38, %v1166
  %v1168 = vsel %vm1165, %v1167, %v1163
  %v1169 = vmul.f32 1.0, %v1168
  %v1170 = vrcp.pop %v714
  %v1171 = vmul.f32 %v714, %v1170
  %v1172 = vsub.f32 1.0, %v1171
  %v1173 = vmul.f32 %v1170, %v1172
  %v1174 = vadd.f32 %v1170, %v1173
  %vm1175 = vweird.f32 %v714
  %vm1176 = vweird.f32 %v1170
  %vm1177 = vmor %vm1175, %vm1176
  %v1178 = vsel %vm1177, %v1170, %v1174
  %v1179 = vand.u32 2147483647, %v714
  %vm1180 = vcmp.eq.f32.partialorder %v1179, 8.507059e+37
  %v1181 = vand.u32 %v714, 2147483648
  %v1182 = vor.u32 1.1754944e-38, %v1181
  %v1183 = vsel %vm1180, %v1182, %v1178
  %v1184 = vmul.f32 1.0, %v1183
  %v1185 = vrcp.pop %v715
  %v1186 = vmul.f32 %v715, %v1185
  %v1187 = vsub.f32 1.0, %v1186
  %v1188 = vmul.f32 %v1185, %v1187
  %v1189 = vadd.f32 %v1185, %v1188
  %vm1190 = vweird.f32 %v715
  %vm1191 = vweird.f32 %v1185
  %vm1192 = vmor %vm1190, %vm1191
  %v1193 = vsel %vm1192, %v1185, %v1189
  %v1194 = vand.u32 2147483647, %v715
  %vm1195 = vcmp.eq.f32.partialorder %v1194, 8.507059e+37
  %v1196 = vand.u32 %v715, 2147483648
  %v1197 = vor.u32 1.1754944e-38, %v1196
  %v1198 = vsel %vm1195, %v1197, %v1193
  %v1199 = vmul.f32 1.0, %v1198
  %v1200 = vrcp.pop %v716
  %v1201 = vmul.f32 %v716, %v1200
  %v1202 = vsub.f32 1.0, %v1201
  %v1203 = vmul.f32 %v1200, %v1202
  %v1204 = vadd.f32 %v1200, %v1203
  %vm1205 = vweird.f32 %v716
  %vm1206 = vweird.f32 %v1200
  %vm1207 = vmor %vm1205, %vm1206
  %v1208 = vsel %vm1207, %v1200, %v1204
  %v1209 = vand.u32 2147483647, %v716
  %vm1210 = vcmp.eq.f32.partialorder %v1209, 8.507059e+37
  %v1211 = vand.u32 %v716, 2147483648
  %v1212 = vor.u32 1.1754944e-38, %v1211
  %v1213 = vsel %vm1210, %v1212, %v1208
  %v1214 = vmul.f32 1.0, %v1213
  %v1215 = vrcp.pop %v717
  %v1216 = vmul.f32 %v717, %v1215
  %v1217 = vsub.f32 1.0, %v1216
  %v1218 = vmul.f32 %v1215, %v1217
  %v1219 = vadd.f32 %v1215, %v1218
  %vm1220 = vweird.f32 %v717
  %vm1221 = vweird.f32 %v1215
  %vm1222 = vmor %vm1220, %vm1221
  %v1223 = vsel %vm1222, %v1215, %v1219
  %v1224 = vand.u32 2147483647, %v717
  %vm1225 = vcmp.eq.f32.partialorder %v1224, 8.507059e+37
  %v1226 = vand.u32 %v717, 2147483648
  %v1227 = vor.u32 1.1754944e-38, %v1226
  %v1228 = vsel %vm1225, %v1227, %v1223
  %v1229 = vmul.f32 1.0, %v1228
  %v1230 = vrcp.pop %v718
  %v1231 = vmul.f32 %v718, %v1230
  %v1232 = vsub.f32 1.0, %v1231
  %v1233 = vmul.f32 %v1230, %v1232
  %v1234 = vadd.f32 %v1230, %v1233
  %vm1235 = vweird.f32 %v718
  %vm1236 = vweird.f32 %v1230
  %vm1237 = vmor %vm1235, %vm1236
  %v1238 = vsel %vm1237, %v1230, %v1234
  %v1239 = vand.u32 2147483647, %v718
  %vm1240 = vcmp.eq.f32.partialorder %v1239, 8.507059e+37
  %v1241 = vand.u32 %v718, 2147483648
  %v1242 = vor.u32 1.1754944e-38, %v1241
  %v1243 = vsel %vm1240, %v1242, %v1238
  %v1244 = vmul.f32 1.0, %v1243
  %v1245 = vrcp.pop %v719
  %v1246 = vmul.f32 %v719, %v1245
  %v1247 = vsub.f32 1.0, %v1246
  %v1248 = vmul.f32 %v1245, %v1247
  %v1249 = vadd.f32 %v1245, %v1248
  %vm1250 = vweird.f32 %v719
  %vm1251 = vweird.f32 %v1245
  %vm1252 = vmor %vm1250, %vm1251
  %v1253 = vsel %vm1252, %v1245, %v1249
  %v1254 = vand.u32 2147483647, %v719
  %vm1255 = vcmp.eq.f32.partialorder %v1254, 8.507059e+37
  %v1256 = vand.u32 %v719, 2147483648
  %v1257 = vor.u32 1.1754944e-38, %v1256
  %v1258 = vsel %vm1255, %v1257, %v1253
  %v1259 = vmul.f32 1.0, %v1258
  %v1260 = vrcp.pop %v720
  %v1261 = vmul.f32 %v720, %v1260
  %v1262 = vsub.f32 1.0, %v1261
  %v1263 = vmul.f32 %v1260, %v1262
  %v1264 = vadd.f32 %v1260, %v1263
  %vm1265 = vweird.f32 %v720
  %vm1266 = vweird.f32 %v1260
  %vm1267 = vmor %vm1265, %vm1266
  %v1268 = vsel %vm1267, %v1260, %v1264
  %v1269 = vand.u32 2147483647, %v720
  %vm1270 = vcmp.eq.f32.partialorder %v1269, 8.507059e+37
  %v1271 = vand.u32 %v720, 2147483648
  %v1272 = vor.u32 1.1754944e-38, %v1271
  %v1273 = vsel %vm1270, %v1272, %v1268
  %v1274 = vmul.f32 1.0, %v1273
  %v1275 = vrcp.pop %v721
  %v1276 = vmul.f32 %v721, %v1275
  %v1277 = vsub.f32 1.0, %v1276
  %v1278 = vmul.f32 %v1275, %v1277
  %v1279 = vadd.f32 %v1275, %v1278
  %vm1280 = vweird.f32 %v721
  %vm1281 = vweird.f32 %v1275
  %vm1282 = vmor %vm1280, %vm1281
  %v1283 = vsel %vm1282, %v1275, %v1279
  %v1284 = vand.u32 2147483647, %v721
  %vm1285 = vcmp.eq.f32.partialorder %v1284, 8.507059e+37
  %v1286 = vand.u32 %v721, 2147483648
  %v1287 = vor.u32 1.1754944e-38, %v1286
  %v1288 = vsel %vm1285, %v1287, %v1283
  %v1289 = vmul.f32 1.0, %v1288
  %v1290 = vrcp.pop %v722
  %v1291 = vmul.f32 %v722, %v1290
  %v1292 = vsub.f32 1.0, %v1291
  %v1293 = vmul.f32 %v1290, %v1292
  %v1294 = vadd.f32 %v1290, %v1293
  %vm1295 = vweird.f32 %v722
  %vm1296 = vweird.f32 %v1290
  %vm1297 = vmor %vm1295, %vm1296
  %v1298 = vsel %vm1297, %v1290, %v1294
  %v1299 = vand.u32 2147483647, %v722
  %vm1300 = vcmp.eq.f32.partialorder %v1299, 8.507059e+37
  %v1301 = vand.u32 %v722, 2147483648
  %v1302 = vor.u32 1.1754944e-38, %v1301
  %v1303 = vsel %vm1300, %v1302, %v1298
  %v1304 = vmul.f32 1.0, %v1303
  %v1305 = vrcp.pop %v723
  %v1306 = vmul.f32 %v723, %v1305
  %v1307 = vsub.f32 1.0, %v1306
  %v1308 = vmul.f32 %v1305, %v1307
  %v1309 = vadd.f32 %v1305, %v1308
  %vm1310 = vweird.f32 %v723
  %vm1311 = vweird.f32 %v1305
  %vm1312 = vmor %vm1310, %vm1311
  %v1313 = vsel %vm1312, %v1305, %v1309
  %v1314 = vand.u32 2147483647, %v723
  %vm1315 = vcmp.eq.f32.partialorder %v1314, 8.507059e+37
  %v1316 = vand.u32 %v723, 2147483648
  %v1317 = vor.u32 1.1754944e-38, %v1316
  %v1318 = vsel %vm1315, %v1317, %v1313
  %v1319 = vmul.f32 1.0, %v1318
  %v1320 = vrcp.pop %v724
  %v1321 = vmul.f32 %v724, %v1320
  %v1322 = vsub.f32 1.0, %v1321
  %v1323 = vmul.f32 %v1320, %v1322
  %v1324 = vadd.f32 %v1320, %v1323
  %vm1325 = vweird.f32 %v724
  %vm1326 = vweird.f32 %v1320
  %vm1327 = vmor %vm1325, %vm1326
  %v1328 = vsel %vm1327, %v1320, %v1324
  %v1329 = vand.u32 2147483647, %v724
  %vm1330 = vcmp.eq.f32.partialorder %v1329, 8.507059e+37
  %v1331 = vand.u32 %v724, 2147483648
  %v1332 = vor.u32 1.1754944e-38, %v1331
  %v1333 = vsel %vm1330, %v1332, %v1328
  %v1334 = vmul.f32 1.0, %v1333
  %v1335 = vrcp.pop %v725
  %v1336 = vmul.f32 %v725, %v1335
  %v1337 = vsub.f32 1.0, %v1336
  %v1338 = vmul.f32 %v1335, %v1337
  %v1339 = vadd.f32 %v1335, %v1338
  %vm1340 = vweird.f32 %v725
  %vm1341 = vweird.f32 %v1335
  %vm1342 = vmor %vm1340, %vm1341
  %v1343 = vsel %vm1342, %v1335, %v1339
  %v1344 = vand.u32 2147483647, %v725
  %vm1345 = vcmp.eq.f32.partialorder %v1344, 8.507059e+37
  %v1346 = vand.u32 %v725, 2147483648
  %v1347 = vor.u32 1.1754944e-38, %v1346
  %v1348 = vsel %vm1345, %v1347, %v1343
  %v1349 = vmul.f32 1.0, %v1348
  %v1350 = vrcp.pop %v726
  %v1351 = vmul.f32 %v726, %v1350
  %v1352 = vsub.f32 1.0, %v1351
  %v1353 = vmul.f32 %v1350, %v1352
  %v1354 = vadd.f32 %v1350, %v1353
  %vm1355 = vweird.f32 %v726
  %vm1356 = vweird.f32 %v1350
  %vm1357 = vmor %vm1355, %vm1356
  %v1358 = vsel %vm1357, %v1350, %v1354
  %v1359 = vand.u32 2147483647, %v726
  %vm1360 = vcmp.eq.f32.partialorder %v1359, 8.507059e+37
  %v1361 = vand.u32 %v726, 2147483648
  %v1362 = vor.u32 1.1754944e-38, %v1361
  %v1363 = vsel %vm1360, %v1362, %v1358
  %v1364 = vmul.f32 1.0, %v1363
  %v1365 = vrcp.pop %v727
  %v1366 = vmul.f32 %v727, %v1365
  %v1367 = vsub.f32 1.0, %v1366
  %v1368 = vmul.f32 %v1365, %v1367
  %v1369 = vadd.f32 %v1365, %v1368
  %vm1370 = vweird.f32 %v727
  %vm1371 = vweird.f32 %v1365
  %vm1372 = vmor %vm1370, %vm1371
  %v1373 = vsel %vm1372, %v1365, %v1369
  %v1374 = vand.u32 2147483647, %v727
  %vm1375 = vcmp.eq.f32.partialorder %v1374, 8.507059e+37
  %v1376 = vand.u32 %v727, 2147483648
  %v1377 = vor.u32 1.1754944e-38, %v1376
  %v1378 = vsel %vm1375, %v1377, %v1373
  %v1379 = vmul.f32 1.0, %v1378
  %v1380 = vrcp.pop %v728
  %v1381 = vmul.f32 %v728, %v1380
  %v1382 = vsub.f32 1.0, %v1381
  %v1383 = vmul.f32 %v1380, %v1382
  %v1384 = vadd.f32 %v1380, %v1383
  %vm1385 = vweird.f32 %v728
  %vm1386 = vweird.f32 %v1380
  %vm1387 = vmor %vm1385, %vm1386
  %v1388 = vsel %vm1387, %v1380, %v1384
  %v1389 = vand.u32 2147483647, %v728
  %vm1390 = vcmp.eq.f32.partialorder %v1389, 8.507059e+37
  %v1391 = vand.u32 %v728, 2147483648
  %v1392 = vor.u32 1.1754944e-38, %v1391
  %v1393 = vsel %vm1390, %v1392, %v1388
  %v1394 = vmul.f32 1.0, %v1393
  %v1395 = vrcp.pop %v729
  %v1396 = vmul.f32 %v729, %v1395
  %v1397 = vsub.f32 1.0, %v1396
  %v1398 = vmul.f32 %v1395, %v1397
  %v1399 = vadd.f32 %v1395, %v1398
  %vm1400 = vweird.f32 %v729
  %vm1401 = vweird.f32 %v1395
  %vm1402 = vmor %vm1400, %vm1401
  %v1403 = vsel %vm1402, %v1395, %v1399
  %v1404 = vand.u32 2147483647, %v729
  %vm1405 = vcmp.eq.f32.partialorder %v1404, 8.507059e+37
  %v1406 = vand.u32 %v729, 2147483648
  %v1407 = vor.u32 1.1754944e-38, %v1406
  %v1408 = vsel %vm1405, %v1407, %v1403
  %v1409 = vmul.f32 1.0, %v1408
  %v1410 = vrcp.pop %v730
  %v1411 = vmul.f32 %v730, %v1410
  %v1412 = vsub.f32 1.0, %v1411
  %v1413 = vmul.f32 %v1410, %v1412
  %v1414 = vadd.f32 %v1410, %v1413
  %vm1415 = vweird.f32 %v730
  %vm1416 = vweird.f32 %v1410
  %vm1417 = vmor %vm1415, %vm1416
  %v1418 = vsel %vm1417, %v1410, %v1414
  %v1419 = vand.u32 2147483647, %v730
  %vm1420 = vcmp.eq.f32.partialorder %v1419, 8.507059e+37
  %v1421 = vand.u32 %v730, 2147483648
  %v1422 = vor.u32 1.1754944e-38, %v1421
  %v1423 = vsel %vm1420, %v1422, %v1418
  %v1424 = vmul.f32 1.0, %v1423
  %v1425 = vrcp.pop %v731
  %v1426 = vmul.f32 %v731, %v1425
  %v1427 = vsub.f32 1.0, %v1426
  %v1428 = vmul.f32 %v1425, %v1427
  %v1429 = vadd.f32 %v1425, %v1428
  %vm1430 = vweird.f32 %v731
  %vm1431 = vweird.f32 %v1425
  %vm1432 = vmor %vm1430, %vm1431
  %v1433 = vsel %vm1432, %v1425, %v1429
  %v1434 = vand.u32 2147483647, %v731
  %vm1435 = vcmp.eq.f32.partialorder %v1434, 8.507059e+37
  %v1436 = vand.u32 %v731, 2147483648
  %v1437 = vor.u32 1.1754944e-38, %v1436
  %v1438 = vsel %vm1435, %v1437, %v1433
  %v1439 = vmul.f32 1.0, %v1438
  %v1440 = vrcp.pop %v732
  %v1441 = vmul.f32 %v732, %v1440
  %v1442 = vsub.f32 1.0, %v1441
  %v1443 = vmul.f32 %v1440, %v1442
  %v1444 = vadd.f32 %v1440, %v1443
  %vm1445 = vweird.f32 %v732
  %vm1446 = vweird.f32 %v1440
  %vm1447 = vmor %vm1445, %vm1446
  %v1448 = vsel %vm1447, %v1440, %v1444
  %v1449 = vand.u32 2147483647, %v732
  %vm1450 = vcmp.eq.f32.partialorder %v1449, 8.507059e+37
  %v1451 = vand.u32 %v732, 2147483648
  %v1452 = vor.u32 1.1754944e-38, %v1451
  %v1453 = vsel %vm1450, %v1452, %v1448
  %v1454 = vmul.f32 1.0, %v1453
  %v1455 = vrcp.pop %v733
  %v1456 = vmul.f32 %v733, %v1455
  %v1457 = vsub.f32 1.0, %v1456
  %v1458 = vmul.f32 %v1455, %v1457
  %v1459 = vadd.f32 %v1455, %v1458
  %vm1460 = vweird.f32 %v733
  %vm1461 = vweird.f32 %v1455
  %vm1462 = vmor %vm1460, %vm1461
  %v1463 = vsel %vm1462, %v1455, %v1459
  %v1464 = vand.u32 2147483647, %v733
  %vm1465 = vcmp.eq.f32.partialorder %v1464, 8.507059e+37
  %v1466 = vand.u32 %v733, 2147483648
  %v1467 = vor.u32 1.1754944e-38, %v1466
  %v1468 = vsel %vm1465, %v1467, %v1463
  %v1469 = vmul.f32 1.0, %v1468
  %v1470 = vrcp.pop %v734
  %v1471 = vmul.f32 %v734, %v1470
  %v1472 = vsub.f32 1.0, %v1471
  %v1473 = vmul.f32 %v1470, %v1472
  %v1474 = vadd.f32 %v1470, %v1473
  %vm1475 = vweird.f32 %v734
  %vm1476 = vweird.f32 %v1470
  %vm1477 = vmor %vm1475, %vm1476
  %v1478 = vsel %vm1477, %v1470, %v1474
  %v1479 = vand.u32 2147483647, %v734
  %vm1480 = vcmp.eq.f32.partialorder %v1479, 8.507059e+37
  %v1481 = vand.u32 %v734, 2147483648
  %v1482 = vor.u32 1.1754944e-38, %v1481
  %v1483 = vsel %vm1480, %v1482, %v1478
  %v1484 = vmul.f32 1.0, %v1483
  %v1485 = vrcp.pop %v735
  %v1486 = vmul.f32 %v735, %v1485
  %v1487 = vsub.f32 1.0, %v1486
  %v1488 = vmul.f32 %v1485, %v1487
  %v1489 = vadd.f32 %v1485, %v1488
  %vm1490 = vweird.f32 %v735
  %vm1491 = vweird.f32 %v1485
  %vm1492 = vmor %vm1490, %vm1491
  %v1493 = vsel %vm1492, %v1485, %v1489
  %v1494 = vand.u32 2147483647, %v735
  %vm1495 = vcmp.eq.f32.partialorder %v1494, 8.507059e+37
  %v1496 = vand.u32 %v735, 2147483648
  %v1497 = vor.u32 1.1754944e-38, %v1496
  %v1498 = vsel %vm1495, %v1497, %v1493
  %v1499 = vmul.f32 1.0, %v1498
  %v1500 = vrcp.pop %v736
  %v1501 = vmul.f32 %v736, %v1500
  %v1502 = vsub.f32 1.0, %v1501
  %v1503 = vmul.f32 %v1500, %v1502
  %v1504 = vadd.f32 %v1500, %v1503
  %vm1505 = vweird.f32 %v736
  %vm1506 = vweird.f32 %v1500
  %vm1507 = vmor %vm1505, %vm1506
  %v1508 = vsel %vm1507, %v1500, %v1504
  %v1509 = vand.u32 2147483647, %v736
  %vm1510 = vcmp.eq.f32.partialorder %v1509, 8.507059e+37
  %v1511 = vand.u32 %v736, 2147483648
  %v1512 = vor.u32 1.1754944e-38, %v1511
  %v1513 = vsel %vm1510, %v1512, %v1508
  %v1514 = vmul.f32 1.0, %v1513
  %v1515 = vrcp.pop %v737
  %v1516 = vmul.f32 %v737, %v1515
  %v1517 = vsub.f32 1.0, %v1516
  %v1518 = vmul.f32 %v1515, %v1517
  %v1519 = vadd.f32 %v1515, %v1518
  %vm1520 = vweird.f32 %v737
  %vm1521 = vweird.f32 %v1515
  %vm1522 = vmor %vm1520, %vm1521
  %v1523 = vsel %vm1522, %v1515, %v1519
  %v1524 = vand.u32 2147483647, %v737
  %vm1525 = vcmp.eq.f32.partialorder %v1524, 8.507059e+37
  %v1526 = vand.u32 %v737, 2147483648
  %v1527 = vor.u32 1.1754944e-38, %v1526
  %v1528 = vsel %vm1525, %v1527, %v1523
  %v1529 = vmul.f32 1.0, %v1528
  %v1530 = vrcp.pop %v738
  %v1531 = vmul.f32 %v738, %v1530
  %v1532 = vsub.f32 1.0, %v1531
  %v1533 = vmul.f32 %v1530, %v1532
  %v1534 = vadd.f32 %v1530, %v1533
  %vm1535 = vweird.f32 %v738
  %vm1536 = vweird.f32 %v1530
  %vm1537 = vmor %vm1535, %vm1536
  %v1538 = vsel %vm1537, %v1530, %v1534
  %v1539 = vand.u32 2147483647, %v738
  %vm1540 = vcmp.eq.f32.partialorder %v1539, 8.507059e+37
  %v1541 = vand.u32 %v738, 2147483648
  %v1542 = vor.u32 1.1754944e-38, %v1541
  %v1543 = vsel %vm1540, %v1542, %v1538
  %v1544 = vmul.f32 1.0, %v1543
  %v1545 = vrcp.pop %v739
  %v1546 = vmul.f32 %v739, %v1545
  %v1547 = vsub.f32 1.0, %v1546
  %v1548 = vmul.f32 %v1545, %v1547
  %v1549 = vadd.f32 %v1545, %v1548
  %vm1550 = vweird.f32 %v739
  %vm1551 = vweird.f32 %v1545
  %vm1552 = vmor %vm1550, %vm1551
  %v1553 = vsel %vm1552, %v1545, %v1549
  %v1554 = vand.u32 2147483647, %v739
  %vm1555 = vcmp.eq.f32.partialorder %v1554, 8.507059e+37
  %v1556 = vand.u32 %v739, 2147483648
  %v1557 = vor.u32 1.1754944e-38, %v1556
  %v1558 = vsel %vm1555, %v1557, %v1553
  %v1559 = vmul.f32 1.0, %v1558
  %v1560 = vrcp.pop %v740
  %v1561 = vmul.f32 %v740, %v1560
  %v1562 = vsub.f32 1.0, %v1561
  %v1563 = vmul.f32 %v1560, %v1562
  %v1564 = vadd.f32 %v1560, %v1563
  %vm1565 = vweird.f32 %v740
  %vm1566 = vweird.f32 %v1560
  %vm1567 = vmor %vm1565, %vm1566
  %v1568 = vsel %vm1567, %v1560, %v1564
  %v1569 = vand.u32 2147483647, %v740
  %vm1570 = vcmp.eq.f32.partialorder %v1569, 8.507059e+37
  %v1571 = vand.u32 %v740, 2147483648
  %v1572 = vor.u32 1.1754944e-38, %v1571
  %v1573 = vsel %vm1570, %v1572, %v1568
  %v1574 = vmul.f32 1.0, %v1573
  %v1575 = vrcp.pop %v741
  %v1576 = vmul.f32 %v741, %v1575
  %v1577 = vsub.f32 1.0, %v1576
  %v1578 = vmul.f32 %v1575, %v1577
  %v1579 = vadd.f32 %v1575, %v1578
  %vm1580 = vweird.f32 %v741
  %vm1581 = vweird.f32 %v1575
  %vm1582 = vmor %vm1580, %vm1581
  %v1583 = vsel %vm1582, %v1575, %v1579
  %v1584 = vand.u32 2147483647, %v741
  %vm1585 = vcmp.eq.f32.partialorder %v1584, 8.507059e+37
  %v1586 = vand.u32 %v741, 2147483648
  %v1587 = vor.u32 1.1754944e-38, %v1586
  %v1588 = vsel %vm1585, %v1587, %v1583
  %v1589 = vmul.f32 1.0, %v1588
  %v1590 = vrcp.pop %v742
  %v1591 = vmul.f32 %v742, %v1590
  %v1592 = vsub.f32 1.0, %v1591
  %v1593 = vmul.f32 %v1590, %v1592
  %v1594 = vadd.f32 %v1590, %v1593
  %vm1595 = vweird.f32 %v742
  %vm1596 = vweird.f32 %v1590
  %vm1597 = vmor %vm1595, %vm1596
  %v1598 = vsel %vm1597, %v1590, %v1594
  %v1599 = vand.u32 2147483647, %v742
  %vm1600 = vcmp.eq.f32.partialorder %v1599, 8.507059e+37
  %v1601 = vand.u32 %v742, 2147483648
  %v1602 = vor.u32 1.1754944e-38, %v1601
  %v1603 = vsel %vm1600, %v1602, %v1598
  %v1604 = vmul.f32 1.0, %v1603
  %v1605 = vrcp.pop %v743
  %v1606 = vmul.f32 %v743, %v1605
  %v1607 = vsub.f32 1.0, %v1606
  %v1608 = vmul.f32 %v1605, %v1607
  %v1609 = vadd.f32 %v1605, %v1608
  %vm1610 = vweird.f32 %v743
  %vm1611 = vweird.f32 %v1605
  %vm1612 = vmor %vm1610, %vm1611
  %v1613 = vsel %vm1612, %v1605, %v1609
  %v1614 = vand.u32 2147483647, %v743
  %vm1615 = vcmp.eq.f32.partialorder %v1614, 8.507059e+37
  %v1616 = vand.u32 %v743, 2147483648
  %v1617 = vor.u32 1.1754944e-38, %v1616
  %v1618 = vsel %vm1615, %v1617, %v1613
  %v1619 = vmul.f32 1.0, %v1618
  %v1620 = vrcp.pop %v744
  %v1621 = vmul.f32 %v744, %v1620
  %v1622 = vsub.f32 1.0, %v1621
  %v1623 = vmul.f32 %v1620, %v1622
  %v1624 = vadd.f32 %v1620, %v1623
  %vm1625 = vweird.f32 %v744
  %vm1626 = vweird.f32 %v1620
  %vm1627 = vmor %vm1625, %vm1626
  %v1628 = vsel %vm1627, %v1620, %v1624
  %v1629 = vand.u32 2147483647, %v744
  %vm1630 = vcmp.eq.f32.partialorder %v1629, 8.507059e+37
  %v1631 = vand.u32 %v744, 2147483648
  %v1632 = vor.u32 1.1754944e-38, %v1631
  %v1633 = vsel %vm1630, %v1632, %v1628
  %v1634 = vmul.f32 1.0, %v1633
  %v1635 = vrcp.pop %v745
  %v1636 = vmul.f32 %v745, %v1635
  %v1637 = vsub.f32 1.0, %v1636
  %v1638 = vmul.f32 %v1635, %v1637
  %v1639 = vadd.f32 %v1635, %v1638
  %vm1640 = vweird.f32 %v745
  %vm1641 = vweird.f32 %v1635
  %vm1642 = vmor %vm1640, %vm1641
  %v1643 = vsel %vm1642, %v1635, %v1639
  %v1644 = vand.u32 2147483647, %v745
  %vm1645 = vcmp.eq.f32.partialorder %v1644, 8.507059e+37
  %v1646 = vand.u32 %v745, 2147483648
  %v1647 = vor.u32 1.1754944e-38, %v1646
  %v1648 = vsel %vm1645, %v1647, %v1643
  %v1649 = vmul.f32 1.0, %v1648
  %v1650 = vrcp.pop %v746
  %v1651 = vmul.f32 %v746, %v1650
  %v1652 = vsub.f32 1.0, %v1651
  %v1653 = vmul.f32 %v1650, %v1652
  %v1654 = vadd.f32 %v1650, %v1653
  %vm1655 = vweird.f32 %v746
  %vm1656 = vweird.f32 %v1650
  %vm1657 = vmor %vm1655, %vm1656
  %v1658 = vsel %vm1657, %v1650, %v1654
  %v1659 = vand.u32 2147483647, %v746
  %vm1660 = vcmp.eq.f32.partialorder %v1659, 8.507059e+37
  %v1661 = vand.u32 %v746, 2147483648
  %v1662 = vor.u32 1.1754944e-38, %v1661
  %v1663 = vsel %vm1660, %v1662, %v1658
  %v1664 = vmul.f32 1.0, %v1663
  %v1665 = vrcp.pop %v747
  %v1666 = vmul.f32 %v747, %v1665
  %v1667 = vsub.f32 1.0, %v1666
  %v1668 = vmul.f32 %v1665, %v1667
  %v1669 = vadd.f32 %v1665, %v1668
  %vm1670 = vweird.f32 %v747
  %vm1671 = vweird.f32 %v1665
  %vm1672 = vmor %vm1670, %vm1671
  %v1673 = vsel %vm1672, %v1665, %v1669
  %v1674 = vand.u32 2147483647, %v747
  %vm1675 = vcmp.eq.f32.partialorder %v1674, 8.507059e+37
  %v1676 = vand.u32 %v747, 2147483648
  %v1677 = vor.u32 1.1754944e-38, %v1676
  %v1678 = vsel %vm1675, %v1677, %v1673
  %v1679 = vmul.f32 1.0, %v1678
  %v1680 = vrcp.pop %v748
  %v1681 = vmul.f32 %v748, %v1680
  %v1682 = vsub.f32 1.0, %v1681
  %v1683 = vmul.f32 %v1680, %v1682
  %v1684 = vadd.f32 %v1680, %v1683
  %vm1685 = vweird.f32 %v748
  %vm1686 = vweird.f32 %v1680
  %vm1687 = vmor %vm1685, %vm1686
  %v1688 = vsel %vm1687, %v1680, %v1684
  %v1689 = vand.u32 2147483647, %v748
  %vm1690 = vcmp.eq.f32.partialorder %v1689, 8.507059e+37
  %v1691 = vand.u32 %v748, 2147483648
  %v1692 = vor.u32 1.1754944e-38, %v1691
  %v1693 = vsel %vm1690, %v1692, %v1688
  %v1694 = vmul.f32 1.0, %v1693
  %v1695 = vrcp.pop %v749
  %v1696 = vmul.f32 %v749, %v1695
  %v1697 = vsub.f32 1.0, %v1696
  %v1698 = vmul.f32 %v1695, %v1697
  %v1699 = vadd.f32 %v1695, %v1698
  %vm1700 = vweird.f32 %v749
  %vm1701 = vweird.f32 %v1695
  %vm1702 = vmor %vm1700, %vm1701
  %v1703 = vsel %vm1702, %v1695, %v1699
  %v1704 = vand.u32 2147483647, %v749
  %vm1705 = vcmp.eq.f32.partialorder %v1704, 8.507059e+37
  %v1706 = vand.u32 %v749, 2147483648
  %v1707 = vor.u32 1.1754944e-38, %v1706
  %v1708 = vsel %vm1705, %v1707, %v1703
  %v1709 = vmul.f32 1.0, %v1708
  %v1710 = vld [vmem:[%s3] sm:$0xff]
  %v1711 = vld [vmem:[%s3 + $0x8] sm:$0xff]
  %v1712 = vld [vmem:[%s3 + $0x10] sm:$0xff]
  %v1713 = vld [vmem:[%s3 + $0x18] sm:$0xff]
  %v1714 = vld [vmem:[%s3 + $0x20] sm:$0xff]
  %v1715 = vld [vmem:[%s3 + $0x28] sm:$0xff]
  %v1716 = vld [vmem:[%s3 + $0x30] sm:$0xff]
  %v1717 = vld [vmem:[%s3 + $0x38] sm:$0xff]
  %v1718 = vld [vmem:[%s4] sm:$0x1]
  %v1720 = vperm.slane %v1718, 0
  %vm1722 = vcmask 523264
  %v1724 = vsel %vm1722, %v764, 0
  %v1727 = vsel %vm1722, %v779, 0
  %v1730 = vsel %vm1722, %v794, 0
  %v1733 = vsel %vm1722, %v809, 0
  %v1736 = vsel %vm1722, %v824, 0
  %v1739 = vsel %vm1722, %v839, 0
  %v1742 = vsel %vm1722, %v854, 0
  %v1745 = vsel %vm1722, %v869, 0
  %v1748 = vsel %vm1722, %v884, 0
  %v1751 = vsel %vm1722, %v899, 0
  %v1754 = vsel %vm1722, %v914, 0
  %v1757 = vsel %vm1722, %v929, 0
  %v1760 = vsel %vm1722, %v944, 0
  %v1763 = vsel %vm1722, %v959, 0
  %v1766 = vsel %vm1722, %v974, 0
  %v1769 = vsel %vm1722, %v989, 0
  %v1772 = vsel %vm1722, %v1004, 0
  %v1775 = vsel %vm1722, %v1019, 0
  %v1778 = vsel %vm1722, %v1034, 0
  %v1781 = vsel %vm1722, %v1049, 0
  %v1784 = vsel %vm1722, %v1064, 0
  %v1787 = vsel %vm1722, %v1079, 0
  %v1790 = vsel %vm1722, %v1094, 0
  %v1793 = vsel %vm1722, %v1109, 0
  %v1796 = vsel %vm1722, %v1124, 0
  %v1799 = vsel %vm1722, %v1139, 0
  %v1802 = vsel %vm1722, %v1154, 0
  %v1805 = vsel %vm1722, %v1169, 0
  %v1808 = vsel %vm1722, %v1184, 0
  %v1811 = vsel %vm1722, %v1199, 0
  %v1814 = vsel %vm1722, %v1214, 0
  %v1817 = vsel %vm1722, %v1229, 0
  %v1820 = vsel %vm1722, %v1244, 0
  %v1823 = vsel %vm1722, %v1259, 0
  %v1826 = vsel %vm1722, %v1274, 0
  %v1829 = vsel %vm1722, %v1289, 0
  %v1832 = vsel %vm1722, %v1304, 0
  %v1835 = vsel %vm1722, %v1319, 0
  %v1838 = vsel %vm1722, %v1334, 0
  %v1841 = vsel %vm1722, %v1349, 0
  %v1844 = vsel %vm1722, %v1364, 0
  %v1847 = vsel %vm1722, %v1379, 0
  %v1850 = vsel %vm1722, %v1394, 0
  %v1853 = vsel %vm1722, %v1409, 0
  %v1856 = vsel %vm1722, %v1424, 0
  %v1859 = vsel %vm1722, %v1439, 0
  %v1862 = vsel %vm1722, %v1454, 0
  %v1865 = vsel %vm1722, %v1469, 0
  %v1868 = vsel %vm1722, %v1484, 0
  %v1871 = vsel %vm1722, %v1499, 0
  %v1874 = vsel %vm1722, %v1514, 0
  %v1877 = vsel %vm1722, %v1529, 0
  %v1880 = vsel %vm1722, %v1544, 0
  %v1883 = vsel %vm1722, %v1559, 0
  %v1886 = vsel %vm1722, %v1574, 0
  %v1889 = vsel %vm1722, %v1589, 0
  %v1892 = vsel %vm1722, %v1604, 0
  %v1895 = vsel %vm1722, %v1619, 0
  %v1898 = vsel %vm1722, %v1634, 0
  %v1901 = vsel %vm1722, %v1649, 0
  %v1904 = vsel %vm1722, %v1664, 0
  %v1907 = vsel %vm1722, %v1679, 0
  %v1910 = vsel %vm1722, %v1694, 0
  %v1913 = vsel %vm1722, %v1709, 0
  %1915 = vmatpush.msra.mxu0 0.0
  %1916 = vmatpush.msra.mxu0 0.0
  %1917 = vmatpush.msra.mxu0 0.0
  %1918 = vmatpush.msra.mxu0 0.0
  %1919 = vmatpush.msra.mxu0 0.0
  %1920 = vmatpush.msra.mxu0 0.0
  %1921 = vmatpush.msra.mxu0 0.0
  %1922 = vmatpush.msra.mxu0 0.0
  %1923 = vmatpush.msra.mxu0 %v1717
  %1924 = vmatpush.msra.mxu0 %v1716
  %1925 = vmatpush.msra.mxu0 %v1715
  %1926 = vmatpush.msra.mxu0 %v1714
  %1927 = vmatpush.msra.mxu0 %v1713
  %1928 = vmatpush.msra.mxu0 %v1712
  %1929 = vmatpush.msra.mxu0 %v1711
  %1930 = vmatpush.msra.mxu0 %v1710
  %1931 = vmatmul.f32.gmra.mxu0 %v1724
  %v1932 = vpop.f32.mrf.mxu0
  %v1933 = vadd.f32 %v1720, %v1932
  %1934 = vmatmul.f32.gmra.mxu0 %v1727
  %v1935 = vpop.f32.mrf.mxu0
  %v1936 = vadd.f32 %v1720, %v1935
  %1937 = vmatmul.f32.gmra.mxu0 %v1730
  %v1938 = vpop.f32.mrf.mxu0
  %v1939 = vadd.f32 %v1720, %v1938
  %1940 = vmatmul.f32.gmra.mxu0 %v1733
  %v1941 = vpop.f32.mrf.mxu0
  %v1942 = vadd.f32 %v1720, %v1941
  %1943 = vmatmul.f32.gmra.mxu0 %v1736
  %v1944 = vpop.f32.mrf.mxu0
  %v1945 = vadd.f32 %v1720, %v1944
  %1946 = vmatmul.f32.gmra.mxu0 %v1739
  %v1947 = vpop.f32.mrf.mxu0
  %v1948 = vadd.f32 %v1720, %v1947
  %1949 = vmatmul.f32.gmra.mxu0 %v1742
  %v1950 = vpop.f32.mrf.mxu0
  %v1951 = vadd.f32 %v1720, %v1950
  %1952 = vmatmul.f32.gmra.mxu0 %v1745
  %v1953 = vpop.f32.mrf.mxu0
  %v1954 = vadd.f32 %v1720, %v1953
  %1955 = vmatmul.f32.gmra.mxu0 %v1748
  %v1956 = vpop.f32.mrf.mxu0
  %v1957 = vadd.f32 %v1720, %v1956
  %1958 = vmatmul.f32.gmra.mxu0 %v1751
  %v1959 = vpop.f32.mrf.mxu0
  %v1960 = vadd.f32 %v1720, %v1959
  %1961 = vmatmul.f32.gmra.mxu0 %v1754
  %v1962 = vpop.f32.mrf.mxu0
  %v1963 = vadd.f32 %v1720, %v1962
  %1964 = vmatmul.f32.gmra.mxu0 %v1757
  %v1965 = vpop.f32.mrf.mxu0
  %v1966 = vadd.f32 %v1720, %v1965
  %1967 = vmatmul.f32.gmra.mxu0 %v1760
  %v1968 = vpop.f32.mrf.mxu0
  %v1969 = vadd.f32 %v1720, %v1968
  %1970 = vmatmul.f32.gmra.mxu0 %v1763
  %v1971 = vpop.f32.mrf.mxu0
  %v1972 = vadd.f32 %v1720, %v1971
  %1973 = vmatmul.f32.gmra.mxu0 %v1766
  %v1974 = vpop.f32.mrf.mxu0
  %v1975 = vadd.f32 %v1720, %v1974
  %1976 = vmatmul.f32.gmra.mxu0 %v1769
  %v1977 = vpop.f32.mrf.mxu0
  %v1978 = vadd.f32 %v1720, %v1977
  %1979 = vmatmul.f32.gmra.mxu0 %v1772
  %v1980 = vpop.f32.mrf.mxu0
  %v1981 = vadd.f32 %v1720, %v1980
  %1982 = vmatmul.f32.gmra.mxu0 %v1775
  %v1983 = vpop.f32.mrf.mxu0
  %v1984 = vadd.f32 %v1720, %v1983
  %1985 = vmatmul.f32.gmra.mxu0 %v1778
  %v1986 = vpop.f32.mrf.mxu0
  %v1987 = vadd.f32 %v1720, %v1986
  %1988 = vmatmul.f32.gmra.mxu0 %v1781
  %v1989 = vpop.f32.mrf.mxu0
  %v1990 = vadd.f32 %v1720, %v1989
  %1991 = vmatmul.f32.gmra.mxu0 %v1784
  %v1992 = vpop.f32.mrf.mxu0
  %v1993 = vadd.f32 %v1720, %v1992
  %1994 = vmatmul.f32.gmra.mxu0 %v1787
  %v1995 = vpop.f32.mrf.mxu0
  %v1996 = vadd.f32 %v1720, %v1995
  %1997 = vmatmul.f32.gmra.mxu0 %v1790
  %v1998 = vpop.f32.mrf.mxu0
  %v1999 = vadd.f32 %v1720, %v1998
  %2000 = vmatmul.f32.gmra.mxu0 %v1793
  %v2001 = vpop.f32.mrf.mxu0
  %v2002 = vadd.f32 %v1720, %v2001
  %2003 = vmatmul.f32.gmra.mxu0 %v1796
  %v2004 = vpop.f32.mrf.mxu0
  %v2005 = vadd.f32 %v1720, %v2004
  %2006 = vmatmul.f32.gmra.mxu0 %v1799
  %v2007 = vpop.f32.mrf.mxu0
  %v2008 = vadd.f32 %v1720, %v2007
  %2009 = vmatmul.f32.gmra.mxu0 %v1802
  %v2010 = vpop.f32.mrf.mxu0
  %v2011 = vadd.f32 %v1720, %v2010
  %2012 = vmatmul.f32.gmra.mxu0 %v1805
  %v2013 = vpop.f32.mrf.mxu0
  %v2014 = vadd.f32 %v1720, %v2013
  %2015 = vmatmul.f32.gmra.mxu0 %v1808
  %v2016 = vpop.f32.mrf.mxu0
  %v2017 = vadd.f32 %v1720, %v2016
  %2018 = vmatmul.f32.gmra.mxu0 %v1811
  %v2019 = vpop.f32.mrf.mxu0
  %v2020 = vadd.f32 %v1720, %v2019
  %2021 = vmatmul.f32.gmra.mxu0 %v1814
  %v2022 = vpop.f32.mrf.mxu0
  %v2023 = vadd.f32 %v1720, %v2022
  %2024 = vmatmul.f32.gmra.mxu0 %v1817
  %v2025 = vpop.f32.mrf.mxu0
  %v2026 = vadd.f32 %v1720, %v2025
  %2027 = vmatmul.f32.gmra.mxu0 %v1820
  %v2028 = vpop.f32.mrf.mxu0
  %v2029 = vadd.f32 %v1720, %v2028
  %2030 = vmatmul.f32.gmra.mxu0 %v1823
  %v2031 = vpop.f32.mrf.mxu0
  %v2032 = vadd.f32 %v1720, %v2031
  %2033 = vmatmul.f32.gmra.mxu0 %v1826
  %v2034 = vpop.f32.mrf.mxu0
  %v2035 = vadd.f32 %v1720, %v2034
  %2036 = vmatmul.f32.gmra.mxu0 %v1829
  %v2037 = vpop.f32.mrf.mxu0
  %v2038 = vadd.f32 %v1720, %v2037
  %2039 = vmatmul.f32.gmra.mxu0 %v1832
  %v2040 = vpop.f32.mrf.mxu0
  %v2041 = vadd.f32 %v1720, %v2040
  %2042 = vmatmul.f32.gmra.mxu0 %v1835
  %v2043 = vpop.f32.mrf.mxu0
  %v2044 = vadd.f32 %v1720, %v2043
  %2045 = vmatmul.f32.gmra.mxu0 %v1838
  %v2046 = vpop.f32.mrf.mxu0
  %v2047 = vadd.f32 %v1720, %v2046
  %2048 = vmatmul.f32.gmra.mxu0 %v1841
  %v2049 = vpop.f32.mrf.mxu0
  %v2050 = vadd.f32 %v1720, %v2049
  %2051 = vmatmul.f32.gmra.mxu0 %v1844
  %v2052 = vpop.f32.mrf.mxu0
  %v2053 = vadd.f32 %v1720, %v2052
  %2054 = vmatmul.f32.gmra.mxu0 %v1847
  %v2055 = vpop.f32.mrf.mxu0
  %v2056 = vadd.f32 %v1720, %v2055
  %2057 = vmatmul.f32.gmra.mxu0 %v1850
  %v2058 = vpop.f32.mrf.mxu0
  %v2059 = vadd.f32 %v1720, %v2058
  %2060 = vmatmul.f32.gmra.mxu0 %v1853
  %v2061 = vpop.f32.mrf.mxu0
  %v2062 = vadd.f32 %v1720, %v2061
  %2063 = vmatmul.f32.gmra.mxu0 %v1856
  %v2064 = vpop.f32.mrf.mxu0
  %v2065 = vadd.f32 %v1720, %v2064
  %2066 = vmatmul.f32.gmra.mxu0 %v1859
  %v2067 = vpop.f32.mrf.mxu0
  %v2068 = vadd.f32 %v1720, %v2067
  %2069 = vmatmul.f32.gmra.mxu0 %v1862
  %v2070 = vpop.f32.mrf.mxu0
  %v2071 = vadd.f32 %v1720, %v2070
  %2072 = vmatmul.f32.gmra.mxu0 %v1865
  %v2073 = vpop.f32.mrf.mxu0
  %v2074 = vadd.f32 %v1720, %v2073
  %2075 = vmatmul.f32.gmra.mxu0 %v1868
  %v2076 = vpop.f32.mrf.mxu0
  %v2077 = vadd.f32 %v1720, %v2076
  %2078 = vmatmul.f32.gmra.mxu0 %v1871
  %v2079 = vpop.f32.mrf.mxu0
  %v2080 = vadd.f32 %v1720, %v2079
  %2081 = vmatmul.f32.gmra.mxu0 %v1874
  %v2082 = vpop.f32.mrf.mxu0
  %v2083 = vadd.f32 %v1720, %v2082
  %2084 = vmatmul.f32.gmra.mxu0 %v1877
  %v2085 = vpop.f32.mrf.mxu0
  %v2086 = vadd.f32 %v1720, %v2085
  %2087 = vmatmul.f32.gmra.mxu0 %v1880
  %v2088 = vpop.f32.mrf.mxu0
  %v2089 = vadd.f32 %v1720, %v2088
  %2090 = vmatmul.f32.gmra.mxu0 %v1883
  %v2091 = vpop.f32.mrf.mxu0
  %v2092 = vadd.f32 %v1720, %v2091
  %2093 = vmatmul.f32.gmra.mxu0 %v1886
  %v2094 = vpop.f32.mrf.mxu0
  %v2095 = vadd.f32 %v1720, %v2094
  %2096 = vmatmul.f32.gmra.mxu0 %v1889
  %v2097 = vpop.f32.mrf.mxu0
  %v2098 = vadd.f32 %v1720, %v2097
  %2099 = vmatmul.f32.gmra.mxu0 %v1892
  %v2100 = vpop.f32.mrf.mxu0
  %v2101 = vadd.f32 %v1720, %v2100
  %2102 = vmatmul.f32.gmra.mxu0 %v1895
  %v2103 = vpop.f32.mrf.mxu0
  %v2104 = vadd.f32 %v1720, %v2103
  %2105 = vmatmul.f32.gmra.mxu0 %v1898
  %v2106 = vpop.f32.mrf.mxu0
  %v2107 = vadd.f32 %v1720, %v2106
  %2108 = vmatmul.f32.gmra.mxu0 %v1901
  %v2109 = vpop.f32.mrf.mxu0
  %v2110 = vadd.f32 %v1720, %v2109
  %2111 = vmatmul.f32.gmra.mxu0 %v1904
  %v2112 = vpop.f32.mrf.mxu0
  %v2113 = vadd.f32 %v1720, %v2112
  %2114 = vmatmul.f32.gmra.mxu0 %v1907
  %v2115 = vpop.f32.mrf.mxu0
  %v2116 = vadd.f32 %v1720, %v2115
  %2117 = vmatmul.f32.gmra.mxu0 %v1910
  %v2118 = vpop.f32.mrf.mxu0
  %v2119 = vadd.f32 %v1720, %v2118
  %2120 = vmatmul.f32.gmra.mxu0 %v1913
  %v2121 = vpop.f32.mrf.mxu0
  %v2122 = vadd.f32 %v1720, %v2121
  %2123 = vdwg.mxu0
  %vm2124 = vcmask 64512
  %2125 = vst.msk [vmem:[%s5] sm:$0xff] %vm2124, %v1933
  %2126 = vst.msk [vmem:[%s5 + $0x8] sm:$0xff] %vm2124, %v1936
  %2127 = vst.msk [vmem:[%s5 + $0x10] sm:$0xff] %vm2124, %v1939
  %2128 = vst.msk [vmem:[%s5 + $0x18] sm:$0xff] %vm2124, %v1942
  %2129 = vst.msk [vmem:[%s5 + $0x20] sm:$0xff] %vm2124, %v1945
  %2130 = vst.msk [vmem:[%s5 + $0x28] sm:$0xff] %vm2124, %v1948
  %2131 = vst.msk [vmem:[%s5 + $0x30] sm:$0xff] %vm2124, %v1951
  %2132 = vst.msk [vmem:[%s5 + $0x38] sm:$0xff] %vm2124, %v1954
  %2133 = vst.msk [vmem:[%s5 + $0x40] sm:$0xff] %vm2124, %v1957
  %2134 = vst.msk [vmem:[%s5 + $0x48] sm:$0xff] %vm2124, %v1960
  %2135 = vst.msk [vmem:[%s5 + $0x50] sm:$0xff] %vm2124, %v1963
  %2136 = vst.msk [vmem:[%s5 + $0x58] sm:$0xff] %vm2124, %v1966
  %2137 = vst.msk [vmem:[%s5 + $0x60] sm:$0xff] %vm2124, %v1969
  %2138 = vst.msk [vmem:[%s5 + $0x68] sm:$0xff] %vm2124, %v1972
  %2139 = vst.msk [vmem:[%s5 + $0x70] sm:$0xff] %vm2124, %v1975
  %2140 = vst.msk [vmem:[%s5 + $0x78] sm:$0xff] %vm2124, %v1978
  %2141 = vst.msk [vmem:[%s5 + $0x80] sm:$0xff] %vm2124, %v1981
  %2142 = vst.msk [vmem:[%s5 + $0x88] sm:$0xff] %vm2124, %v1984
  %2143 = vst.msk [vmem:[%s5 + $0x90] sm:$0xff] %vm2124, %v1987
  %2144 = vst.msk [vmem:[%s5 + $0x98] sm:$0xff] %vm2124, %v1990
  %2145 = vst.msk [vmem:[%s5 + $0xa0] sm:$0xff] %vm2124, %v1993
  %2146 = vst.msk [vmem:[%s5 + $0xa8] sm:$0xff] %vm2124, %v1996
  %2147 = vst.msk [vmem:[%s5 + $0xb0] sm:$0xff] %vm2124, %v1999
  %2148 = vst.msk [vmem:[%s5 + $0xb8] sm:$0xff] %vm2124, %v2002
  %2149 = vst.msk [vmem:[%s5 + $0xc0] sm:$0xff] %vm2124, %v2005
  %2150 = vst.msk [vmem:[%s5 + $0xc8] sm:$0xff] %vm2124, %v2008
  %2151 = vst.msk [vmem:[%s5 + $0xd0] sm:$0xff] %vm2124, %v2011
  %2152 = vst.msk [vmem:[%s5 + $0xd8] sm:$0xff] %vm2124, %v2014
  %2153 = vst.msk [vmem:[%s5 + $0xe0] sm:$0xff] %vm2124, %v2017
  %2154 = vst.msk [vmem:[%s5 + $0xe8] sm:$0xff] %vm2124, %v2020
  %2155 = vst.msk [vmem:[%s5 + $0xf0] sm:$0xff] %vm2124, %v2023
  %2156 = vst.msk [vmem:[%s5 + $0xf8] sm:$0xff] %vm2124, %v2026
  %2157 = vst.msk [vmem:[%s5 + $0x100] sm:$0xff] %vm2124, %v2029
  %2158 = vst.msk [vmem:[%s5 + $0x108] sm:$0xff] %vm2124, %v2032
  %2159 = vst.msk [vmem:[%s5 + $0x110] sm:$0xff] %vm2124, %v2035
  %2160 = vst.msk [vmem:[%s5 + $0x118] sm:$0xff] %vm2124, %v2038
  %2161 = vst.msk [vmem:[%s5 + $0x120] sm:$0xff] %vm2124, %v2041
  %2162 = vst.msk [vmem:[%s5 + $0x128] sm:$0xff] %vm2124, %v2044
  %2163 = vst.msk [vmem:[%s5 + $0x130] sm:$0xff] %vm2124, %v2047
  %2164 = vst.msk [vmem:[%s5 + $0x138] sm:$0xff] %vm2124, %v2050
  %2165 = vst.msk [vmem:[%s5 + $0x140] sm:$0xff] %vm2124, %v2053
  %2166 = vst.msk [vmem:[%s5 + $0x148] sm:$0xff] %vm2124, %v2056
  %2167 = vst.msk [vmem:[%s5 + $0x150] sm:$0xff] %vm2124, %v2059
  %2168 = vst.msk [vmem:[%s5 + $0x158] sm:$0xff] %vm2124, %v2062
  %2169 = vst.msk [vmem:[%s5 + $0x160] sm:$0xff] %vm2124, %v2065
  %2170 = vst.msk [vmem:[%s5 + $0x168] sm:$0xff] %vm2124, %v2068
  %2171 = vst.msk [vmem:[%s5 + $0x170] sm:$0xff] %vm2124, %v2071
  %2172 = vst.msk [vmem:[%s5 + $0x178] sm:$0xff] %vm2124, %v2074
  %2173 = vst.msk [vmem:[%s5 + $0x180] sm:$0xff] %vm2124, %v2077
  %2174 = vst.msk [vmem:[%s5 + $0x188] sm:$0xff] %vm2124, %v2080
  %2175 = vst.msk [vmem:[%s5 + $0x190] sm:$0xff] %vm2124, %v2083
  %2176 = vst.msk [vmem:[%s5 + $0x198] sm:$0xff] %vm2124, %v2086
  %2177 = vst.msk [vmem:[%s5 + $0x1a0] sm:$0xff] %vm2124, %v2089
  %2178 = vst.msk [vmem:[%s5 + $0x1a8] sm:$0xff] %vm2124, %v2092
  %2179 = vst.msk [vmem:[%s5 + $0x1b0] sm:$0xff] %vm2124, %v2095
  %2180 = vst.msk [vmem:[%s5 + $0x1b8] sm:$0xff] %vm2124, %v2098
  %2181 = vst.msk [vmem:[%s5 + $0x1c0] sm:$0xff] %vm2124, %v2101
  %2182 = vst.msk [vmem:[%s5 + $0x1c8] sm:$0xff] %vm2124, %v2104
  %2183 = vst.msk [vmem:[%s5 + $0x1d0] sm:$0xff] %vm2124, %v2107
  %2184 = vst.msk [vmem:[%s5 + $0x1d8] sm:$0xff] %vm2124, %v2110
  %2185 = vst.msk [vmem:[%s5 + $0x1e0] sm:$0xff] %vm2124, %v2113
  %2186 = vst.msk [vmem:[%s5 + $0x1e8] sm:$0xff] %vm2124, %v2116
  %2187 = vst.msk [vmem:[%s5 + $0x1f0] sm:$0xff] %vm2124, %v2119
  %2188 = vst.msk [vmem:[%s5 + $0x1f8] sm:$0xff] %vm2124, %v2122
  // Predicated region
  $region22: #{net_forward.1} parent=0 // pred_check
    _
  $region23: #{net_forward.1} parent=0 // pred_check_branch
    %2190 = sbr.rel (0) target = $region25
  $region24: #{net_forward.1} parent=0 // pred_region
    _
  $region25: #{net_forward.1} parent=0 // pred_fallthru
    _
  // Predicated region
  $region26: #{net_forward.1} parent=0 // pred_check
    _
  $region27: #{net_forward.1} parent=0 // pred_check_branch
    %2192 = sbr.rel (0) target = $region29
  $region28: #{net_forward.1} parent=0 // pred_region
    _
  $region29: #{net_forward.1} parent=0 // pred_fallthru
    _

// kernel: net_forward.1
$region0: #{net_forward.1}
  #allocation0 [shape = 'u32[]', space=smem, size = 0x4, offset = 0x4, fixed_abs, tag = 'smem constant byte address 0x4 - core index']
  #allocation1 [shape = 'u32[72,128]{1,0:T(1,128)}', space=vmem, size = 0x9000, scoped, tag = 'internal scratch']
  %s0 = inlined_call_operand.vmem [shape: f32[512,32], index: 0, kind: input, shape index: {}]
  %s1 = inlined_call_operand.vmem [shape: f32[32,64], index: 1, kind: input, shape index: {}]
  %s2 = inlined_call_operand.vmem [shape: f32[1,64], index: 2, kind: input, shape index: {}]
  %s3 = inlined_call_operand.vmem [shape: f32[64,8], index: 3, kind: input, shape index: {}]
  %s4 = inlined_call_operand.vmem [shape: f32[1,8], index: 4, kind: input, shape index: {}]
  %s5 = inlined_call_operand.vmem [shape: f32[512,8], index: 5, kind: output, shape index: {}]
  %s6 = sld [smem:[#allocation0]]
  $region30: #{net_forward.1} parent=0
    _
  %s8 = ssub.s32 1, %s6
  %s9 = scalar_select 0, %s8, %s6
  // Predicated region
  $region2: #{net_forward.1} parent=0 // pred_check
    _
  $region3: #{net_forward.1} parent=0 // pred_check_branch
    %11 = sbr.rel (0) target = $region5
  $region4: #{net_forward.1} parent=0 // pred_region
    _
  $region5: #{net_forward.1} parent=0 // pred_fallthru
    _
  // Predicated region
  $region6: #{net_forward.1} parent=0 // pred_check
    _
  $region7: #{net_forward.1} parent=0 // pred_check_branch
    %13 = sbr.rel (0) target = $region9
  $region8: #{net_forward.1} parent=0 // pred_region
    _
  $region9: #{net_forward.1} parent=0 // pred_fallthru
    _
  // Predicated region
  $region10: #{net_forward.1} parent=0 // pred_check
    _
  $region11: #{net_forward.1} parent=0 // pred_check_branch
    %15 = sbr.rel (0) target = $region13
  $region12: #{net_forward.1} parent=0 // pred_region
    _
  $region13: #{net_forward.1} parent=0 // pred_fallthru
    _
  // Predicated region
  $region14: #{net_forward.1} parent=0 // pred_check
    _
  $region15: #{net_forward.1} parent=0 // pred_check_branch
    %17 = sbr.rel (0) target = $region17
  $region16: #{net_forward.1} parent=0 // pred_region
    _
  $region17: #{net_forward.1} parent=0 // pred_fallthru
    _
  // Predicated region
  $region18: #{net_forward.1} parent=0 // pred_check
    _
  $region19: #{net_forward.1} parent=0 // pred_check_branch
    %19 = sbr.rel (0) target = $region21
  $region20: #{net_forward.1} parent=0 // pred_region
    _
  $region21: #{net_forward.1} parent=0 // pred_fallthru
    _
  %v20 = vld [vmem:[%s0] sm:$0xff]
  %v21 = vld [vmem:[%s0 + $0x8] sm:$0xff]
  %v22 = vld [vmem:[%s0 + $0x10] sm:$0xff]
  %v23 = vld [vmem:[%s0 + $0x18] sm:$0xff]
  %v24 = vld [vmem:[%s0 + $0x20] sm:$0xff]
  %v25 = vld [vmem:[%s0 + $0x28] sm:$0xff]
  %v26 = vld [vmem:[%s0 + $0x30] sm:$0xff]
  %v27 = vld [vmem:[%s0 + $0x38] sm:$0xff]
  %v28 = vld [vmem:[%s0 + $0x40] sm:$0xff]
  %v29 = vld [vmem:[%s0 + $0x48] sm:$0xff]
  %v30 = vld [vmem:[%s0 + $0x50] sm:$0xff]
  %v31 = vld [vmem:[%s0 + $0x58] sm:$0xff]
  %v32 = vld [vmem:[%s0 + $0x60] sm:$0xff]
  %v33 = vld [vmem:[%s0 + $0x68] sm:$0xff]
  %v34 = vld [vmem:[%s0 + $0x70] sm:$0xff]
  %v35 = vld [vmem:[%s0 + $0x78] sm:$0xff]
  %v36 = vld [vmem:[%s0 + $0x80] sm:$0xff]
  %v37 = vld [vmem:[%s0 + $0x88] sm:$0xff]
  %v38 = vld [vmem:[%s0 + $0x90] sm:$0xff]
  %v39 = vld [vmem:[%s0 + $0x98] sm:$0xff]
  %v40 = vld [vmem:[%s0 + $0xa0] sm:$0xff]
  %v41 = vld [vmem:[%s0 + $0xa8] sm:$0xff]
  %v42 = vld [vmem:[%s0 + $0xb0] sm:$0xff]
  %v43 = vld [vmem:[%s0 + $0xb8] sm:$0xff]
  %v44 = vld [vmem:[%s0 + $0xc0] sm:$0xff]
  %v45 = vld [vmem:[%s0 + $0xc8] sm:$0xff]
  %v46 = vld [vmem:[%s0 + $0xd0] sm:$0xff]
  %v47 = vld [vmem:[%s0 + $0xd8] sm:$0xff]
  %v48 = vld [vmem:[%s0 + $0xe0] sm:$0xff]
  %v49 = vld [vmem:[%s0 + $0xe8] sm:$0xff]
  %v50 = vld [vmem:[%s0 + $0xf0] sm:$0xff]
  %v51 = vld [vmem:[%s0 + $0xf8] sm:$0xff]
  %v52 = vld [vmem:[%s0 + $0x100] sm:$0xff]
  %v53 = vld [vmem:[%s0 + $0x108] sm:$0xff]
  %v54 = vld [vmem:[%s0 + $0x110] sm:$0xff]
  %v55 = vld [vmem:[%s0 + $0x118] sm:$0xff]
  %v56 = vld [vmem:[%s0 + $0x120] sm:$0xff]
  %v57 = vld [vmem:[%s0 + $0x128] sm:$0xff]
  %v58 = vld [vmem:[%s0 + $0x130] sm:$0xff]
  %v59 = vld [vmem:[%s0 + $0x138] sm:$0xff]
  %v60 = vld [vmem:[%s0 + $0x140] sm:$0xff]
  %v61 = vld [vmem:[%s0 + $0x148] sm:$0xff]
  %v62 = vld [vmem:[%s0 + $0x150] sm:$0xff]
  %v63 = vld [vmem:[%s0 + $0x158] sm:$0xff]
  %v64 = vld [vmem:[%s0 + $0x160] sm:$0xff]
  %v65 = vld [vmem:[%s0 + $0x168] sm:$0xff]
  %v66 = vld [vmem:[%s0 + $0x170] sm:$0xff]
  %v67 = vld [vmem:[%s0 + $0x178] sm:$0xff]
  %v68 = vld [vmem:[%s0 + $0x180] sm:$0xff]
  %v69 = vld [vmem:[%s0 + $0x188] sm:$0xff]
  %v70 = vld [vmem:[%s0 + $0x190] sm:$0xff]
  %v71 = vld [vmem:[%s0 + $0x198] sm:$0xff]
  %v72 = vld [vmem:[%s0 + $0x1a0] sm:$0xff]
  %v73 = vld [vmem:[%s0 + $0x1a8] sm:$0xff]
  %v74 = vld [vmem:[%s0 + $0x1b0] sm:$0xff]
  %v75 = vld [vmem:[%s0 + $0x1b8] sm:$0xff]
  %v76 = vld [vmem:[%s0 + $0x1c0] sm:$0xff]
  %v77 = vld [vmem:[%s0 + $0x1c8] sm:$0xff]
  %v78 = vld [vmem:[%s0 + $0x1d0] sm:$0xff]
  %v79 = vld [vmem:[%s0 + $0x1d8] sm:$0xff]
  %v80 = vld [vmem:[%s0 + $0x1e0] sm:$0xff]
  %v81 = vld [vmem:[%s0 + $0x1e8] sm:$0xff]
  %v82 = vld [vmem:[%s0 + $0x1f0] sm:$0xff]
  %v83 = vld [vmem:[%s0 + $0x1f8] sm:$0xff]
  %v84 = vld [vmem:[%s1] sm:$0xff]
  %v85 = vld [vmem:[%s1 + $0x8] sm:$0xff]
  %v86 = vld [vmem:[%s1 + $0x10] sm:$0xff]
  %v87 = vld [vmem:[%s1 + $0x18] sm:$0xff]
  %v88 = vld [vmem:[%s2] sm:$0x1]
  %v90 = vperm.slane %v88, 0
  %vm92 = vcmask 261120
  %v94 = vsel %vm92, %v20, 0
  %v97 = vsel %vm92, %v21, 0
  %v100 = vsel %vm92, %v22, 0
  %v103 = vsel %vm92, %v23, 0
  %v106 = vsel %vm92, %v24, 0
  %v109 = vsel %vm92, %v25, 0
  %v112 = vsel %vm92, %v26, 0
  %v115 = vsel %vm92, %v27, 0
  %v118 = vsel %vm92, %v28, 0
  %v121 = vsel %vm92, %v29, 0
  %v124 = vsel %vm92, %v30, 0
  %v127 = vsel %vm92, %v31, 0
  %v130 = vsel %vm92, %v32, 0
  %v133 = vsel %vm92, %v33, 0
  %v136 = vsel %vm92, %v34, 0
  %v139 = vsel %vm92, %v35, 0
  %v142 = vsel %vm92, %v36, 0
  %v145 = vsel %vm92, %v37, 0
  %v148 = vsel %vm92, %v38, 0
  %v151 = vsel %vm92, %v39, 0
  %v154 = vsel %vm92, %v40, 0
  %v157 = vsel %vm92, %v41, 0
  %v160 = vsel %vm92, %v42, 0
  %v163 = vsel %vm92, %v43, 0
  %v166 = vsel %vm92, %v44, 0
  %v169 = vsel %vm92, %v45, 0
  %v172 = vsel %vm92, %v46, 0
  %v175 = vsel %vm92, %v47, 0
  %v178 = vsel %vm92, %v48, 0
  %v181 = vsel %vm92, %v49, 0
  %v184 = vsel %vm92, %v50, 0
  %v187 = vsel %vm92, %v51, 0
  %v190 = vsel %vm92, %v52, 0
  %v193 = vsel %vm92, %v53, 0
  %v196 = vsel %vm92, %v54, 0
  %v199 = vsel %vm92, %v55, 0
  %v202 = vsel %vm92, %v56, 0
  %v205 = vsel %vm92, %v57, 0
  %v208 = vsel %vm92, %v58, 0
  %v211 = vsel %vm92, %v59, 0
  %v214 = vsel %vm92, %v60, 0
  %v217 = vsel %vm92, %v61, 0
  %v220 = vsel %vm92, %v62, 0
  %v223 = vsel %vm92, %v63, 0
  %v226 = vsel %vm92, %v64, 0
  %v229 = vsel %vm92, %v65, 0
  %v232 = vsel %vm92, %v66, 0
  %v235 = vsel %vm92, %v67, 0
  %v238 = vsel %vm92, %v68, 0
  %v241 = vsel %vm92, %v69, 0
  %v244 = vsel %vm92, %v70, 0
  %v247 = vsel %vm92, %v71, 0
  %v250 = vsel %vm92, %v72, 0
  %v253 = vsel %vm92, %v73, 0
  %v256 = vsel %vm92, %v74, 0
  %v259 = vsel %vm92, %v75, 0
  %v262 = vsel %vm92, %v76, 0
  %v265 = vsel %vm92, %v77, 0
  %v268 = vsel %vm92, %v78, 0
  %v271 = vsel %vm92, %v79, 0
  %v274 = vsel %vm92, %v80, 0
  %v277 = vsel %vm92, %v81, 0
  %v280 = vsel %vm92, %v82, 0
  %v283 = vsel %vm92, %v83, 0
  %285 = vmatpush.msra.mxu0 0.0
  %286 = vmatpush.msra.mxu0 0.0
  %287 = vmatpush.msra.mxu0 0.0
  %288 = vmatpush.msra.mxu0 0.0
  %289 = vmatpush.msra.mxu0 0.0
  %290 = vmatpush.msra.mxu0 0.0
  %291 = vmatpush.msra.mxu0 0.0
  %292 = vmatpush.msra.mxu0 0.0
  %293 = vmatpush.msra.mxu0 0.0
  %294 = vmatpush.msra.mxu0 0.0
  %295 = vmatpush.msra.mxu0 0.0
  %296 = vmatpush.msra.mxu0 0.0
  %297 = vmatpush.msra.mxu0 %v87
  %298 = vmatpush.msra.mxu0 %v86
  %299 = vmatpush.msra.mxu0 %v85
  %300 = vmatpush.msra.mxu0 %v84
  %301 = vmatmul.f32.gmra.mxu0 %v94
  %v302 = vpop.f32.mrf.mxu0
  %v303 = vadd.f32 %v90, %v302
  %304 = vmatmul.f32.gmra.mxu0 %v97
  %v305 = vpop.f32.mrf.mxu0
  %v306 = vadd.f32 %v90, %v305
  %307 = vmatmul.f32.gmra.mxu0 %v100
  %v308 = vpop.f32.mrf.mxu0
  %v309 = vadd.f32 %v90, %v308
  %310 = vmatmul.f32.gmra.mxu0 %v103
  %v311 = vpop.f32.mrf.mxu0
  %v312 = vadd.f32 %v90, %v311
  %313 = vmatmul.f32.gmra.mxu0 %v106
  %v314 = vpop.f32.mrf.mxu0
  %v315 = vadd.f32 %v90, %v314
  %316 = vmatmul.f32.gmra.mxu0 %v109
  %v317 = vpop.f32.mrf.mxu0
  %v318 = vadd.f32 %v90, %v317
  %319 = vmatmul.f32.gmra.mxu0 %v112
  %v320 = vpop.f32.mrf.mxu0
  %v321 = vadd.f32 %v90, %v320
  %322 = vmatmul.f32.gmra.mxu0 %v115
  %v323 = vpop.f32.mrf.mxu0
  %v324 = vadd.f32 %v90, %v323
  %325 = vmatmul.f32.gmra.mxu0 %v118
  %v326 = vpop.f32.mrf.mxu0
  %v327 = vadd.f32 %v90, %v326
  %328 = vmatmul.f32.gmra.mxu0 %v121
  %v329 = vpop.f32.mrf.mxu0
  %v330 = vadd.f32 %v90, %v329
  %331 = vmatmul.f32.gmra.mxu0 %v124
  %v332 = vpop.f32.mrf.mxu0
  %v333 = vadd.f32 %v90, %v332
  %334 = vmatmul.f32.gmra.mxu0 %v127
  %v335 = vpop.f32.mrf.mxu0
  %v336 = vadd.f32 %v90, %v335
  %337 = vmatmul.f32.gmra.mxu0 %v130
  %v338 = vpop.f32.mrf.mxu0
  %v339 = vadd.f32 %v90, %v338
  %340 = vmatmul.f32.gmra.mxu0 %v133
  %v341 = vpop.f32.mrf.mxu0
  %v342 = vadd.f32 %v90, %v341
  %343 = vmatmul.f32.gmra.mxu0 %v136
  %v344 = vpop.f32.mrf.mxu0
  %v345 = vadd.f32 %v90, %v344
  %346 = vmatmul.f32.gmra.mxu0 %v139
  %v347 = vpop.f32.mrf.mxu0
  %v348 = vadd.f32 %v90, %v347
  %349 = vmatmul.f32.gmra.mxu0 %v142
  %v350 = vpop.f32.mrf.mxu0
  %v351 = vadd.f32 %v90, %v350
  %352 = vmatmul.f32.gmra.mxu0 %v145
  %v353 = vpop.f32.mrf.mxu0
  %v354 = vadd.f32 %v90, %v353
  %355 = vmatmul.f32.gmra.mxu0 %v148
  %v356 = vpop.f32.mrf.mxu0
  %v357 = vadd.f32 %v90, %v356
  %358 = vmatmul.f32.gmra.mxu0 %v151
  %v359 = vpop.f32.mrf.mxu0
  %v360 = vadd.f32 %v90, %v359
  %361 = vmatmul.f32.gmra.mxu0 %v154
  %v362 = vpop.f32.mrf.mxu0
  %v363 = vadd.f32 %v90, %v362
  %364 = vmatmul.f32.gmra.mxu0 %v157
  %v365 = vpop.f32.mrf.mxu0
  %v366 = vadd.f32 %v90, %v365
  %367 = vmatmul.f32.gmra.mxu0 %v160
  %v368 = vpop.f32.mrf.mxu0
  %v369 = vadd.f32 %v90, %v368
  %370 = vmatmul.f32.gmra.mxu0 %v163
  %v371 = vpop.f32.mrf.mxu0
  %v372 = vadd.f32 %v90, %v371
  %373 = vmatmul.f32.gmra.mxu0 %v166
  %v374 = vpop.f32.mrf.mxu0
  %v375 = vadd.f32 %v90, %v374
  %376 = vmatmul.f32.gmra.mxu0 %v169
  %v377 = vpop.f32.mrf.mxu0
  %v378 = vadd.f32 %v90, %v377
  %379 = vmatmul.f32.gmra.mxu0 %v172
  %v380 = vpop.f32.mrf.mxu0
  %v381 = vadd.f32 %v90, %v380
  %382 = vmatmul.f32.gmra.mxu0 %v175
  %v383 = vpop.f32.mrf.mxu0
  %v384 = vadd.f32 %v90, %v383
  %385 = vmatmul.f32.gmra.mxu0 %v178
  %v386 = vpop.f32.mrf.mxu0
  %v387 = vadd.f32 %v90, %v386
  %388 = vmatmul.f32.gmra.mxu0 %v181
  %v389 = vpop.f32.mrf.mxu0
  %v390 = vadd.f32 %v90, %v389
  %391 = vmatmul.f32.gmra.mxu0 %v184
  %v392 = vpop.f32.mrf.mxu0
  %v393 = vadd.f32 %v90, %v392
  %394 = vmatmul.f32.gmra.mxu0 %v187
  %v395 = vpop.f32.mrf.mxu0
  %v396 = vadd.f32 %v90, %v395
  %397 = vmatmul.f32.gmra.mxu0 %v190
  %v398 = vpop.f32.mrf.mxu0
  %v399 = vadd.f32 %v90, %v398
  %400 = vmatmul.f32.gmra.mxu0 %v193
  %v401 = vpop.f32.mrf.mxu0
  %v402 = vadd.f32 %v90, %v401
  %403 = vmatmul.f32.gmra.mxu0 %v196
  %v404 = vpop.f32.mrf.mxu0
  %v405 = vadd.f32 %v90, %v404
  %406 = vmatmul.f32.gmra.mxu0 %v199
  %v407 = vpop.f32.mrf.mxu0
  %v408 = vadd.f32 %v90, %v407
  %409 = vmatmul.f32.gmra.mxu0 %v202
  %v410 = vpop.f32.mrf.mxu0
  %v411 = vadd.f32 %v90, %v410
  %412 = vmatmul.f32.gmra.mxu0 %v205
  %v413 = vpop.f32.mrf.mxu0
  %v414 = vadd.f32 %v90, %v413
  %415 = vmatmul.f32.gmra.mxu0 %v208
  %v416 = vpop.f32.mrf.mxu0
  %v417 = vadd.f32 %v90, %v416
  %418 = vmatmul.f32.gmra.mxu0 %v211
  %v419 = vpop.f32.mrf.mxu0
  %v420 = vadd.f32 %v90, %v419
  %421 = vmatmul.f32.gmra.mxu0 %v214
  %v422 = vpop.f32.mrf.mxu0
  %v423 = vadd.f32 %v90, %v422
  %424 = vmatmul.f32.gmra.mxu0 %v217
  %v425 = vpop.f32.mrf.mxu0
  %v426 = vadd.f32 %v90, %v425
  %427 = vmatmul.f32.gmra.mxu0 %v220
  %v428 = vpop.f32.mrf.mxu0
  %v429 = vadd.f32 %v90, %v428
  %430 = vmatmul.f32.gmra.mxu0 %v223
  %v431 = vpop.f32.mrf.mxu0
  %v432 = vadd.f32 %v90, %v431
  %433 = vmatmul.f32.gmra.mxu0 %v226
  %v434 = vpop.f32.mrf.mxu0
  %v435 = vadd.f32 %v90, %v434
  %436 = vmatmul.f32.gmra.mxu0 %v229
  %v437 = vpop.f32.mrf.mxu0
  %v438 = vadd.f32 %v90, %v437
  %439 = vmatmul.f32.gmra.mxu0 %v232
  %v440 = vpop.f32.mrf.mxu0
  %v441 = vadd.f32 %v90, %v440
  %442 = vmatmul.f32.gmra.mxu0 %v235
  %v443 = vpop.f32.mrf.mxu0
  %v444 = vadd.f32 %v90, %v443
  %445 = vmatmul.f32.gmra.mxu0 %v238
  %v446 = vpop.f32.mrf.mxu0
  %v447 = vadd.f32 %v90, %v446
  %448 = vmatmul.f32.gmra.mxu0 %v241
  %v449 = vpop.f32.mrf.mxu0
  %v450 = vadd.f32 %v90, %v449
  %451 = vmatmul.f32.gmra.mxu0 %v244
  %v452 = vpop.f32.mrf.mxu0
  %v453 = vadd.f32 %v90, %v452
  %454 = vmatmul.f32.gmra.mxu0 %v247
  %v455 = vpop.f32.mrf.mxu0
  %v456 = vadd.f32 %v90, %v455
  %457 = vmatmul.f32.gmra.mxu0 %v250
  %v458 = vpop.f32.mrf.mxu0
  %v459 = vadd.f32 %v90, %v458
  %460 = vmatmul.f32.gmra.mxu0 %v253
  %v461 = vpop.f32.mrf.mxu0
  %v462 = vadd.f32 %v90, %v461
  %463 = vmatmul.f32.gmra.mxu0 %v256
  %v464 = vpop.f32.mrf.mxu0
  %v465 = vadd.f32 %v90, %v464
  %466 = vmatmul.f32.gmra.mxu0 %v259
  %v467 = vpop.f32.mrf.mxu0
  %v468 = vadd.f32 %v90, %v467
  %469 = vmatmul.f32.gmra.mxu0 %v262
  %v470 = vpop.f32.mrf.mxu0
  %v471 = vadd.f32 %v90, %v470
  %472 = vmatmul.f32.gmra.mxu0 %v265
  %v473 = vpop.f32.mrf.mxu0
  %v474 = vadd.f32 %v90, %v473
  %475 = vmatmul.f32.gmra.mxu0 %v268
  %v476 = vpop.f32.mrf.mxu0
  %v477 = vadd.f32 %v90, %v476
  %478 = vmatmul.f32.gmra.mxu0 %v271
  %v479 = vpop.f32.mrf.mxu0
  %v480 = vadd.f32 %v90, %v479
  %481 = vmatmul.f32.gmra.mxu0 %v274
  %v482 = vpop.f32.mrf.mxu0
  %v483 = vadd.f32 %v90, %v482
  %484 = vmatmul.f32.gmra.mxu0 %v277
  %v485 = vpop.f32.mrf.mxu0
  %v486 = vadd.f32 %v90, %v485
  %487 = vmatmul.f32.gmra.mxu0 %v280
  %v488 = vpop.f32.mrf.mxu0
  %v489 = vadd.f32 %v90, %v488
  %490 = vmatmul.f32.gmra.mxu0 %v283
  %v491 = vpop.f32.mrf.mxu0
  %v492 = vadd.f32 %v90, %v491
  %493 = vdwg.mxu0
  %v494 = vxor.u32 %v303, 2147483648
  %v495 = vxor.u32 %v306, 2147483648
  %v496 = vxor.u32 %v309, 2147483648
  %v497 = vxor.u32 %v312, 2147483648
  %v498 = vxor.u32 %v315, 2147483648
  %v499 = vxor.u32 %v318, 2147483648
  %v500 = vxor.u32 %v321, 2147483648
  %v501 = vxor.u32 %v324, 2147483648
  %v502 = vxor.u32 %v327, 2147483648
  %v503 = vxor.u32 %v330, 2147483648
  %v504 = vxor.u32 %v333, 2147483648
  %v505 = vxor.u32 %v336, 2147483648
  %v506 = vxor.u32 %v339, 2147483648
  %v507 = vxor.u32 %v342, 2147483648
  %v508 = vxor.u32 %v345, 2147483648
  %v509 = vxor.u32 %v348, 2147483648
  %v510 = vxor.u32 %v351, 2147483648
  %v511 = vxor.u32 %v354, 2147483648
  %v512 = vxor.u32 %v357, 2147483648
  %v513 = vxor.u32 %v360, 2147483648
  %v514 = vxor.u32 %v363, 2147483648
  %v515 = vxor.u32 %v366, 2147483648
  %v516 = vxor.u32 %v369, 2147483648
  %v517 = vxor.u32 %v372, 2147483648
  %v518 = vxor.u32 %v375, 2147483648
  %v519 = vxor.u32 %v378, 2147483648
  %v520 = vxor.u32 %v381, 2147483648
  %v521 = vxor.u32 %v384, 2147483648
  %v522 = vxor.u32 %v387, 2147483648
  %v523 = vxor.u32 %v390, 2147483648
  %v524 = vxor.u32 %v393, 2147483648
  %v525 = vxor.u32 %v396, 2147483648
  %v526 = vxor.u32 %v399, 2147483648
  %v527 = vxor.u32 %v402, 2147483648
  %v528 = vxor.u32 %v405, 2147483648
  %v529 = vxor.u32 %v408, 2147483648
  %v530 = vxor.u32 %v411, 2147483648
  %v531 = vxor.u32 %v414, 2147483648
  %v532 = vxor.u32 %v417, 2147483648
  %v533 = vxor.u32 %v420, 2147483648
  %v534 = vxor.u32 %v423, 2147483648
  %v535 = vxor.u32 %v426, 2147483648
  %v536 = vxor.u32 %v429, 2147483648
  %v537 = vxor.u32 %v432, 2147483648
  %v538 = vxor.u32 %v435, 2147483648
  %v539 = vxor.u32 %v438, 2147483648
  %v540 = vxor.u32 %v441, 2147483648
  %v541 = vxor.u32 %v444, 2147483648
  %v542 = vxor.u32 %v447, 2147483648
  %v543 = vxor.u32 %v450, 2147483648
  %v544 = vxor.u32 %v453, 2147483648
  %v545 = vxor.u32 %v456, 2147483648
  %v546 = vxor.u32 %v459, 2147483648
  %v547 = vxor.u32 %v462, 2147483648
  %v548 = vxor.u32 %v465, 2147483648
  %v549 = vxor.u32 %v468, 2147483648
  %v550 = vxor.u32 %v471, 2147483648
  %v551 = vxor.u32 %v474, 2147483648
  %v552 = vxor.u32 %v477, 2147483648
  %v553 = vxor.u32 %v480, 2147483648
  %v554 = vxor.u32 %v483, 2147483648
  %v555 = vxor.u32 %v486, 2147483648
  %v556 = vxor.u32 %v489, 2147483648
  %v557 = vxor.u32 %v492, 2147483648
  %v558 = vmul.f32 %v494, 1.442695
  %v559 = vpow.pop %v558
  %v560 = vmul.f32 %v495, 1.442695
  %v561 = vpow.pop %v560
  %v562 = vmul.f32 %v496, 1.442695
  %v563 = vpow.pop %v562
  %v564 = vmul.f32 %v497, 1.442695
  %v565 = vpow.pop %v564
  %v566 = vmul.f32 %v498, 1.442695
  %v567 = vpow.pop %v566
  %v568 = vmul.f32 %v499, 1.442695
  %v569 = vpow.pop %v568
  %v570 = vmul.f32 %v500, 1.442695
  %v571 = vpow.pop %v570
  %v572 = vmul.f32 %v501, 1.442695
  %v573 = vpow.pop %v572
  %v574 = vmul.f32 %v502, 1.442695
  %v575 = vpow.pop %v574
  %v576 = vmul.f32 %v503, 1.442695
  %v577 = vpow.pop %v576
  %v578 = vmul.f32 %v504, 1.442695
  %v579 = vpow.pop %v578
  %v580 = vmul.f32 %v505, 1.442695
  %v581 = vpow.pop %v580
  %v582 = vmul.f32 %v506, 1.442695
  %v583 = vpow.pop %v582
  %v584 = vmul.f32 %v507, 1.442695
  %v585 = vpow.pop %v584
  %v586 = vmul.f32 %v508, 1.442695
  %v587 = vpow.pop %v586
  %v588 = vmul.f32 %v509, 1.442695
  %v589 = vpow.pop %v588
  %v590 = vmul.f32 %v510, 1.442695
  %v591 = vpow.pop %v590
  %v592 = vmul.f32 %v511, 1.442695
  %v593 = vpow.pop %v592
  %v594 = vmul.f32 %v512, 1.442695
  %v595 = vpow.pop %v594
  %v596 = vmul.f32 %v513, 1.442695
  %v597 = vpow.pop %v596
  %v598 = vmul.f32 %v514, 1.442695
  %v599 = vpow.pop %v598
  %v600 = vmul.f32 %v515, 1.442695
  %v601 = vpow.pop %v600
  %v602 = vmul.f32 %v516, 1.442695
  %v603 = vpow.pop %v602
  %v604 = vmul.f32 %v517, 1.442695
  %v605 = vpow.pop %v604
  %v606 = vmul.f32 %v518, 1.442695
  %v607 = vpow.pop %v606
  %v608 = vmul.f32 %v519, 1.442695
  %v609 = vpow.pop %v608
  %v610 = vmul.f32 %v520, 1.442695
  %v611 = vpow.pop %v610
  %v612 = vmul.f32 %v521, 1.442695
  %v613 = vpow.pop %v612
  %v614 = vmul.f32 %v522, 1.442695
  %v615 = vpow.pop %v614
  %v616 = vmul.f32 %v523, 1.442695
  %v617 = vpow.pop %v616
  %v618 = vmul.f32 %v524, 1.442695
  %v619 = vpow.pop %v618
  %v620 = vmul.f32 %v525, 1.442695
  %v621 = vpow.pop %v620
  %v622 = vmul.f32 %v526, 1.442695
  %v623 = vpow.pop %v622
  %v624 = vmul.f32 %v527, 1.442695
  %v625 = vpow.pop %v624
  %v626 = vmul.f32 %v528, 1.442695
  %v627 = vpow.pop %v626
  %v628 = vmul.f32 %v529, 1.442695
  %v629 = vpow.pop %v628
  %v630 = vmul.f32 %v530, 1.442695
  %v631 = vpow.pop %v630
  %v632 = vmul.f32 %v531, 1.442695
  %v633 = vpow.pop %v632
  %v634 = vmul.f32 %v532, 1.442695
  %v635 = vpow.pop %v634
  %v636 = vmul.f32 %v533, 1.442695
  %v637 = vpow.pop %v636
  %v638 = vmul.f32 %v534, 1.442695
  %v639 = vpow.pop %v638
  %v640 = vmul.f32 %v535, 1.442695
  %v641 = vpow.pop %v640
  %v642 = vmul.f32 %v536, 1.442695
  %v643 = vpow.pop %v642
  %v644 = vmul.f32 %v537, 1.442695
  %v645 = vpow.pop %v644
  %v646 = vmul.f32 %v538, 1.442695
  %v647 = vpow.pop %v646
  %v648 = vmul.f32 %v539, 1.442695
  %v649 = vpow.pop %v648
  %v650 = vmul.f32 %v540, 1.442695
  %v651 = vpow.pop %v650
  %v652 = vmul.f32 %v541, 1.442695
  %v653 = vpow.pop %v652
  %v654 = vmul.f32 %v542, 1.442695
  %v655 = vpow.pop %v654
  %v656 = vmul.f32 %v543, 1.442695
  %v657 = vpow.pop %v656
  %v658 = vmul.f32 %v544, 1.442695
  %v659 = vpow.pop %v658
  %v660 = vmul.f32 %v545, 1.442695
  %v661 = vpow.pop %v660
  %v662 = vmul.f32 %v546, 1.442695
  %v663 = vpow.pop %v662
  %v664 = vmul.f32 %v547, 1.442695
  %v665 = vpow.pop %v664
  %v666 = vmul.f32 %v548, 1.442695
  %v667 = vpow.pop %v666
  %v668 = vmul.f32 %v549, 1.442695
  %v669 = vpow.pop %v668
  %v670 = vmul.f32 %v550, 1.442695
  %v671 = vpow.pop %v670
  %v672 = vmul.f32 %v551, 1.442695
  %v673 = vpow.pop %v672
  %v674 = vmul.f32 %v552, 1.442695
  %v675 = vpow.pop %v674
  %v676 = vmul.f32 %v553, 1.442695
  %v677 = vpow.pop %v676
  %v678 = vmul.f32 %v554, 1.442695
  %v679 = vpow.pop %v678
  %v680 = vmul.f32 %v555, 1.442695
  %v681 = vpow.pop %v680
  %v682 = vmul.f32 %v556, 1.442695
  %v683 = vpow.pop %v682
  %v684 = vmul.f32 %v557, 1.442695
  %v685 = vpow.pop %v684
  %v686 = vadd.f32 %v559, 1.0
  %v687 = vadd.f32 %v561, 1.0
  %v688 = vadd.f32 %v563, 1.0
  %v689 = vadd.f32 %v565, 1.0
  %v690 = vadd.f32 %v567, 1.0
  %v691 = vadd.f32 %v569, 1.0
  %v692 = vadd.f32 %v571, 1.0
  %v693 = vadd.f32 %v573, 1.0
  %v694 = vadd.f32 %v575, 1.0
  %v695 = vadd.f32 %v577, 1.0
  %v696 = vadd.f32 %v579, 1.0
  %v697 = vadd.f32 %v581, 1.0
  %v698 = vadd.f32 %v583, 1.0
  %v699 = vadd.f32 %v585, 1.0
  %v700 = vadd.f32 %v587, 1.0
  %v701 = vadd.f32 %v589, 1.0
  %v702 = vadd.f32 %v591, 1.0
  %v703 = vadd.f32 %v593, 1.0
  %v704 = vadd.f32 %v595, 1.0
  %v705 = vadd.f32 %v597, 1.0
  %v706 = vadd.f32 %v599, 1.0
  %v707 = vadd.f32 %v601, 1.0
  %v708 = vadd.f32 %v603, 1.0
  %v709 = vadd.f32 %v605, 1.0
  %v710 = vadd.f32 %v607, 1.0
  %v711 = vadd.f32 %v609, 1.0
  %v712 = vadd.f32 %v611, 1.0
  %v713 = vadd.f32 %v613, 1.0
  %v714 = vadd.f32 %v615, 1.0
  %v715 = vadd.f32 %v617, 1.0
  %v716 = vadd.f32 %v619, 1.0
  %v717 = vadd.f32 %v621, 1.0
  %v718 = vadd.f32 %v623, 1.0
  %v719 = vadd.f32 %v625, 1.0
  %v720 = vadd.f32 %v627, 1.0
  %v721 = vadd.f32 %v629, 1.0
  %v722 = vadd.f32 %v631, 1.0
  %v723 = vadd.f32 %v633, 1.0
  %v724 = vadd.f32 %v635, 1.0
  %v725 = vadd.f32 %v637, 1.0
  %v726 = vadd.f32 %v639, 1.0
  %v727 = vadd.f32 %v641, 1.0
  %v728 = vadd.f32 %v643, 1.0
  %v729 = vadd.f32 %v645, 1.0
  %v730 = vadd.f32 %v647, 1.0
  %v731 = vadd.f32 %v649, 1.0
  %v732 = vadd.f32 %v651, 1.0
  %v733 = vadd.f32 %v653, 1.0
  %v734 = vadd.f32 %v655, 1.0
  %v735 = vadd.f32 %v657, 1.0
  %v736 = vadd.f32 %v659, 1.0
  %v737 = vadd.f32 %v661, 1.0
  %v738 = vadd.f32 %v663, 1.0
  %v739 = vadd.f32 %v665, 1.0
  %v740 = vadd.f32 %v667, 1.0
  %v741 = vadd.f32 %v669, 1.0
  %v742 = vadd.f32 %v671, 1.0
  %v743 = vadd.f32 %v673, 1.0
  %v744 = vadd.f32 %v675, 1.0
  %v745 = vadd.f32 %v677, 1.0
  %v746 = vadd.f32 %v679, 1.0
  %v747 = vadd.f32 %v681, 1.0
  %v748 = vadd.f32 %v683, 1.0
  %v749 = vadd.f32 %v685, 1.0
  %v750 = vrcp.pop %v686
  %v751 = vmul.f32 %v686, %v750
  %v752 = vsub.f32 1.0, %v751
  %v753 = vmul.f32 %v750, %v752
  %v754 = vadd.f32 %v750, %v753
  %vm755 = vweird.f32 %v686
  %vm756 = vweird.f32 %v750
  %vm757 = vmor %vm755, %vm756
  %v758 = vsel %vm757, %v750, %v754
  %v759 = vand.u32 2147483647, %v686
  %vm760 = vcmp.eq.f32.partialorder %v759, 8.507059e+37
  %v761 = vand.u32 %v686, 2147483648
  %v762 = vor.u32 1.1754944e-38, %v761
  %v763 = vsel %vm760, %v762, %v758
  %v764 = vmul.f32 1.0, %v763
  %v765 = vrcp.pop %v687
  %v766 = vmul.f32 %v687, %v765
  %v767 = vsub.f32 1.0, %v766
  %v768 = vmul.f32 %v765, %v767
  %v769 = vadd.f32 %v765, %v768
  %vm770 = vweird.f32 %v687
  %vm771 = vweird.f32 %v765
  %vm772 = vmor %vm770, %vm771
  %v773 = vsel %vm772, %v765, %v769
  %v774 = vand.u32 2147483647, %v687
  %vm775 = vcmp.eq.f32.partialorder %v774, 8.507059e+37
  %v776 = vand.u32 %v687, 2147483648
  %v777 = vor.u32 1.1754944e-38, %v776
  %v778 = vsel %vm775, %v777, %v773
  %v779 = vmul.f32 1.0, %v778
  %v780 = vrcp.pop %v688
  %v781 = vmul.f32 %v688, %v780
  %v782 = vsub.f32 1.0, %v781
  %v783 = vmul.f32 %v780, %v782
  %v784 = vadd.f32 %v780, %v783
  %vm785 = vweird.f32 %v688
  %vm786 = vweird.f32 %v780
  %vm787 = vmor %vm785, %vm786
  %v788 = vsel %vm787, %v780, %v784
  %v789 = vand.u32 2147483647, %v688
  %vm790 = vcmp.eq.f32.partialorder %v789, 8.507059e+37
  %v791 = vand.u32 %v688, 2147483648
  %v792 = vor.u32 1.1754944e-38, %v791
  %v793 = vsel %vm790, %v792, %v788
  %v794 = vmul.f32 1.0, %v793
  %v795 = vrcp.pop %v689
  %v796 = vmul.f32 %v689, %v795
  %v797 = vsub.f32 1.0, %v796
  %v798 = vmul.f32 %v795, %v797
  %v799 = vadd.f32 %v795, %v798
  %vm800 = vweird.f32 %v689
  %vm801 = vweird.f32 %v795
  %vm802 = vmor %vm800, %vm801
  %v803 = vsel %vm802, %v795, %v799
  %v804 = vand.u32 2147483647, %v689
  %vm805 = vcmp.eq.f32.partialorder %v804, 8.507059e+37
  %v806 = vand.u32 %v689, 2147483648
  %v807 = vor.u32 1.1754944e-38, %v806
  %v808 = vsel %vm805, %v807, %v803
  %v809 = vmul.f32 1.0, %v808
  %v810 = vrcp.pop %v690
  %v811 = vmul.f32 %v690, %v810
  %v812 = vsub.f32 1.0, %v811
  %v813 = vmul.f32 %v810, %v812
  %v814 = vadd.f32 %v810, %v813
  %vm815 = vweird.f32 %v690
  %vm816 = vweird.f32 %v810
  %vm817 = vmor %vm815, %vm816
  %v818 = vsel %vm817, %v810, %v814
  %v819 = vand.u32 2147483647, %v690
  %vm820 = vcmp.eq.f32.partialorder %v819, 8.507059e+37
  %v821 = vand.u32 %v690, 2147483648
  %v822 = vor.u32 1.1754944e-38, %v821
  %v823 = vsel %vm820, %v822, %v818
  %v824 = vmul.f32 1.0, %v823
  %v825 = vrcp.pop %v691
  %v826 = vmul.f32 %v691, %v825
  %v827 = vsub.f32 1.0, %v826
  %v828 = vmul.f32 %v825, %v827
  %v829 = vadd.f32 %v825, %v828
  %vm830 = vweird.f32 %v691
  %vm831 = vweird.f32 %v825
  %vm832 = vmor %vm830, %vm831
  %v833 = vsel %vm832, %v825, %v829
  %v834 = vand.u32 2147483647, %v691
  %vm835 = vcmp.eq.f32.partialorder %v834, 8.507059e+37
  %v836 = vand.u32 %v691, 2147483648
  %v837 = vor.u32 1.1754944e-38, %v836
  %v838 = vsel %vm835, %v837, %v833
  %v839 = vmul.f32 1.0, %v838
  %v840 = vrcp.pop %v692
  %v841 = vmul.f32 %v692, %v840
  %v842 = vsub.f32 1.0, %v841
  %v843 = vmul.f32 %v840, %v842
  %v844 = vadd.f32 %v840, %v843
  %vm845 = vweird.f32 %v692
  %vm846 = vweird.f32 %v840
  %vm847 = vmor %vm845, %vm846
  %v848 = vsel %vm847, %v840, %v844
  %v849 = vand.u32 2147483647, %v692
  %vm850 = vcmp.eq.f32.partialorder %v849, 8.507059e+37
  %v851 = vand.u32 %v692, 2147483648
  %v852 = vor.u32 1.1754944e-38, %v851
  %v853 = vsel %vm850, %v852, %v848
  %v854 = vmul.f32 1.0, %v853
  %v855 = vrcp.pop %v693
  %v856 = vmul.f32 %v693, %v855
  %v857 = vsub.f32 1.0, %v856
  %v858 = vmul.f32 %v855, %v857
  %v859 = vadd.f32 %v855, %v858
  %vm860 = vweird.f32 %v693
  %vm861 = vweird.f32 %v855
  %vm862 = vmor %vm860, %vm861
  %v863 = vsel %vm862, %v855, %v859
  %v864 = vand.u32 2147483647, %v693
  %vm865 = vcmp.eq.f32.partialorder %v864, 8.507059e+37
  %v866 = vand.u32 %v693, 2147483648
  %v867 = vor.u32 1.1754944e-38, %v866
  %v868 = vsel %vm865, %v867, %v863
  %v869 = vmul.f32 1.0, %v868
  %v870 = vrcp.pop %v694
  %v871 = vmul.f32 %v694, %v870
  %v872 = vsub.f32 1.0, %v871
  %v873 = vmul.f32 %v870, %v872
  %v874 = vadd.f32 %v870, %v873
  %vm875 = vweird.f32 %v694
  %vm876 = vweird.f32 %v870
  %vm877 = vmor %vm875, %vm876
  %v878 = vsel %vm877, %v870, %v874
  %v879 = vand.u32 2147483647, %v694
  %vm880 = vcmp.eq.f32.partialorder %v879, 8.507059e+37
  %v881 = vand.u32 %v694, 2147483648
  %v882 = vor.u32 1.1754944e-38, %v881
  %v883 = vsel %vm880, %v882, %v878
  %v884 = vmul.f32 1.0, %v883
  %v885 = vrcp.pop %v695
  %v886 = vmul.f32 %v695, %v885
  %v887 = vsub.f32 1.0, %v886
  %v888 = vmul.f32 %v885, %v887
  %v889 = vadd.f32 %v885, %v888
  %vm890 = vweird.f32 %v695
  %vm891 = vweird.f32 %v885
  %vm892 = vmor %vm890, %vm891
  %v893 = vsel %vm892, %v885, %v889
  %v894 = vand.u32 2147483647, %v695
  %vm895 = vcmp.eq.f32.partialorder %v894, 8.507059e+37
  %v896 = vand.u32 %v695, 2147483648
  %v897 = vor.u32 1.1754944e-38, %v896
  %v898 = vsel %vm895, %v897, %v893
  %v899 = vmul.f32 1.0, %v898
  %v900 = vrcp.pop %v696
  %v901 = vmul.f32 %v696, %v900
  %v902 = vsub.f32 1.0, %v901
  %v903 = vmul.f32 %v900, %v902
  %v904 = vadd.f32 %v900, %v903
  %vm905 = vweird.f32 %v696
  %vm906 = vweird.f32 %v900
  %vm907 = vmor %vm905, %vm906
  %v908 = vsel %vm907, %v900, %v904
  %v909 = vand.u32 2147483647, %v696
  %vm910 = vcmp.eq.f32.partialorder %v909, 8.507059e+37
  %v911 = vand.u32 %v696, 2147483648
  %v912 = vor.u32 1.1754944e-38, %v911
  %v913 = vsel %vm910, %v912, %v908
  %v914 = vmul.f32 1.0, %v913
  %v915 = vrcp.pop %v697
  %v916 = vmul.f32 %v697, %v915
  %v917 = vsub.f32 1.0, %v916
  %v918 = vmul.f32 %v915, %v917
  %v919 = vadd.f32 %v915, %v918
  %vm920 = vweird.f32 %v697
  %vm921 = vweird.f32 %v915
  %vm922 = vmor %vm920, %vm921
  %v923 = vsel %vm922, %v915, %v919
  %v924 = vand.u32 2147483647, %v697
  %vm925 = vcmp.eq.f32.partialorder %v924, 8.507059e+37
  %v926 = vand.u32 %v697, 2147483648
  %v927 = vor.u32 1.1754944e-38, %v926
  %v928 = vsel %vm925, %v927, %v923
  %v929 = vmul.f32 1.0, %v928
  %v930 = vrcp.pop %v698
  %v931 = vmul.f32 %v698, %v930
  %v932 = vsub.f32 1.0, %v931
  %v933 = vmul.f32 %v930, %v932
  %v934 = vadd.f32 %v930, %v933
  %vm935 = vweird.f32 %v698
  %vm936 = vweird.f32 %v930
  %vm937 = vmor %vm935, %vm936
  %v938 = vsel %vm937, %v930, %v934
  %v939 = vand.u32 2147483647, %v698
  %vm940 = vcmp.eq.f32.partialorder %v939, 8.507059e+37
  %v941 = vand.u32 %v698, 2147483648
  %v942 = vor.u32 1.1754944e-38, %v941
  %v943 = vsel %vm940, %v942, %v938
  %v944 = vmul.f32 1.0, %v943
  %v945 = vrcp.pop %v699
  %v946 = vmul.f32 %v699, %v945
  %v947 = vsub.f32 1.0, %v946
  %v948 = vmul.f32 %v945, %v947
  %v949 = vadd.f32 %v945, %v948
  %vm950 = vweird.f32 %v699
  %vm951 = vweird.f32 %v945
  %vm952 = vmor %vm950, %vm951
  %v953 = vsel %vm952, %v945, %v949
  %v954 = vand.u32 2147483647, %v699
  %vm955 = vcmp.eq.f32.partialorder %v954, 8.507059e+37
  %v956 = vand.u32 %v699, 2147483648
  %v957 = vor.u32 1.1754944e-38, %v956
  %v958 = vsel %vm955, %v957, %v953
  %v959 = vmul.f32 1.0, %v958
  %v960 = vrcp.pop %v700
  %v961 = vmul.f32 %v700, %v960
  %v962 = vsub.f32 1.0, %v961
  %v963 = vmul.f32 %v960, %v962
  %v964 = vadd.f32 %v960, %v963
  %vm965 = vweird.f32 %v700
  %vm966 = vweird.f32 %v960
  %vm967 = vmor %vm965, %vm966
  %v968 = vsel %vm967, %v960, %v964
  %v969 = vand.u32 2147483647, %v700
  %vm970 = vcmp.eq.f32.partialorder %v969, 8.507059e+37
  %v971 = vand.u32 %v700, 2147483648
  %v972 = vor.u32 1.1754944e-38, %v971
  %v973 = vsel %vm970, %v972, %v968
  %v974 = vmul.f32 1.0, %v973
  %v975 = vrcp.pop %v701
  %v976 = vmul.f32 %v701, %v975
  %v977 = vsub.f32 1.0, %v976
  %v978 = vmul.f32 %v975, %v977
  %v979 = vadd.f32 %v975, %v978
  %vm980 = vweird.f32 %v701
  %vm981 = vweird.f32 %v975
  %vm982 = vmor %vm980, %vm981
  %v983 = vsel %vm982, %v975, %v979
  %v984 = vand.u32 2147483647, %v701
  %vm985 = vcmp.eq.f32.partialorder %v984, 8.507059e+37
  %v986 = vand.u32 %v701, 2147483648
  %v987 = vor.u32 1.1754944e-38, %v986
  %v988 = vsel %vm985, %v987, %v983
  %v989 = vmul.f32 1.0, %v988
  %v990 = vrcp.pop %v702
  %v991 = vmul.f32 %v702, %v990
  %v992 = vsub.f32 1.0, %v991
  %v993 = vmul.f32 %v990, %v992
  %v994 = vadd.f32 %v990, %v993
  %vm995 = vweird.f32 %v702
  %vm996 = vweird.f32 %v990
  %vm997 = vmor %vm995, %vm996
  %v998 = vsel %vm997, %v990, %v994
  %v999 = vand.u32 2147483647, %v702
  %vm1000 = vcmp.eq.f32.partialorder %v999, 8.507059e+37
  %v1001 = vand.u32 %v702, 2147483648
  %v1002 = vor.u32 1.1754944e-38, %v1001
  %v1003 = vsel %vm1000, %v1002, %v998
  %v1004 = vmul.f32 1.0, %v1003
  %v1005 = vrcp.pop %v703
  %v1006 = vmul.f32 %v703, %v1005
  %v1007 = vsub.f32 1.0, %v1006
  %v1008 = vmul.f32 %v1005, %v1007
  %v1009 = vadd.f32 %v1005, %v1008
  %vm1010 = vweird.f32 %v703
  %vm1011 = vweird.f32 %v1005
  %vm1012 = vmor %vm1010, %vm1011
  %v1013 = vsel %vm1012, %v1005, %v1009
  %v1014 = vand.u32 2147483647, %v703
  %vm1015 = vcmp.eq.f32.partialorder %v1014, 8.507059e+37
  %v1016 = vand.u32 %v703, 2147483648
  %v1017 = vor.u32 1.1754944e-38, %v1016
  %v1018 = vsel %vm1015, %v1017, %v1013
  %v1019 = vmul.f32 1.0, %v1018
  %v1020 = vrcp.pop %v704
  %v1021 = vmul.f32 %v704, %v1020
  %v1022 = vsub.f32 1.0, %v1021
  %v1023 = vmul.f32 %v1020, %v1022
  %v1024 = vadd.f32 %v1020, %v1023
  %vm1025 = vweird.f32 %v704
  %vm1026 = vweird.f32 %v1020
  %vm1027 = vmor %vm1025, %vm1026
  %v1028 = vsel %vm1027, %v1020, %v1024
  %v1029 = vand.u32 2147483647, %v704
  %vm1030 = vcmp.eq.f32.partialorder %v1029, 8.507059e+37
  %v1031 = vand.u32 %v704, 2147483648
  %v1032 = vor.u32 1.1754944e-38, %v1031
  %v1033 = vsel %vm1030, %v1032, %v1028
  %v1034 = vmul.f32 1.0, %v1033
  %v1035 = vrcp.pop %v705
  %v1036 = vmul.f32 %v705, %v1035
  %v1037 = vsub.f32 1.0, %v1036
  %v1038 = vmul.f32 %v1035, %v1037
  %v1039 = vadd.f32 %v1035, %v1038
  %vm1040 = vweird.f32 %v705
  %vm1041 = vweird.f32 %v1035
  %vm1042 = vmor %vm1040, %vm1041
  %v1043 = vsel %vm1042, %v1035, %v1039
  %v1044 = vand.u32 2147483647, %v705
  %vm1045 = vcmp.eq.f32.partialorder %v1044, 8.507059e+37
  %v1046 = vand.u32 %v705, 2147483648
  %v1047 = vor.u32 1.1754944e-38, %v1046
  %v1048 = vsel %vm1045, %v1047, %v1043
  %v1049 = vmul.f32 1.0, %v1048
  %v1050 = vrcp.pop %v706
  %v1051 = vmul.f32 %v706, %v1050
  %v1052 = vsub.f32 1.0, %v1051
  %v1053 = vmul.f32 %v1050, %v1052
  %v1054 = vadd.f32 %v1050, %v1053
  %vm1055 = vweird.f32 %v706
  %vm1056 = vweird.f32 %v1050
  %vm1057 = vmor %vm1055, %vm1056
  %v1058 = vsel %vm1057, %v1050, %v1054
  %v1059 = vand.u32 2147483647, %v706
  %vm1060 = vcmp.eq.f32.partialorder %v1059, 8.507059e+37
  %v1061 = vand.u32 %v706, 2147483648
  %v1062 = vor.u32 1.1754944e-38, %v1061
  %v1063 = vsel %vm1060, %v1062, %v1058
  %v1064 = vmul.f32 1.0, %v1063
  %v1065 = vrcp.pop %v707
  %v1066 = vmul.f32 %v707, %v1065
  %v1067 = vsub.f32 1.0, %v1066
  %v1068 = vmul.f32 %v1065, %v1067
  %v1069 = vadd.f32 %v1065, %v1068
  %vm1070 = vweird.f32 %v707
  %vm1071 = vweird.f32 %v1065
  %vm1072 = vmor %vm1070, %vm1071
  %v1073 = vsel %vm1072, %v1065, %v1069
  %v1074 = vand.u32 2147483647, %v707
  %vm1075 = vcmp.eq.f32.partialorder %v1074, 8.507059e+37
  %v1076 = vand.u32 %v707, 2147483648
  %v1077 = vor.u32 1.1754944e-38, %v1076
  %v1078 = vsel %vm1075, %v1077, %v1073
  %v1079 = vmul.f32 1.0, %v1078
  %v1080 = vrcp.pop %v708
  %v1081 = vmul.f32 %v708, %v1080
  %v1082 = vsub.f32 1.0, %v1081
  %v1083 = vmul.f32 %v1080, %v1082
  %v1084 = vadd.f32 %v1080, %v1083
  %vm1085 = vweird.f32 %v708
  %vm1086 = vweird.f32 %v1080
  %vm1087 = vmor %vm1085, %vm1086
  %v1088 = vsel %vm1087, %v1080, %v1084
  %v1089 = vand.u32 2147483647, %v708
  %vm1090 = vcmp.eq.f32.partialorder %v1089, 8.507059e+37
  %v1091 = vand.u32 %v708, 2147483648
  %v1092 = vor.u32 1.1754944e-38, %v1091
  %v1093 = vsel %vm1090, %v1092, %v1088
  %v1094 = vmul.f32 1.0, %v1093
  %v1095 = vrcp.pop %v709
  %v1096 = vmul.f32 %v709, %v1095
  %v1097 = vsub.f32 1.0, %v1096
  %v1098 = vmul.f32 %v1095, %v1097
  %v1099 = vadd.f32 %v1095, %v1098
  %vm1100 = vweird.f32 %v709
  %vm1101 = vweird.f32 %v1095
  %vm1102 = vmor %vm1100, %vm1101
  %v1103 = vsel %vm1102, %v1095, %v1099
  %v1104 = vand.u32 2147483647, %v709
  %vm1105 = vcmp.eq.f32.partialorder %v1104, 8.507059e+37
  %v1106 = vand.u32 %v709, 2147483648
  %v1107 = vor.u32 1.1754944e-38, %v1106
  %v1108 = vsel %vm1105, %v1107, %v1103
  %v1109 = vmul.f32 1.0, %v1108
  %v1110 = vrcp.pop %v710
  %v1111 = vmul.f32 %v710, %v1110
  %v1112 = vsub.f32 1.0, %v1111
  %v1113 = vmul.f32 %v1110, %v1112
  %v1114 = vadd.f32 %v1110, %v1113
  %vm1115 = vweird.f32 %v710
  %vm1116 = vweird.f32 %v1110
  %vm1117 = vmor %vm1115, %vm1116
  %v1118 = vsel %vm1117, %v1110, %v1114
  %v1119 = vand.u32 2147483647, %v710
  %vm1120 = vcmp.eq.f32.partialorder %v1119, 8.507059e+37
  %v1121 = vand.u32 %v710, 2147483648
  %v1122 = vor.u32 1.1754944e-38, %v1121
  %v1123 = vsel %vm1120, %v1122, %v1118
  %v1124 = vmul.f32 1.0, %v1123
  %v1125 = vrcp.pop %v711
  %v1126 = vmul.f32 %v711, %v1125
  %v1127 = vsub.f32 1.0, %v1126
  %v1128 = vmul.f32 %v1125, %v1127
  %v1129 = vadd.f32 %v1125, %v1128
  %vm1130 = vweird.f32 %v711
  %vm1131 = vweird.f32 %v1125
  %vm1132 = vmor %vm1130, %vm1131
  %v1133 = vsel %vm1132, %v1125, %v1129
  %v1134 = vand.u32 2147483647, %v711
  %vm1135 = vcmp.eq.f32.partialorder %v1134, 8.507059e+37
  %v1136 = vand.u32 %v711, 2147483648
  %v1137 = vor.u32 1.1754944e-38, %v1136
  %v1138 = vsel %vm1135, %v1137, %v1133
  %v1139 = vmul.f32 1.0, %v1138
  %v1140 = vrcp.pop %v712
  %v1141 = vmul.f32 %v712, %v1140
  %v1142 = vsub.f32 1.0, %v1141
  %v1143 = vmul.f32 %v1140, %v1142
  %v1144 = vadd.f32 %v1140, %v1143
  %vm1145 = vweird.f32 %v712
  %vm1146 = vweird.f32 %v1140
  %vm1147 = vmor %vm1145, %vm1146
  %v1148 = vsel %vm1147, %v1140, %v1144
  %v1149 = vand.u32 2147483647, %v712
  %vm1150 = vcmp.eq.f32.partialorder %v1149, 8.507059e+37
  %v1151 = vand.u32 %v712, 2147483648
  %v1152 = vor.u32 1.1754944e-38, %v1151
  %v1153 = vsel %vm1150, %v1152, %v1148
  %v1154 = vmul.f32 1.0, %v1153
  %v1155 = vrcp.pop %v713
  %v1156 = vmul.f32 %v713, %v1155
  %v1157 = vsub.f32 1.0, %v1156
  %v1158 = vmul.f32 %v1155, %v1157
  %v1159 = vadd.f32 %v1155, %v1158
  %vm1160 = vweird.f32 %v713
  %vm1161 = vweird.f32 %v1155
  %vm1162 = vmor %vm1160, %vm1161
  %v1163 = vsel %vm1162, %v1155, %v1159
  %v1164 = vand.u32 2147483647, %v713
  %vm1165 = vcmp.eq.f32.partialorder %v1164, 8.507059e+37
  %v1166 = vand.u32 %v713, 2147483648
  %v1167 = vor.u32 1.1754944e-38, %v1166
  %v1168 = vsel %vm1165, %v1167, %v1163
  %v1169 = vmul.f32 1.0, %v1168
  %v1170 = vrcp.pop %v714
  %v1171 = vmul.f32 %v714, %v1170
  %v1172 = vsub.f32 1.0, %v1171
  %v1173 = vmul.f32 %v1170, %v1172
  %v1174 = vadd.f32 %v1170, %v1173
  %vm1175 = vweird.f32 %v714
  %vm1176 = vweird.f32 %v1170
  %vm1177 = vmor %vm1175, %vm1176
  %v1178 = vsel %vm1177, %v1170, %v1174
  %v1179 = vand.u32 2147483647, %v714
  %vm1180 = vcmp.eq.f32.partialorder %v1179, 8.507059e+37
  %v1181 = vand.u32 %v714, 2147483648
  %v1182 = vor.u32 1.1754944e-38, %v1181
  %v1183 = vsel %vm1180, %v1182, %v1178
  %v1184 = vmul.f32 1.0, %v1183
  %v1185 = vrcp.pop %v715
  %v1186 = vmul.f32 %v715, %v1185
  %v1187 = vsub.f32 1.0, %v1186
  %v1188 = vmul.f32 %v1185, %v1187
  %v1189 = vadd.f32 %v1185, %v1188
  %vm1190 = vweird.f32 %v715
  %vm1191 = vweird.f32 %v1185
  %vm1192 = vmor %vm1190, %vm1191
  %v1193 = vsel %vm1192, %v1185, %v1189
  %v1194 = vand.u32 2147483647, %v715
  %vm1195 = vcmp.eq.f32.partialorder %v1194, 8.507059e+37
  %v1196 = vand.u32 %v715, 2147483648
  %v1197 = vor.u32 1.1754944e-38, %v1196
  %v1198 = vsel %vm1195, %v1197, %v1193
  %v1199 = vmul.f32 1.0, %v1198
  %v1200 = vrcp.pop %v716
  %v1201 = vmul.f32 %v716, %v1200
  %v1202 = vsub.f32 1.0, %v1201
  %v1203 = vmul.f32 %v1200, %v1202
  %v1204 = vadd.f32 %v1200, %v1203
  %vm1205 = vweird.f32 %v716
  %vm1206 = vweird.f32 %v1200
  %vm1207 = vmor %vm1205, %vm1206
  %v1208 = vsel %vm1207, %v1200, %v1204
  %v1209 = vand.u32 2147483647, %v716
  %vm1210 = vcmp.eq.f32.partialorder %v1209, 8.507059e+37
  %v1211 = vand.u32 %v716, 2147483648
  %v1212 = vor.u32 1.1754944e-38, %v1211
  %v1213 = vsel %vm1210, %v1212, %v1208
  %v1214 = vmul.f32 1.0, %v1213
  %v1215 = vrcp.pop %v717
  %v1216 = vmul.f32 %v717, %v1215
  %v1217 = vsub.f32 1.0, %v1216
  %v1218 = vmul.f32 %v1215, %v1217
  %v1219 = vadd.f32 %v1215, %v1218
  %vm1220 = vweird.f32 %v717
  %vm1221 = vweird.f32 %v1215
  %vm1222 = vmor %vm1220, %vm1221
  %v1223 = vsel %vm1222, %v1215, %v1219
  %v1224 = vand.u32 2147483647, %v717
  %vm1225 = vcmp.eq.f32.partialorder %v1224, 8.507059e+37
  %v1226 = vand.u32 %v717, 2147483648
  %v1227 = vor.u32 1.1754944e-38, %v1226
  %v1228 = vsel %vm1225, %v1227, %v1223
  %v1229 = vmul.f32 1.0, %v1228
  %v1230 = vrcp.pop %v718
  %v1231 = vmul.f32 %v718, %v1230
  %v1232 = vsub.f32 1.0, %v1231
  %v1233 = vmul.f32 %v1230, %v1232
  %v1234 = vadd.f32 %v1230, %v1233
  %vm1235 = vweird.f32 %v718
  %vm1236 = vweird.f32 %v1230
  %vm1237 = vmor %vm1235, %vm1236
  %v1238 = vsel %vm1237, %v1230, %v1234
  %v1239 = vand.u32 2147483647, %v718
  %vm1240 = vcmp.eq.f32.partialorder %v1239, 8.507059e+37
  %v1241 = vand.u32 %v718, 2147483648
  %v1242 = vor.u32 1.1754944e-38, %v1241
  %v1243 = vsel %vm1240, %v1242, %v1238
  %v1244 = vmul.f32 1.0, %v1243
  %v1245 = vrcp.pop %v719
  %v1246 = vmul.f32 %v719, %v1245
  %v1247 = vsub.f32 1.0, %v1246
  %v1248 = vmul.f32 %v1245, %v1247
  %v1249 = vadd.f32 %v1245, %v1248
  %vm1250 = vweird.f32 %v719
  %vm1251 = vweird.f32 %v1245
  %vm1252 = vmor %vm1250, %vm1251
  %v1253 = vsel %vm1252, %v1245, %v1249
  %v1254 = vand.u32 2147483647, %v719
  %vm1255 = vcmp.eq.f32.partialorder %v1254, 8.507059e+37
  %v1256 = vand.u32 %v719, 2147483648
  %v1257 = vor.u32 1.1754944e-38, %v1256
  %v1258 = vsel %vm1255, %v1257, %v1253
  %v1259 = vmul.f32 1.0, %v1258
  %v1260 = vrcp.pop %v720
  %v1261 = vmul.f32 %v720, %v1260
  %v1262 = vsub.f32 1.0, %v1261
  %v1263 = vmul.f32 %v1260, %v1262
  %v1264 = vadd.f32 %v1260, %v1263
  %vm1265 = vweird.f32 %v720
  %vm1266 = vweird.f32 %v1260
  %vm1267 = vmor %vm1265, %vm1266
  %v1268 = vsel %vm1267, %v1260, %v1264
  %v1269 = vand.u32 2147483647, %v720
  %vm1270 = vcmp.eq.f32.partialorder %v1269, 8.507059e+37
  %v1271 = vand.u32 %v720, 2147483648
  %v1272 = vor.u32 1.1754944e-38, %v1271
  %v1273 = vsel %vm1270, %v1272, %v1268
  %v1274 = vmul.f32 1.0, %v1273
  %v1275 = vrcp.pop %v721
  %v1276 = vmul.f32 %v721, %v1275
  %v1277 = vsub.f32 1.0, %v1276
  %v1278 = vmul.f32 %v1275, %v1277
  %v1279 = vadd.f32 %v1275, %v1278
  %vm1280 = vweird.f32 %v721
  %vm1281 = vweird.f32 %v1275
  %vm1282 = vmor %vm1280, %vm1281
  %v1283 = vsel %vm1282, %v1275, %v1279
  %v1284 = vand.u32 2147483647, %v721
  %vm1285 = vcmp.eq.f32.partialorder %v1284, 8.507059e+37
  %v1286 = vand.u32 %v721, 2147483648
  %v1287 = vor.u32 1.1754944e-38, %v1286
  %v1288 = vsel %vm1285, %v1287, %v1283
  %v1289 = vmul.f32 1.0, %v1288
  %v1290 = vrcp.pop %v722
  %v1291 = vmul.f32 %v722, %v1290
  %v1292 = vsub.f32 1.0, %v1291
  %v1293 = vmul.f32 %v1290, %v1292
  %v1294 = vadd.f32 %v1290, %v1293
  %vm1295 = vweird.f32 %v722
  %vm1296 = vweird.f32 %v1290
  %vm1297 = vmor %vm1295, %vm1296
  %v1298 = vsel %vm1297, %v1290, %v1294
  %v1299 = vand.u32 2147483647, %v722
  %vm1300 = vcmp.eq.f32.partialorder %v1299, 8.507059e+37
  %v1301 = vand.u32 %v722, 2147483648
  %v1302 = vor.u32 1.1754944e-38, %v1301
  %v1303 = vsel %vm1300, %v1302, %v1298
  %v1304 = vmul.f32 1.0, %v1303
  %v1305 = vrcp.pop %v723
  %v1306 = vmul.f32 %v723, %v1305
  %v1307 = vsub.f32 1.0, %v1306
  %v1308 = vmul.f32 %v1305, %v1307
  %v1309 = vadd.f32 %v1305, %v1308
  %vm1310 = vweird.f32 %v723
  %vm1311 = vweird.f32 %v1305
  %vm1312 = vmor %vm1310, %vm1311
  %v1313 = vsel %vm1312, %v1305, %v1309
  %v1314 = vand.u32 2147483647, %v723
  %vm1315 = vcmp.eq.f32.partialorder %v1314, 8.507059e+37
  %v1316 = vand.u32 %v723, 2147483648
  %v1317 = vor.u32 1.1754944e-38, %v1316
  %v1318 = vsel %vm1315, %v1317, %v1313
  %v1319 = vmul.f32 1.0, %v1318
  %v1320 = vrcp.pop %v724
  %v1321 = vmul.f32 %v724, %v1320
  %v1322 = vsub.f32 1.0, %v1321
  %v1323 = vmul.f32 %v1320, %v1322
  %v1324 = vadd.f32 %v1320, %v1323
  %vm1325 = vweird.f32 %v724
  %vm1326 = vweird.f32 %v1320
  %vm1327 = vmor %vm1325, %vm1326
  %v1328 = vsel %vm1327, %v1320, %v1324
  %v1329 = vand.u32 2147483647, %v724
  %vm1330 = vcmp.eq.f32.partialorder %v1329, 8.507059e+37
  %v1331 = vand.u32 %v724, 2147483648
  %v1332 = vor.u32 1.1754944e-38, %v1331
  %v1333 = vsel %vm1330, %v1332, %v1328
  %v1334 = vmul.f32 1.0, %v1333
  %v1335 = vrcp.pop %v725
  %v1336 = vmul.f32 %v725, %v1335
  %v1337 = vsub.f32 1.0, %v1336
  %v1338 = vmul.f32 %v1335, %v1337
  %v1339 = vadd.f32 %v1335, %v1338
  %vm1340 = vweird.f32 %v725
  %vm1341 = vweird.f32 %v1335
  %vm1342 = vmor %vm1340, %vm1341
  %v1343 = vsel %vm1342, %v1335, %v1339
  %v1344 = vand.u32 2147483647, %v725
  %vm1345 = vcmp.eq.f32.partialorder %v1344, 8.507059e+37
  %v1346 = vand.u32 %v725, 2147483648
  %v1347 = vor.u32 1.1754944e-38, %v1346
  %v1348 = vsel %vm1345, %v1347, %v1343
  %v1349 = vmul.f32 1.0, %v1348
  %v1350 = vrcp.pop %v726
  %v1351 = vmul.f32 %v726, %v1350
  %v1352 = vsub.f32 1.0, %v1351
  %v1353 = vmul.f32 %v1350, %v1352
  %v1354 = vadd.f32 %v1350, %v1353
  %vm1355 = vweird.f32 %v726
  %vm1356 = vweird.f32 %v1350
  %vm1357 = vmor %vm1355, %vm1356
  %v1358 = vsel %vm1357, %v1350, %v1354
  %v1359 = vand.u32 2147483647, %v726
  %vm1360 = vcmp.eq.f32.partialorder %v1359, 8.507059e+37
  %v1361 = vand.u32 %v726, 2147483648
  %v1362 = vor.u32 1.1754944e-38, %v1361
  %v1363 = vsel %vm1360, %v1362, %v1358
  %v1364 = vmul.f32 1.0, %v1363
  %v1365 = vrcp.pop %v727
  %v1366 = vmul.f32 %v727, %v1365
  %v1367 = vsub.f32 1.0, %v1366
  %v1368 = vmul.f32 %v1365, %v1367
  %v1369 = vadd.f32 %v1365, %v1368
  %vm1370 = vweird.f32 %v727
  %vm1371 = vweird.f32 %v1365
  %vm1372 = vmor %vm1370, %vm1371
  %v1373 = vsel %vm1372, %v1365, %v1369
  %v1374 = vand.u32 2147483647, %v727
  %vm1375 = vcmp.eq.f32.partialorder %v1374, 8.507059e+37
  %v1376 = vand.u32 %v727, 2147483648
  %v1377 = vor.u32 1.1754944e-38, %v1376
  %v1378 = vsel %vm1375, %v1377, %v1373
  %v1379 = vmul.f32 1.0, %v1378
  %v1380 = vrcp.pop %v728
  %v1381 = vmul.f32 %v728, %v1380
  %v1382 = vsub.f32 1.0, %v1381
  %v1383 = vmul.f32 %v1380, %v1382
  %v1384 = vadd.f32 %v1380, %v1383
  %vm1385 = vweird.f32 %v728
  %vm1386 = vweird.f32 %v1380
  %vm1387 = vmor %vm1385, %vm1386
  %v1388 = vsel %vm1387, %v1380, %v1384
  %v1389 = vand.u32 2147483647, %v728
  %vm1390 = vcmp.eq.f32.partialorder %v1389, 8.507059e+37
  %v1391 = vand.u32 %v728, 2147483648
  %v1392 = vor.u32 1.1754944e-38, %v1391
  %v1393 = vsel %vm1390, %v1392, %v1388
  %v1394 = vmul.f32 1.0, %v1393
  %v1395 = vrcp.pop %v729
  %v1396 = vmul.f32 %v729, %v1395
  %v1397 = vsub.f32 1.0, %v1396
  %v1398 = vmul.f32 %v1395, %v1397
  %v1399 = vadd.f32 %v1395, %v1398
  %vm1400 = vweird.f32 %v729
  %vm1401 = vweird.f32 %v1395
  %vm1402 = vmor %vm1400, %vm1401
  %v1403 = vsel %vm1402, %v1395, %v1399
  %v1404 = vand.u32 2147483647, %v729
  %vm1405 = vcmp.eq.f32.partialorder %v1404, 8.507059e+37
  %v1406 = vand.u32 %v729, 2147483648
  %v1407 = vor.u32 1.1754944e-38, %v1406
  %v1408 = vsel %vm1405, %v1407, %v1403
  %v1409 = vmul.f32 1.0, %v1408
  %v1410 = vrcp.pop %v730
  %v1411 = vmul.f32 %v730, %v1410
  %v1412 = vsub.f32 1.0, %v1411
  %v1413 = vmul.f32 %v1410, %v1412
  %v1414 = vadd.f32 %v1410, %v1413
  %vm1415 = vweird.f32 %v730
  %vm1416 = vweird.f32 %v1410
  %vm1417 = vmor %vm1415, %vm1416
  %v1418 = vsel %vm1417, %v1410, %v1414
  %v1419 = vand.u32 2147483647, %v730
  %vm1420 = vcmp.eq.f32.partialorder %v1419, 8.507059e+37
  %v1421 = vand.u32 %v730, 2147483648
  %v1422 = vor.u32 1.1754944e-38, %v1421
  %v1423 = vsel %vm1420, %v1422, %v1418
  %v1424 = vmul.f32 1.0, %v1423
  %v1425 = vrcp.pop %v731
  %v1426 = vmul.f32 %v731, %v1425
  %v1427 = vsub.f32 1.0, %v1426
  %v1428 = vmul.f32 %v1425, %v1427
  %v1429 = vadd.f32 %v1425, %v1428
  %vm1430 = vweird.f32 %v731
  %vm1431 = vweird.f32 %v1425
  %vm1432 = vmor %vm1430, %vm1431
  %v1433 = vsel %vm1432, %v1425, %v1429
  %v1434 = vand.u32 2147483647, %v731
  %vm1435 = vcmp.eq.f32.partialorder %v1434, 8.507059e+37
  %v1436 = vand.u32 %v731, 2147483648
  %v1437 = vor.u32 1.1754944e-38, %v1436
  %v1438 = vsel %vm1435, %v1437, %v1433
  %v1439 = vmul.f32 1.0, %v1438
  %v1440 = vrcp.pop %v732
  %v1441 = vmul.f32 %v732, %v1440
  %v1442 = vsub.f32 1.0, %v1441
  %v1443 = vmul.f32 %v1440, %v1442
  %v1444 = vadd.f32 %v1440, %v1443
  %vm1445 = vweird.f32 %v732
  %vm1446 = vweird.f32 %v1440
  %vm1447 = vmor %vm1445, %vm1446
  %v1448 = vsel %vm1447, %v1440, %v1444
  %v1449 = vand.u32 2147483647, %v732
  %vm1450 = vcmp.eq.f32.partialorder %v1449, 8.507059e+37
  %v1451 = vand.u32 %v732, 2147483648
  %v1452 = vor.u32 1.1754944e-38, %v1451
  %v1453 = vsel %vm1450, %v1452, %v1448
  %v1454 = vmul.f32 1.0, %v1453
  %v1455 = vrcp.pop %v733
  %v1456 = vmul.f32 %v733, %v1455
  %v1457 = vsub.f32 1.0, %v1456
  %v1458 = vmul.f32 %v1455, %v1457
  %v1459 = vadd.f32 %v1455, %v1458
  %vm1460 = vweird.f32 %v733
  %vm1461 = vweird.f32 %v1455
  %vm1462 = vmor %vm1460, %vm1461
  %v1463 = vsel %vm1462, %v1455, %v1459
  %v1464 = vand.u32 2147483647, %v733
  %vm1465 = vcmp.eq.f32.partialorder %v1464, 8.507059e+37
  %v1466 = vand.u32 %v733, 2147483648
  %v1467 = vor.u32 1.1754944e-38, %v1466
  %v1468 = vsel %vm1465, %v1467, %v1463
  %v1469 = vmul.f32 1.0, %v1468
  %v1470 = vrcp.pop %v734
  %v1471 = vmul.f32 %v734, %v1470
  %v1472 = vsub.f32 1.0, %v1471
  %v1473 = vmul.f32 %v1470, %v1472
  %v1474 = vadd.f32 %v1470, %v1473
  %vm1475 = vweird.f32 %v734
  %vm1476 = vweird.f32 %v1470
  %vm1477 = vmor %vm1475, %vm1476
  %v1478 = vsel %vm1477, %v1470, %v1474
  %v1479 = vand.u32 2147483647, %v734
  %vm1480 = vcmp.eq.f32.partialorder %v1479, 8.507059e+37
  %v1481 = vand.u32 %v734, 2147483648
  %v1482 = vor.u32 1.1754944e-38, %v1481
  %v1483 = vsel %vm1480, %v1482, %v1478
  %v1484 = vmul.f32 1.0, %v1483
  %v1485 = vrcp.pop %v735
  %v1486 = vmul.f32 %v735, %v1485
  %v1487 = vsub.f32 1.0, %v1486
  %v1488 = vmul.f32 %v1485, %v1487
  %v1489 = vadd.f32 %v1485, %v1488
  %vm1490 = vweird.f32 %v735
  %vm1491 = vweird.f32 %v1485
  %vm1492 = vmor %vm1490, %vm1491
  %v1493 = vsel %vm1492, %v1485, %v1489
  %v1494 = vand.u32 2147483647, %v735
  %vm1495 = vcmp.eq.f32.partialorder %v1494, 8.507059e+37
  %v1496 = vand.u32 %v735, 2147483648
  %v1497 = vor.u32 1.1754944e-38, %v1496
  %v1498 = vsel %vm1495, %v1497, %v1493
  %v1499 = vmul.f32 1.0, %v1498
  %v1500 = vrcp.pop %v736
  %v1501 = vmul.f32 %v736, %v1500
  %v1502 = vsub.f32 1.0, %v1501
  %v1503 = vmul.f32 %v1500, %v1502
  %v1504 = vadd.f32 %v1500, %v1503
  %vm1505 = vweird.f32 %v736
  %vm1506 = vweird.f32 %v1500
  %vm1507 = vmor %vm1505, %vm1506
  %v1508 = vsel %vm1507, %v1500, %v1504
  %v1509 = vand.u32 2147483647, %v736
  %vm1510 = vcmp.eq.f32.partialorder %v1509, 8.507059e+37
  %v1511 = vand.u32 %v736, 2147483648
  %v1512 = vor.u32 1.1754944e-38, %v1511
  %v1513 = vsel %vm1510, %v1512, %v1508
  %v1514 = vmul.f32 1.0, %v1513
  %v1515 = vrcp.pop %v737
  %v1516 = vmul.f32 %v737, %v1515
  %v1517 = vsub.f32 1.0, %v1516
  %v1518 = vmul.f32 %v1515, %v1517
  %v1519 = vadd.f32 %v1515, %v1518
  %vm1520 = vweird.f32 %v737
  %vm1521 = vweird.f32 %v1515
  %vm1522 = vmor %vm1520, %vm1521
  %v1523 = vsel %vm1522, %v1515, %v1519
  %v1524 = vand.u32 2147483647, %v737
  %vm1525 = vcmp.eq.f32.partialorder %v1524, 8.507059e+37
  %v1526 = vand.u32 %v737, 2147483648
  %v1527 = vor.u32 1.1754944e-38, %v1526
  %v1528 = vsel %vm1525, %v1527, %v1523
  %v1529 = vmul.f32 1.0, %v1528
  %v1530 = vrcp.pop %v738
  %v1531 = vmul.f32 %v738, %v1530
  %v1532 = vsub.f32 1.0, %v1531
  %v1533 = vmul.f32 %v1530, %v1532
  %v1534 = vadd.f32 %v1530, %v1533
  %vm1535 = vweird.f32 %v738
  %vm1536 = vweird.f32 %v1530
  %vm1537 = vmor %vm1535, %vm1536
  %v1538 = vsel %vm1537, %v1530, %v1534
  %v1539 = vand.u32 2147483647, %v738
  %vm1540 = vcmp.eq.f32.partialorder %v1539, 8.507059e+37
  %v1541 = vand.u32 %v738, 2147483648
  %v1542 = vor.u32 1.1754944e-38, %v1541
  %v1543 = vsel %vm1540, %v1542, %v1538
  %v1544 = vmul.f32 1.0, %v1543
  %v1545 = vrcp.pop %v739
  %v1546 = vmul.f32 %v739, %v1545
  %v1547 = vsub.f32 1.0, %v1546
  %v1548 = vmul.f32 %v1545, %v1547
  %v1549 = vadd.f32 %v1545, %v1548
  %vm1550 = vweird.f32 %v739
  %vm1551 = vweird.f32 %v1545
  %vm1552 = vmor %vm1550, %vm1551
  %v1553 = vsel %vm1552, %v1545, %v1549
  %v1554 = vand.u32 2147483647, %v739
  %vm1555 = vcmp.eq.f32.partialorder %v1554, 8.507059e+37
  %v1556 = vand.u32 %v739, 2147483648
  %v1557 = vor.u32 1.1754944e-38, %v1556
  %v1558 = vsel %vm1555, %v1557, %v1553
  %v1559 = vmul.f32 1.0, %v1558
  %v1560 = vrcp.pop %v740
  %v1561 = vmul.f32 %v740, %v1560
  %v1562 = vsub.f32 1.0, %v1561
  %v1563 = vmul.f32 %v1560, %v1562
  %v1564 = vadd.f32 %v1560, %v1563
  %vm1565 = vweird.f32 %v740
  %vm1566 = vweird.f32 %v1560
  %vm1567 = vmor %vm1565, %vm1566
  %v1568 = vsel %vm1567, %v1560, %v1564
  %v1569 = vand.u32 2147483647, %v740
  %vm1570 = vcmp.eq.f32.partialorder %v1569, 8.507059e+37
  %v1571 = vand.u32 %v740, 2147483648
  %v1572 = vor.u32 1.1754944e-38, %v1571
  %v1573 = vsel %vm1570, %v1572, %v1568
  %v1574 = vmul.f32 1.0, %v1573
  %v1575 = vrcp.pop %v741
  %v1576 = vmul.f32 %v741, %v1575
  %v1577 = vsub.f32 1.0, %v1576
  %v1578 = vmul.f32 %v1575, %v1577
  %v1579 = vadd.f32 %v1575, %v1578
  %vm1580 = vweird.f32 %v741
  %vm1581 = vweird.f32 %v1575
  %vm1582 = vmor %vm1580, %vm1581
  %v1583 = vsel %vm1582, %v1575, %v1579
  %v1584 = vand.u32 2147483647, %v741
  %vm1585 = vcmp.eq.f32.partialorder %v1584, 8.507059e+37
  %v1586 = vand.u32 %v741, 2147483648
  %v1587 = vor.u32 1.1754944e-38, %v1586
  %v1588 = vsel %vm1585, %v1587, %v1583
  %v1589 = vmul.f32 1.0, %v1588
  %v1590 = vrcp.pop %v742
  %v1591 = vmul.f32 %v742, %v1590
  %v1592 = vsub.f32 1.0, %v1591
  %v1593 = vmul.f32 %v1590, %v1592
  %v1594 = vadd.f32 %v1590, %v1593
  %vm1595 = vweird.f32 %v742
  %vm1596 = vweird.f32 %v1590
  %vm1597 = vmor %vm1595, %vm1596
  %v1598 = vsel %vm1597, %v1590, %v1594
  %v1599 = vand.u32 2147483647, %v742
  %vm1600 = vcmp.eq.f32.partialorder %v1599, 8.507059e+37
  %v1601 = vand.u32 %v742, 2147483648
  %v1602 = vor.u32 1.1754944e-38, %v1601
  %v1603 = vsel %vm1600, %v1602, %v1598
  %v1604 = vmul.f32 1.0, %v1603
  %v1605 = vrcp.pop %v743
  %v1606 = vmul.f32 %v743, %v1605
  %v1607 = vsub.f32 1.0, %v1606
  %v1608 = vmul.f32 %v1605, %v1607
  %v1609 = vadd.f32 %v1605, %v1608
  %vm1610 = vweird.f32 %v743
  %vm1611 = vweird.f32 %v1605
  %vm1612 = vmor %vm1610, %vm1611
  %v1613 = vsel %vm1612, %v1605, %v1609
  %v1614 = vand.u32 2147483647, %v743
  %vm1615 = vcmp.eq.f32.partialorder %v1614, 8.507059e+37
  %v1616 = vand.u32 %v743, 2147483648
  %v1617 = vor.u32 1.1754944e-38, %v1616
  %v1618 = vsel %vm1615, %v1617, %v1613
  %v1619 = vmul.f32 1.0, %v1618
  %v1620 = vrcp.pop %v744
  %v1621 = vmul.f32 %v744, %v1620
  %v1622 = vsub.f32 1.0, %v1621
  %v1623 = vmul.f32 %v1620, %v1622
  %v1624 = vadd.f32 %v1620, %v1623
  %vm1625 = vweird.f32 %v744
  %vm1626 = vweird.f32 %v1620
  %vm1627 = vmor %vm1625, %vm1626
  %v1628 = vsel %vm1627, %v1620, %v1624
  %v1629 = vand.u32 2147483647, %v744
  %vm1630 = vcmp.eq.f32.partialorder %v1629, 8.507059e+37
  %v1631 = vand.u32 %v744, 2147483648
  %v1632 = vor.u32 1.1754944e-38, %v1631
  %v1633 = vsel %vm1630, %v1632, %v1628
  %v1634 = vmul.f32 1.0, %v1633
  %v1635 = vrcp.pop %v745
  %v1636 = vmul.f32 %v745, %v1635
  %v1637 = vsub.f32 1.0, %v1636
  %v1638 = vmul.f32 %v1635, %v1637
  %v1639 = vadd.f32 %v1635, %v1638
  %vm1640 = vweird.f32 %v745
  %vm1641 = vweird.f32 %v1635
  %vm1642 = vmor %vm1640, %vm1641
  %v1643 = vsel %vm1642, %v1635, %v1639
  %v1644 = vand.u32 2147483647, %v745
  %vm1645 = vcmp.eq.f32.partialorder %v1644, 8.507059e+37
  %v1646 = vand.u32 %v745, 2147483648
  %v1647 = vor.u32 1.1754944e-38, %v1646
  %v1648 = vsel %vm1645, %v1647, %v1643
  %v1649 = vmul.f32 1.0, %v1648
  %v1650 = vrcp.pop %v746
  %v1651 = vmul.f32 %v746, %v1650
  %v1652 = vsub.f32 1.0, %v1651
  %v1653 = vmul.f32 %v1650, %v1652
  %v1654 = vadd.f32 %v1650, %v1653
  %vm1655 = vweird.f32 %v746
  %vm1656 = vweird.f32 %v1650
  %vm1657 = vmor %vm1655, %vm1656
  %v1658 = vsel %vm1657, %v1650, %v1654
  %v1659 = vand.u32 2147483647, %v746
  %vm1660 = vcmp.eq.f32.partialorder %v1659, 8.507059e+37
  %v1661 = vand.u32 %v746, 2147483648
  %v1662 = vor.u32 1.1754944e-38, %v1661
  %v1663 = vsel %vm1660, %v1662, %v1658
  %v1664 = vmul.f32 1.0, %v1663
  %v1665 = vrcp.pop %v747
  %v1666 = vmul.f32 %v747, %v1665
  %v1667 = vsub.f32 1.0, %v1666
  %v1668 = vmul.f32 %v1665, %v1667
  %v1669 = vadd.f32 %v1665, %v1668
  %vm1670 = vweird.f32 %v747
  %vm1671 = vweird.f32 %v1665
  %vm1672 = vmor %vm1670, %vm1671
  %v1673 = vsel %vm1672, %v1665, %v1669
  %v1674 = vand.u32 2147483647, %v747
  %vm1675 = vcmp.eq.f32.partialorder %v1674, 8.507059e+37
  %v1676 = vand.u32 %v747, 2147483648
  %v1677 = vor.u32 1.1754944e-38, %v1676
  %v1678 = vsel %vm1675, %v1677, %v1673
  %v1679 = vmul.f32 1.0, %v1678
  %v1680 = vrcp.pop %v748
  %v1681 = vmul.f32 %v748, %v1680
  %v1682 = vsub.f32 1.0, %v1681
  %v1683 = vmul.f32 %v1680, %v1682
  %v1684 = vadd.f32 %v1680, %v1683
  %vm1685 = vweird.f32 %v748
  %vm1686 = vweird.f32 %v1680
  %vm1687 = vmor %vm1685, %vm1686
  %v1688 = vsel %vm1687, %v1680, %v1684
  %v1689 = vand.u32 2147483647, %v748
  %vm1690 = vcmp.eq.f32.partialorder %v1689, 8.507059e+37
  %v1691 = vand.u32 %v748, 2147483648
  %v1692 = vor.u32 1.1754944e-38, %v1691
  %v1693 = vsel %vm1690, %v1692, %v1688
  %v1694 = vmul.f32 1.0, %v1693
  %v1695 = vrcp.pop %v749
  %v1696 = vmul.f32 %v749, %v1695
  %v1697 = vsub.f32 1.0, %v1696
  %v1698 = vmul.f32 %v1695, %v1697
  %v1699 = vadd.f32 %v1695, %v1698
  %vm1700 = vweird.f32 %v749
  %vm1701 = vweird.f32 %v1695
  %vm1702 = vmor %vm1700, %vm1701
  %v1703 = vsel %vm1702, %v1695, %v1699
  %v1704 = vand.u32 2147483647, %v749
  %vm1705 = vcmp.eq.f32.partialorder %v1704, 8.507059e+37
  %v1706 = vand.u32 %v749, 2147483648
  %v1707 = vor.u32 1.1754944e-38, %v1706
  %v1708 = vsel %vm1705, %v1707, %v1703
  %v1709 = vmul.f32 1.0, %v1708
  %v1710 = vld [vmem:[%s3] sm:$0xff]
  %v1711 = vld [vmem:[%s3 + $0x8] sm:$0xff]
  %v1712 = vld [vmem:[%s3 + $0x10] sm:$0xff]
  %v1713 = vld [vmem:[%s3 + $0x18] sm:$0xff]
  %v1714 = vld [vmem:[%s3 + $0x20] sm:$0xff]
  %v1715 = vld [vmem:[%s3 + $0x28] sm:$0xff]
  %v1716 = vld [vmem:[%s3 + $0x30] sm:$0xff]
  %v1717 = vld [vmem:[%s3 + $0x38] sm:$0xff]
  %v1718 = vld [vmem:[%s4] sm:$0x1]
  %v1720 = vperm.slane %v1718, 0
  %vm1722 = vcmask 523264
  %v1724 = vsel %vm1722, %v764, 0
  %v1727 = vsel %vm1722, %v779, 0
  %v1730 = vsel %vm1722, %v794, 0
  %v1733 = vsel %vm1722, %v809, 0
  %v1736 = vsel %vm1722, %v824, 0
  %v1739 = vsel %vm1722, %v839, 0
  %v1742 = vsel %vm1722, %v854, 0
  %v1745 = vsel %vm1722, %v869, 0
  %v1748 = vsel %vm1722, %v884, 0
  %v1751 = vsel %vm1722, %v899, 0
  %v1754 = vsel %vm1722, %v914, 0
  %v1757 = vsel %vm1722, %v929, 0
  %v1760 = vsel %vm1722, %v944, 0
  %v1763 = vsel %vm1722, %v959, 0
  %v1766 = vsel %vm1722, %v974, 0
  %v1769 = vsel %vm1722, %v989, 0
  %v1772 = vsel %vm1722, %v1004, 0
  %v1775 = vsel %vm1722, %v1019, 0
  %v1778 = vsel %vm1722, %v1034, 0
  %v1781 = vsel %vm1722, %v1049, 0
  %v1784 = vsel %vm1722, %v1064, 0
  %v1787 = vsel %vm1722, %v1079, 0
  %v1790 = vsel %vm1722, %v1094, 0
  %v1793 = vsel %vm1722, %v1109, 0
  %v1796 = vsel %vm1722, %v1124, 0
  %v1799 = vsel %vm1722, %v1139, 0
  %v1802 = vsel %vm1722, %v1154, 0
  %v1805 = vsel %vm1722, %v1169, 0
  %v1808 = vsel %vm1722, %v1184, 0
  %v1811 = vsel %vm1722, %v1199, 0
  %v1814 = vsel %vm1722, %v1214, 0
  %v1817 = vsel %vm1722, %v1229, 0
  %v1820 = vsel %vm1722, %v1244, 0
  %v1823 = vsel %vm1722, %v1259, 0
  %v1826 = vsel %vm1722, %v1274, 0
  %v1829 = vsel %vm1722, %v1289, 0
  %v1832 = vsel %vm1722, %v1304, 0
  %v1835 = vsel %vm1722, %v1319, 0
  %v1838 = vsel %vm1722, %v1334, 0
  %v1841 = vsel %vm1722, %v1349, 0
  %v1844 = vsel %vm1722, %v1364, 0
  %v1847 = vsel %vm1722, %v1379, 0
  %v1850 = vsel %vm1722, %v1394, 0
  %v1853 = vsel %vm1722, %v1409, 0
  %v1856 = vsel %vm1722, %v1424, 0
  %v1859 = vsel %vm1722, %v1439, 0
  %v1862 = vsel %vm1722, %v1454, 0
  %v1865 = vsel %vm1722, %v1469, 0
  %v1868 = vsel %vm1722, %v1484, 0
  %v1871 = vsel %vm1722, %v1499, 0
  %v1874 = vsel %vm1722, %v1514, 0
  %v1877 = vsel %vm1722, %v1529, 0
  %v1880 = vsel %vm1722, %v1544, 0
  %v1883 = vsel %vm1722, %v1559, 0
  %v1886 = vsel %vm1722, %v1574, 0
  %v1889 = vsel %vm1722, %v1589, 0
  %v1892 = vsel %vm1722, %v1604, 0
  %v1895 = vsel %vm1722, %v1619, 0
  %v1898 = vsel %vm1722, %v1634, 0
  %v1901 = vsel %vm1722, %v1649, 0
  %v1904 = vsel %vm1722, %v1664, 0
  %v1907 = vsel %vm1722, %v1679, 0
  %v1910 = vsel %vm1722, %v1694, 0
  %v1913 = vsel %vm1722, %v1709, 0
  %1915 = vmatpush.msra.mxu0 0.0
  %1916 = vmatpush.msra.mxu0 0.0
  %1917 = vmatpush.msra.mxu0 0.0
  %1918 = vmatpush.msra.mxu0 0.0
  %1919 = vmatpush.msra.mxu0 0.0
  %1920 = vmatpush.msra.mxu0 0.0
  %1921 = vmatpush.msra.mxu0 0.0
  %1922 = vmatpush.msra.mxu0 0.0
  %1923 = vmatpush.msra.mxu0 %v1717
  %1924 = vmatpush.msra.mxu0 %v1716
  %1925 = vmatpush.msra.mxu0 %v1715
  %1926 = vmatpush.msra.mxu0 %v1714
  %1927 = vmatpush.msra.mxu0 %v1713
  %1928 = vmatpush.msra.mxu0 %v1712
  %1929 = vmatpush.msra.mxu0 %v1711
  %1930 = vmatpush.msra.mxu0 %v1710
  %1931 = vmatmul.f32.gmra.mxu0 %v1724
  %v1932 = vpop.f32.mrf.mxu0
  %v1933 = vadd.f32 %v1720, %v1932
  %1934 = vmatmul.f32.gmra.mxu0 %v1727
  %v1935 = vpop.f32.mrf.mxu0
  %v1936 = vadd.f32 %v1720, %v1935
  %1937 = vmatmul.f32.gmra.mxu0 %v1730
  %v1938 = vpop.f32.mrf.mxu0
  %v1939 = vadd.f32 %v1720, %v1938
  %1940 = vmatmul.f32.gmra.mxu0 %v1733
  %v1941 = vpop.f32.mrf.mxu0
  %v1942 = vadd.f32 %v1720, %v1941
  %1943 = vmatmul.f32.gmra.mxu0 %v1736
  %v1944 = vpop.f32.mrf.mxu0
  %v1945 = vadd.f32 %v1720, %v1944
  %1946 = vmatmul.f32.gmra.mxu0 %v1739
  %v1947 = vpop.f32.mrf.mxu0
  %v1948 = vadd.f32 %v1720, %v1947
  %1949 = vmatmul.f32.gmra.mxu0 %v1742
  %v1950 = vpop.f32.mrf.mxu0
  %v1951 = vadd.f32 %v1720, %v1950
  %1952 = vmatmul.f32.gmra.mxu0 %v1745
  %v1953 = vpop.f32.mrf.mxu0
  %v1954 = vadd.f32 %v1720, %v1953
  %1955 = vmatmul.f32.gmra.mxu0 %v1748
  %v1956 = vpop.f32.mrf.mxu0
  %v1957 = vadd.f32 %v1720, %v1956
  %1958 = vmatmul.f32.gmra.mxu0 %v1751
  %v1959 = vpop.f32.mrf.mxu0
  %v1960 = vadd.f32 %v1720, %v1959
  %1961 = vmatmul.f32.gmra.mxu0 %v1754
  %v1962 = vpop.f32.mrf.mxu0
  %v1963 = vadd.f32 %v1720, %v1962
  %1964 = vmatmul.f32.gmra.mxu0 %v1757
  %v1965 = vpop.f32.mrf.mxu0
  %v1966 = vadd.f32 %v1720, %v1965
  %1967 = vmatmul.f32.gmra.mxu0 %v1760
  %v1968 = vpop.f32.mrf.mxu0
  %v1969 = vadd.f32 %v1720, %v1968
  %1970 = vmatmul.f32.gmra.mxu0 %v1763
  %v1971 = vpop.f32.mrf.mxu0
  %v1972 = vadd.f32 %v1720, %v1971
  %1973 = vmatmul.f32.gmra.mxu0 %v1766
  %v1974 = vpop.f32.mrf.mxu0
  %v1975 = vadd.f32 %v1720, %v1974
  %1976 = vmatmul.f32.gmra.mxu0 %v1769
  %v1977 = vpop.f32.mrf.mxu0
  %v1978 = vadd.f32 %v1720, %v1977
  %1979 = vmatmul.f32.gmra.mxu0 %v1772
  %v1980 = vpop.f32.mrf.mxu0
  %v1981 = vadd.f32 %v1720, %v1980
  %1982 = vmatmul.f32.gmra.mxu0 %v1775
  %v1983 = vpop.f32.mrf.mxu0
  %v1984 = vadd.f32 %v1720, %v1983
  %1985 = vmatmul.f32.gmra.mxu0 %v1778
  %v1986 = vpop.f32.mrf.mxu0
  %v1987 = vadd.f32 %v1720, %v1986
  %1988 = vmatmul.f32.gmra.mxu0 %v1781
  %v1989 = vpop.f32.mrf.mxu0
  %v1990 = vadd.f32 %v1720, %v1989
  %1991 = vmatmul.f32.gmra.mxu0 %v1784
  %v1992 = vpop.f32.mrf.mxu0
  %v1993 = vadd.f32 %v1720, %v1992
  %1994 = vmatmul.f32.gmra.mxu0 %v1787
  %v1995 = vpop.f32.mrf.mxu0
  %v1996 = vadd.f32 %v1720, %v1995
  %1997 = vmatmul.f32.gmra.mxu0 %v1790
  %v1998 = vpop.f32.mrf.mxu0
  %v1999 = vadd.f32 %v1720, %v1998
  %2000 = vmatmul.f32.gmra.mxu0 %v1793
  %v2001 = vpop.f32.mrf.mxu0
  %v2002 = vadd.f32 %v1720, %v2001
  %2003 = vmatmul.f32.gmra.mxu0 %v1796
  %v2004 = vpop.f32.mrf.mxu0
  %v2005 = vadd.f32 %v1720, %v2004
  %2006 = vmatmul.f32.gmra.mxu0 %v1799
  %v2007 = vpop.f32.mrf.mxu0
  %v2008 = vadd.f32 %v1720, %v2007
  %2009 = vmatmul.f32.gmra.mxu0 %v1802
  %v2010 = vpop.f32.mrf.mxu0
  %v2011 = vadd.f32 %v1720, %v2010
  %2012 = vmatmul.f32.gmra.mxu0 %v1805
  %v2013 = vpop.f32.mrf.mxu0
  %v2014 = vadd.f32 %v1720, %v2013
  %2015 = vmatmul.f32.gmra.mxu0 %v1808
  %v2016 = vpop.f32.mrf.mxu0
  %v2017 = vadd.f32 %v1720, %v2016
  %2018 = vmatmul.f32.gmra.mxu0 %v1811
  %v2019 = vpop.f32.mrf.mxu0
  %v2020 = vadd.f32 %v1720, %v2019
  %2021 = vmatmul.f32.gmra.mxu0 %v1814
  %v2022 = vpop.f32.mrf.mxu0
  %v2023 = vadd.f32 %v1720, %v2022
  %2024 = vmatmul.f32.gmra.mxu0 %v1817
  %v2025 = vpop.f32.mrf.mxu0
  %v2026 = vadd.f32 %v1720, %v2025
  %2027 = vmatmul.f32.gmra.mxu0 %v1820
  %v2028 = vpop.f32.mrf.mxu0
  %v2029 = vadd.f32 %v1720, %v2028
  %2030 = vmatmul.f32.gmra.mxu0 %v1823
  %v2031 = vpop.f32.mrf.mxu0
  %v2032 = vadd.f32 %v1720, %v2031
  %2033 = vmatmul.f32.gmra.mxu0 %v1826
  %v2034 = vpop.f32.mrf.mxu0
  %v2035 = vadd.f32 %v1720, %v2034
  %2036 = vmatmul.f32.gmra.mxu0 %v1829
  %v2037 = vpop.f32.mrf.mxu0
  %v2038 = vadd.f32 %v1720, %v2037
  %2039 = vmatmul.f32.gmra.mxu0 %v1832
  %v2040 = vpop.f32.mrf.mxu0
  %v2041 = vadd.f32 %v1720, %v2040
  %2042 = vmatmul.f32.gmra.mxu0 %v1835
  %v2043 = vpop.f32.mrf.mxu0
  %v2044 = vadd.f32 %v1720, %v2043
  %2045 = vmatmul.f32.gmra.mxu0 %v1838
  %v2046 = vpop.f32.mrf.mxu0
  %v2047 = vadd.f32 %v1720, %v2046
  %2048 = vmatmul.f32.gmra.mxu0 %v1841
  %v2049 = vpop.f32.mrf.mxu0
  %v2050 = vadd.f32 %v1720, %v2049
  %2051 = vmatmul.f32.gmra.mxu0 %v1844
  %v2052 = vpop.f32.mrf.mxu0
  %v2053 = vadd.f32 %v1720, %v2052
  %2054 = vmatmul.f32.gmra.mxu0 %v1847
  %v2055 = vpop.f32.mrf.mxu0
  %v2056 = vadd.f32 %v1720, %v2055
  %2057 = vmatmul.f32.gmra.mxu0 %v1850
  %v2058 = vpop.f32.mrf.mxu0
  %v2059 = vadd.f32 %v1720, %v2058
  %2060 = vmatmul.f32.gmra.mxu0 %v1853
  %v2061 = vpop.f32.mrf.mxu0
  %v2062 = vadd.f32 %v1720, %v2061
  %2063 = vmatmul.f32.gmra.mxu0 %v1856
  %v2064 = vpop.f32.mrf.mxu0
  %v2065 = vadd.f32 %v1720, %v2064
  %2066 = vmatmul.f32.gmra.mxu0 %v1859
  %v2067 = vpop.f32.mrf.mxu0
  %v2068 = vadd.f32 %v1720, %v2067
  %2069 = vmatmul.f32.gmra.mxu0 %v1862
  %v2070 = vpop.f32.mrf.mxu0
  %v2071 = vadd.f32 %v1720, %v2070
  %2072 = vmatmul.f32.gmra.mxu0 %v1865
  %v2073 = vpop.f32.mrf.mxu0
  %v2074 = vadd.f32 %v1720, %v2073
  %2075 = vmatmul.f32.gmra.mxu0 %v1868
  %v2076 = vpop.f32.mrf.mxu0
  %v2077 = vadd.f32 %v1720, %v2076
  %2078 = vmatmul.f32.gmra.mxu0 %v1871
  %v2079 = vpop.f32.mrf.mxu0
  %v2080 = vadd.f32 %v1720, %v2079
  %2081 = vmatmul.f32.gmra.mxu0 %v1874
  %v2082 = vpop.f32.mrf.mxu0
  %v2083 = vadd.f32 %v1720, %v2082
  %2084 = vmatmul.f32.gmra.mxu0 %v1877
  %v2085 = vpop.f32.mrf.mxu0
  %v2086 = vadd.f32 %v1720, %v2085
  %2087 = vmatmul.f32.gmra.mxu0 %v1880
  %v2088 = vpop.f32.mrf.mxu0
  %v2089 = vadd.f32 %v1720, %v2088
  %2090 = vmatmul.f32.gmra.mxu0 %v1883
  %v2091 = vpop.f32.mrf.mxu0
  %v2092 = vadd.f32 %v1720, %v2091
  %2093 = vmatmul.f32.gmra.mxu0 %v1886
  %v2094 = vpop.f32.mrf.mxu0
  %v2095 = vadd.f32 %v1720, %v2094
  %2096 = vmatmul.f32.gmra.mxu0 %v1889
  %v2097 = vpop.f32.mrf.mxu0
  %v2098 = vadd.f32 %v1720, %v2097
  %2099 = vmatmul.f32.gmra.mxu0 %v1892
  %v2100 = vpop.f32.mrf.mxu0
  %v2101 = vadd.f32 %v1720, %v2100
  %2102 = vmatmul.f32.gmra.mxu0 %v1895
  %v2103 = vpop.f32.mrf.mxu0
  %v2104 = vadd.f32 %v1720, %v2103
  %2105 = vmatmul.f32.gmra.mxu0 %v1898
  %v2106 = vpop.f32.mrf.mxu0
  %v2107 = vadd.f32 %v1720, %v2106
  %2108 = vmatmul.f32.gmra.mxu0 %v1901
  %v2109 = vpop.f32.mrf.mxu0
  %v2110 = vadd.f32 %v1720, %v2109
  %2111 = vmatmul.f32.gmra.mxu0 %v1904
  %v2112 = vpop.f32.mrf.mxu0
  %v2113 = vadd.f32 %v1720, %v2112
  %2114 = vmatmul.f32.gmra.mxu0 %v1907
  %v2115 = vpop.f32.mrf.mxu0
  %v2116 = vadd.f32 %v1720, %v2115
  %2117 = vmatmul.f32.gmra.mxu0 %v1910
  %v2118 = vpop.f32.mrf.mxu0
  %v2119 = vadd.f32 %v1720, %v2118
  %2120 = vmatmul.f32.gmra.mxu0 %v1913
  %v2121 = vpop.f32.mrf.mxu0
  %v2122 = vadd.f32 %v1720, %v2121
  %2123 = vdwg.mxu0
  %vm2124 = vcmask 64512
  %2125 = vst.msk [vmem:[%s5] sm:$0xff] %vm2124, %v1933
  %2126 = vst.msk [vmem:[%s5 + $0x8] sm:$0xff] %vm2124, %v1936
  %2127 = vst.msk [vmem:[%s5 + $0x10] sm:$0xff] %vm2124, %v1939
  %2128 = vst.msk [vmem:[%s5 + $0x18] sm:$0xff] %vm2124, %v1942
  %2129 = vst.msk [vmem:[%s5 + $0x20] sm:$0xff] %vm2124, %v1945
  %2130 = vst.msk [vmem:[%s5 + $0x28] sm:$0xff] %vm2124, %v1948
  %2131 = vst.msk [vmem:[%s5 + $0x30] sm:$0xff] %vm2124, %v1951
  %2132 = vst.msk [vmem:[%s5 + $0x38] sm:$0xff] %vm2124, %v1954
  %2133 = vst.msk [vmem:[%s5 + $0x40] sm:$0xff] %vm2124, %v1957
  %2134 = vst.msk [vmem:[%s5 + $0x48] sm:$0xff] %vm2124, %v1960
  %2135 = vst.msk [vmem:[%s5 + $0x50] sm:$0xff] %vm2124, %v1963
  %2136 = vst.msk [vmem:[%s5 + $0x58] sm:$0xff] %vm2124, %v1966
  %2137 = vst.msk [vmem:[%s5 + $0x60] sm:$0xff] %vm2124, %v1969
  %2138 = vst.msk [vmem:[%s5 + $0x68] sm:$0xff] %vm2124, %v1972
  %2139 = vst.msk [vmem:[%s5 + $0x70] sm:$0xff] %vm2124, %v1975
  %2140 = vst.msk [vmem:[%s5 + $0x78] sm:$0xff] %vm2124, %v1978
  %2141 = vst.msk [vmem:[%s5 + $0x80] sm:$0xff] %vm2124, %v1981
  %2142 = vst.msk [vmem:[%s5 + $0x88] sm:$0xff] %vm2124, %v1984
  %2143 = vst.msk [vmem:[%s5 + $0x90] sm:$0xff] %vm2124, %v1987
  %2144 = vst.msk [vmem:[%s5 + $0x98] sm:$0xff] %vm2124, %v1990
  %2145 = vst.msk [vmem:[%s5 + $0xa0] sm:$0xff] %vm2124, %v1993
  %2146 = vst.msk [vmem:[%s5 + $0xa8] sm:$0xff] %vm2124, %v1996
  %2147 = vst.msk [vmem:[%s5 + $0xb0] sm:$0xff] %vm2124, %v1999
  %2148 = vst.msk [vmem:[%s5 + $0xb8] sm:$0xff] %vm2124, %v2002
  %2149 = vst.msk [vmem:[%s5 + $0xc0] sm:$0xff] %vm2124, %v2005
  %2150 = vst.msk [vmem:[%s5 + $0xc8] sm:$0xff] %vm2124, %v2008
  %2151 = vst.msk [vmem:[%s5 + $0xd0] sm:$0xff] %vm2124, %v2011
  %2152 = vst.msk [vmem:[%s5 + $0xd8] sm:$0xff] %vm2124, %v2014
  %2153 = vst.msk [vmem:[%s5 + $0xe0] sm:$0xff] %vm2124, %v2017
  %2154 = vst.msk [vmem:[%s5 + $0xe8] sm:$0xff] %vm2124, %v2020
  %2155 = vst.msk [vmem:[%s5 + $0xf0] sm:$0xff] %vm2124, %v2023
  %2156 = vst.msk [vmem:[%s5 + $0xf8] sm:$0xff] %vm2124, %v2026
  %2157 = vst.msk [vmem:[%s5 + $0x100] sm:$0xff] %vm2124, %v2029
  %2158 = vst.msk [vmem:[%s5 + $0x108] sm:$0xff] %vm2124, %v2032
  %2159 = vst.msk [vmem:[%s5 + $0x110] sm:$0xff] %vm2124, %v2035
  %2160 = vst.msk [vmem:[%s5 + $0x118] sm:$0xff] %vm2124, %v2038
  %2161 = vst.msk [vmem:[%s5 + $0x120] sm:$0xff] %vm2124, %v2041
  %2162 = vst.msk [vmem:[%s5 + $0x128] sm:$0xff] %vm2124, %v2044
  %2163 = vst.msk [vmem:[%s5 + $0x130] sm:$0xff] %vm2124, %v2047
  %2164 = vst.msk [vmem:[%s5 + $0x138] sm:$0xff] %vm2124, %v2050
  %2165 = vst.msk [vmem:[%s5 + $0x140] sm:$0xff] %vm2124, %v2053
  %2166 = vst.msk [vmem:[%s5 + $0x148] sm:$0xff] %vm2124, %v2056
  %2167 = vst.msk [vmem:[%s5 + $0x150] sm:$0xff] %vm2124, %v2059
  %2168 = vst.msk [vmem:[%s5 + $0x158] sm:$0xff] %vm2124, %v2062
  %2169 = vst.msk [vmem:[%s5 + $0x160] sm:$0xff] %vm2124, %v2065
  %2170 = vst.msk [vmem:[%s5 + $0x168] sm:$0xff] %vm2124, %v2068
  %2171 = vst.msk [vmem:[%s5 + $0x170] sm:$0xff] %vm2124, %v2071
  %2172 = vst.msk [vmem:[%s5 + $0x178] sm:$0xff] %vm2124, %v2074
  %2173 = vst.msk [vmem:[%s5 + $0x180] sm:$0xff] %vm2124, %v2077
  %2174 = vst.msk [vmem:[%s5 + $0x188] sm:$0xff] %vm2124, %v2080
  %2175 = vst.msk [vmem:[%s5 + $0x190] sm:$0xff] %vm2124, %v2083
  %2176 = vst.msk [vmem:[%s5 + $0x198] sm:$0xff] %vm2124, %v2086
  %2177 = vst.msk [vmem:[%s5 + $0x1a0] sm:$0xff] %vm2124, %v2089
  %2178 = vst.msk [vmem:[%s5 + $0x1a8] sm:$0xff] %vm2124, %v2092
  %2179 = vst.msk [vmem:[%s5 + $0x1b0] sm:$0xff] %vm2124, %v2095
  %2180 = vst.msk [vmem:[%s5 + $0x1b8] sm:$0xff] %vm2124, %v2098
  %2181 = vst.msk [vmem:[%s5 + $0x1c0] sm:$0xff] %vm2124, %v2101
  %2182 = vst.msk [vmem:[%s5 + $0x1c8] sm:$0xff] %vm2124, %v2104
  %2183 = vst.msk [vmem:[%s5 + $0x1d0] sm:$0xff] %vm2124, %v2107
  %2184 = vst.msk [vmem:[%s5 + $0x1d8] sm:$0xff] %vm2124, %v2110
  %2185 = vst.msk [vmem:[%s5 + $0x1e0] sm:$0xff] %vm2124, %v2113
  %2186 = vst.msk [vmem:[%s5 + $0x1e8] sm:$0xff] %vm2124, %v2116
  %2187 = vst.msk [vmem:[%s5 + $0x1f0] sm:$0xff] %vm2124, %v2119
  %2188 = vst.msk [vmem:[%s5 + $0x1f8] sm:$0xff] %vm2124, %v2122
  // Predicated region
  $region22: #{net_forward.1} parent=0 // pred_check
    _
  $region23: #{net_forward.1} parent=0 // pred_check_branch
    %2190 = sbr.rel (0) target = $region25
  $region24: #{net_forward.1} parent=0 // pred_region
    _
  $region25: #{net_forward.1} parent=0 // pred_fallthru
    _
  // Predicated region
  $region26: #{net_forward.1} parent=0 // pred_check
    _
  $region27: #{net_forward.1} parent=0 // pred_check_branch
    %2192 = sbr.rel (0) target = $region29
  $region28: #{net_forward.1} parent=0 // pred_region
    _
  $region29: #{net_forward.1} parent=0 // pred_fallthru
    _

</llo_original>
